<compile_context>
chip_gen: v7x
topology: tpu7x:2x2x1
jax: 0.10.0
libtpu: 0.0.40
codegen_flags: <defaults>
</compile_context>

<pallas_src>
import functools
import math

import jax
import jax.numpy as jnp
from jax.experimental import pallas as pl
from jax.experimental.pallas import tpu as pltpu

# Module constants (from the PyTorch spec).
D_K = 64
D_V = 64
N_HEADS = 4
D_FF = 512
N_LAYERS = 3
LN_EPS = 1e-5  # nn.LayerNorm default


def _layer_norm(x, gamma, beta):
    mean = jnp.mean(x, axis=-1, keepdims=True)
    diff = x - mean
    var = jnp.mean(diff * diff, axis=-1, keepdims=True)
    return diff * jax.lax.rsqrt(var + LN_EPS) * gamma + beta


def _encoder_kernel(n_layers,
                    x_ref, pos_ref, wq_ref, wk_ref, wv_ref, wo_ref,
                    w1_ref, w2_ref, ln_ref, o_ref, ctx_ref):
    """One batch element: pos-add + n_layers fused encoder layers, all in VMEM."""
    scale = 1.0 / math.sqrt(D_K)

    # PositionalEncoding folded into the fused kernel (f32 elementwise add).
    y = x_ref[0].astype(jnp.float32) + pos_ref[...].astype(jnp.float32)  # (S, D)

    for layer in range(n_layers):                 # static unroll over layers
        wq = wq_ref[layer]                        # (D, H*dk)  bf16
        wk = wk_ref[layer]                        # (D, H*dk)  bf16
        wv = wv_ref[layer]                        # (D, H*dv)  bf16
        wo = wo_ref[layer]                        # (H*dv, D)  bf16
        w1 = w1_ref[layer]                        # (D, d_ff)  bf16
        w2 = w2_ref[layer]                        # (d_ff, D)  bf16
        lnp = ln_ref[layer]                       # (4, D)     f32

        # ---------------- multi-head self-attention (Q = K = V = y) ---------
        yb = y.astype(jnp.bfloat16)
        q = jnp.dot(yb, wq, preferred_element_type=jnp.float32)   # (S, H*dk)
        k = jnp.dot(yb, wk, preferred_element_type=jnp.float32)
        v = jnp.dot(yb, wv, preferred_element_type=jnp.float32)
        qb = q.astype(jnp.bfloat16)
        kb = k.astype(jnp.bfloat16)
        vb = v.astype(jnp.bfloat16)

        for h in range(N_HEADS):                  # static unroll over heads
            qh = qb[:, h * D_K:(h + 1) * D_K]     # (S, dk)
            kh = kb[:, h * D_K:(h + 1) * D_K]     # (S, dk)
            vh = vb[:, h * D_V:(h + 1) * D_V]     # (S, dv)

            # scores = qh @ kh^T / sqrt(dk); contraction expressed directly so
            # no explicit transpose is materialized.
            s = jax.lax.dot_general(qh, kh, (((1,), (1,)), ((), ())),
                                    preferred_element_type=jnp.float32) * scale
            s = s - jnp.max(s, axis=-1, keepdims=True)
            p = jnp.exp(s)
            # Divide -> EUP reciprocal (frees the VALU slot).
            p = p * pl.reciprocal(jnp.sum(p, axis=-1, keepdims=True), approx=True)

            ctx_h = jnp.dot(p.astype(jnp.bfloat16), vh,
                            preferred_element_type=jnp.float32)   # (S, dv)
            # Stage per-head context into VMEM scratch at its static lane
            # offset; the head "concat" happens for free here.
            ctx_ref[:, h * D_V:(h + 1) * D_V] = ctx_h.astype(jnp.bfloat16)

        # One full-depth K = H*dv output-projection dot (MXU-friendly).
        attn_out = jnp.dot(ctx_ref[...], wo, preferred_element_type=jnp.float32)
        h1 = _layer_norm(attn_out + y, lnp[0:1], lnp[1:2])

        # ---------------- position-wise feed-forward -------------------------
        f = jnp.dot(h1.astype(jnp.bfloat16), w1,
                    preferred_element_type=jnp.float32)            # (S, d_ff)
        f = jnp.maximum(f, 0.0)
        f = jnp.dot(f.astype(jnp.bfloat16), w2,
                    preferred_element_type=jnp.float32)            # (S, D)
        y = _layer_norm(f + h1, lnp[2:3], lnp[3:4])

    o_ref[0] = y.astype(o_ref.dtype)


def encoder_forward(x, pos_weight, layer_params):
    """x: [batch, seq_len, d_model]; mirrors Encoder.forward (pos emb + layers)."""
    b, s, d = x.shape
    hd = N_HEADS * D_K
    n_layers = len(layer_params)

    # Stack per-layer weights along a leading layer axis; ship them in bf16
    # (MXU-native on v5e/v6e/v7x, halves weight DMA bytes).
    def stack(name, dt):
        return jnp.stack([p[name] for p in layer_params]).astype(dt)

    wq = stack("wq", jnp.bfloat16)       # (L, D, H*dk)
    wk = stack("wk", jnp.bfloat16)
    wv = stack("wv", jnp.bfloat16)
    wo = stack("wo", jnp.bfloat16)       # (L, H*dv, D)
    w1 = stack("w1", jnp.bfloat16)       # (L, D, d_ff)
    w2 = stack("w2", jnp.bfloat16)       # (L, d_ff, D)
    # Pack the 4 LayerNorm parameter rows per layer into one array.
    ln = jnp.stack([
        jnp.concatenate([p["ln1_g"], p["ln1_b"], p["ln2_g"], p["ln2_b"]], axis=0)
        for p in layer_params
    ]).astype(jnp.float32)               # (L, 4, D)

    flops = 2 * b * n_layers * s * (3 * d * hd            # QKV projections
                                    + N_HEADS * s * (D_K + D_V)  # scores + ctx
                                    + hd * d               # output projection
                                    + 2 * d * D_FF)        # FFN
    transcendentals = b * n_layers * (N_HEADS * s * s + N_HEADS * s + 2 * s)
    bytes_accessed = (4 * 2 * b * s * d                    # activation in/out (f32)
                      + 2 * n_layers * (3 * d * hd + hd * d + 2 * d * D_FF)  # bf16 W
                      + 4 * (n_layers * 4 * d + s * d))    # LN params + pos table
    cost = pl.CostEstimate(flops=flops, transcendentals=transcendentals,
                           bytes_accessed=bytes_accessed)

    kernel = functools.partial(_encoder_kernel, n_layers)

    return pl.pallas_call(
        kernel,
        out_shape=jax.ShapeDtypeStruct((b, s, d), x.dtype),
        # Single leading parallel axis over batch: feeds both v7x TensorCores;
        # weights use a constant index_map so they stay resident across steps.
        grid=(b,),
        in_specs=[
            pl.BlockSpec((1, s, d), lambda i: (i, 0, 0)),          # x
            pl.BlockSpec((s, d), lambda i: (0, 0)),                # pos table
            pl.BlockSpec((n_layers, d, hd), lambda i: (0, 0, 0)),  # Wq (all layers)
            pl.BlockSpec((n_layers, d, hd), lambda i: (0, 0, 0)),  # Wk
            pl.BlockSpec((n_layers, d, hd), lambda i: (0, 0, 0)),  # Wv
            pl.BlockSpec((n_layers, hd, d), lambda i: (0, 0, 0)),  # Wo (fc)
            pl.BlockSpec((n_layers, d, D_FF), lambda i: (0, 0, 0)),  # FFN W1
            pl.BlockSpec((n_layers, D_FF, d), lambda i: (0, 0, 0)),  # FFN W2
            pl.BlockSpec((n_layers, 4, d), lambda i: (0, 0, 0)),   # packed LN params
        ],
        out_specs=pl.BlockSpec((1, s, d), lambda i: (i, 0, 0)),
        scratch_shapes=[pltpu.VMEM((s, N_HEADS * D_V), jnp.bfloat16)],  # ctx staging
        compiler_params=pltpu.CompilerParams(
            dimension_semantics=("parallel",),
            vmem_limit_bytes=32 * 1024 * 1024),
        cost_estimate=cost,
    )(x, pos_weight, wq, wk, wv, wo, w1, w2, ln)


# ----------------------------- parameter init --------------------------------
def init_encoder_params(key, d_model, seq_len, share=False):
    kpos, key = jax.random.split(key)
    # nn.Embedding default init: N(0, 1).
    pos_weight = jax.random.normal(kpos, (seq_len, d_model), jnp.float32)

    def linear(k, fan_in, fan_out):
        # nn.Linear default init (bias=False in the module), stored as
        # (in_features, out_features).
        bound = 1.0 / math.sqrt(fan_in)
        return jax.random.uniform(k, (fan_in, fan_out), jnp.float32, -bound, bound)

    def one_layer(k):
        ks = jax.random.split(k, 6)
        return dict(
            wq=linear(ks[0], d_model, N_HEADS * D_K),
            wk=linear(ks[1], d_model, N_HEADS * D_K),
            wv=linear(ks[2], d_model, N_HEADS * D_V),
            wo=linear(ks[3], N_HEADS * D_V, d_model),
            w1=linear(ks[4], d_model, D_FF),
            w2=linear(ks[5], D_FF, d_model),
            ln1_g=jnp.ones((1, d_model), jnp.float32),
            ln1_b=jnp.zeros((1, d_model), jnp.float32),
            ln2_g=jnp.ones((1, d_model), jnp.float32),
            ln2_b=jnp.zeros((1, d_model), jnp.float32),
        )

    if share:
        shared = one_layer(jax.random.split(key, 1)[0])
        layers = [shared] * N_LAYERS
    else:
        lks = jax.random.split(key, N_LAYERS)
        layers = [one_layer(lks[i]) for i in range(N_LAYERS)]
    return pos_weight, layers


# ----------------------------- pure-JAX reference ----------------------------
def _ln_ref(x, g, b):
    m = jnp.mean(x, axis=-1, keepdims=True)
    v = jnp.mean((x - m) ** 2, axis=-1, keepdims=True)
    return (x - m) / jnp.sqrt(v + LN_EPS) * g + b


def _reference_encoder(x, pos_weight, layer_params):
    b, s, d = x.shape
    y = x + pos_weight[None]
    for p in layer_params:
        q = (y @ p["wq"]).reshape(b, s, N_HEADS, D_K).transpose(0, 2, 1, 3)
        k = (y @ p["wk"]).reshape(b, s, N_HEADS, D_K).transpose(0, 2, 1, 3)
        v = (y @ p["wv"]).reshape(b, s, N_HEADS, D_V).transpose(0, 2, 1, 3)
        scores = jnp.einsum("bhqd,bhkd->bhqk", q, k) / math.sqrt(D_K)
        attn = jax.nn.softmax(scores, axis=-1)
        ctx = jnp.einsum("bhqk,bhkd->bhqd", attn, v)
        ctx = ctx.transpose(0, 2, 1, 3).reshape(b, s, N_HEADS * D_V)
        o = ctx @ p["wo"]
        y1 = _ln_ref(o + y, p["ln1_g"], p["ln1_b"])
        f = jnp.maximum(y1 @ p["w1"], 0.0) @ p["w2"]
        y = _ln_ref(f + y1, p["ln2_g"], p["ln2_b"])
    return y


if __name__ == "__main__":
    B, SEQ_LEN, D_MODEL = 2, 8, 32

    key = jax.random.PRNGKey(0)
    kx, kp = jax.random.split(key)
    x = jax.random.normal(kx, (B, SEQ_LEN, D_MODEL), dtype=jnp.float32)
    pos_weight, layers = init_encoder_params(kp, D_MODEL, SEQ_LEN, share=False)

    out = encoder_forward(x, pos_weight, layers)
    out = jax.block_until_ready(out)

    ref = _reference_encoder(x, pos_weight, layers)
    assert out.shape == (B, SEQ_LEN, D_MODEL)
    # Tolerance reflects the bf16 MXU operand path (f32 accumulation) + approx
    # EUP reciprocal in softmax; the f32 reference differs at the ~1e-2 level
    # after 3 layers.
    max_err = float(jnp.max(jnp.abs(out - ref)))
    assert jnp.allclose(out, ref, atol=5e-2, rtol=5e-2), (
        f"mismatch vs reference, max abs err = {max_err}")

    print("KERNEL_OK")
</pallas_src>

<mosaic_0001>
module attributes {stable_mosaic.version = 11 : i64} {
  func.func @_encoder_kernel(%arg0: i32, %arg1: memref<1x8x32xf32, #tpu.memory_space<vmem>>, %arg2: memref<8x32xf32, #tpu.memory_space<vmem>>, %arg3: memref<3x32x256xbf16, #tpu.memory_space<vmem>>, %arg4: memref<3x32x256xbf16, #tpu.memory_space<vmem>>, %arg5: memref<3x32x256xbf16, #tpu.memory_space<vmem>>, %arg6: memref<3x256x32xbf16, #tpu.memory_space<vmem>>, %arg7: memref<3x32x512xbf16, #tpu.memory_space<vmem>>, %arg8: memref<3x512x32xbf16, #tpu.memory_space<vmem>>, %arg9: memref<3x4x32xf32, #tpu.memory_space<vmem>>, %arg10: memref<1x8x32xf32, #tpu.memory_space<vmem>>, %arg11: memref<8x256xbf16, #tpu.memory_space<vmem>>) attributes {dimension_semantics = [#tpu.dimension_semantics<parallel>], iteration_bounds = array<i64: 2>, scalar_prefetch = 0 : i64, scratch_operands = 1 : i64, tpu.core_type = #tpu.core_type<tc>, window_params = [{transform_indices = @transform_0, window_bounds = array<i64: 1, 8, 32>}, {pipeline_mode = #tpu.pipeline_mode<synchronous>, transform_indices = @transform_1, window_bounds = array<i64: 8, 32>}, {pipeline_mode = #tpu.pipeline_mode<synchronous>, transform_indices = @transform_2, window_bounds = array<i64: 3, 32, 256>}, {pipeline_mode = #tpu.pipeline_mode<synchronous>, transform_indices = @transform_3, window_bounds = array<i64: 3, 32, 256>}, {pipeline_mode = #tpu.pipeline_mode<synchronous>, transform_indices = @transform_4, window_bounds = array<i64: 3, 32, 256>}, {pipeline_mode = #tpu.pipeline_mode<synchronous>, transform_indices = @transform_5, window_bounds = array<i64: 3, 256, 32>}, {pipeline_mode = #tpu.pipeline_mode<synchronous>, transform_indices = @transform_6, window_bounds = array<i64: 3, 32, 512>}, {pipeline_mode = #tpu.pipeline_mode<synchronous>, transform_indices = @transform_7, window_bounds = array<i64: 3, 512, 32>}, {pipeline_mode = #tpu.pipeline_mode<synchronous>, transform_indices = @transform_8, window_bounds = array<i64: 3, 4, 32>}, {transform_indices = @transform_9, window_bounds = array<i64: 1, 8, 32>}]} {
    %c0 = arith.constant 0 : index
    %c0_0 = arith.constant 0 : index
    %c0_1 = arith.constant 0 : index
    %0 = vector.load %arg1[%c0, %c0_0, %c0_1] : memref<1x8x32xf32, #tpu.memory_space<vmem>>, vector<1x8x32xf32>
    %1 = vector.shape_cast %0 : vector<1x8x32xf32> to vector<8x32xf32>
    %c0_2 = arith.constant 0 : index
    %c0_3 = arith.constant 0 : index
    %2 = vector.load %arg2[%c0_2, %c0_3] : memref<8x32xf32, #tpu.memory_space<vmem>>, vector<8x32xf32>
    %3 = arith.addf %1, %2 : vector<8x32xf32>
    %c0_4 = arith.constant 0 : index
    %c0_5 = arith.constant 0 : index
    %c0_6 = arith.constant 0 : index
    %4 = vector.load %arg3[%c0_4, %c0_5, %c0_6] : memref<3x32x256xbf16, #tpu.memory_space<vmem>>, vector<1x32x256xbf16>
    %5 = vector.shape_cast %4 : vector<1x32x256xbf16> to vector<32x256xbf16>
    %c0_7 = arith.constant 0 : index
    %c0_8 = arith.constant 0 : index
    %c0_9 = arith.constant 0 : index
    %6 = vector.load %arg4[%c0_7, %c0_8, %c0_9] : memref<3x32x256xbf16, #tpu.memory_space<vmem>>, vector<1x32x256xbf16>
    %7 = vector.shape_cast %6 : vector<1x32x256xbf16> to vector<32x256xbf16>
    %c0_10 = arith.constant 0 : index
    %c0_11 = arith.constant 0 : index
    %c0_12 = arith.constant 0 : index
    %8 = vector.load %arg5[%c0_10, %c0_11, %c0_12] : memref<3x32x256xbf16, #tpu.memory_space<vmem>>, vector<1x32x256xbf16>
    %9 = vector.shape_cast %8 : vector<1x32x256xbf16> to vector<32x256xbf16>
    %c0_13 = arith.constant 0 : index
    %c0_14 = arith.constant 0 : index
    %c0_15 = arith.constant 0 : index
    %10 = vector.load %arg6[%c0_13, %c0_14, %c0_15] : memref<3x256x32xbf16, #tpu.memory_space<vmem>>, vector<1x256x32xbf16>
    %11 = vector.shape_cast %10 : vector<1x256x32xbf16> to vector<256x32xbf16>
    %c0_16 = arith.constant 0 : index
    %c0_17 = arith.constant 0 : index
    %c0_18 = arith.constant 0 : index
    %12 = vector.load %arg7[%c0_16, %c0_17, %c0_18] : memref<3x32x512xbf16, #tpu.memory_space<vmem>>, vector<1x32x512xbf16>
    %13 = vector.shape_cast %12 : vector<1x32x512xbf16> to vector<32x512xbf16>
    %c0_19 = arith.constant 0 : index
    %c0_20 = arith.constant 0 : index
    %c0_21 = arith.constant 0 : index
    %14 = vector.load %arg8[%c0_19, %c0_20, %c0_21] : memref<3x512x32xbf16, #tpu.memory_space<vmem>>, vector<1x512x32xbf16>
    %15 = vector.shape_cast %14 : vector<1x512x32xbf16> to vector<512x32xbf16>
    %c0_22 = arith.constant 0 : index
    %c0_23 = arith.constant 0 : index
    %c0_24 = arith.constant 0 : index
    %16 = vector.load %arg9[%c0_22, %c0_23, %c0_24] : memref<3x4x32xf32, #tpu.memory_space<vmem>>, vector<1x4x32xf32>
    %17 = vector.shape_cast %16 : vector<1x4x32xf32> to vector<4x32xf32>
    %18 = arith.truncf %3 : vector<8x32xf32> to vector<8x32xbf16>
    %cst = arith.constant dense<0.000000e+00> : vector<8x256xf32>
    %19 = tpu.matmul %18, %5, %cst {dimension_numbers = #tpu.dot_dimension_numbers<[1], [0], [0], [1], [0, 0, 1, 1], [], []>} : vector<8x32xbf16>, vector<32x256xbf16>, vector<8x256xf32> -> vector<8x256xf32>
    %cst_25 = arith.constant dense<0.000000e+00> : vector<8x256xf32>
    %20 = tpu.matmul %18, %7, %cst_25 {dimension_numbers = #tpu.dot_dimension_numbers<[1], [0], [0], [1], [0, 0, 1, 1], [], []>} : vector<8x32xbf16>, vector<32x256xbf16>, vector<8x256xf32> -> vector<8x256xf32>
    %cst_26 = arith.constant dense<0.000000e+00> : vector<8x256xf32>
    %21 = tpu.matmul %18, %9, %cst_26 {dimension_numbers = #tpu.dot_dimension_numbers<[1], [0], [0], [1], [0, 0, 1, 1], [], []>} : vector<8x32xbf16>, vector<32x256xbf16>, vector<8x256xf32> -> vector<8x256xf32>
    %22 = arith.truncf %19 : vector<8x256xf32> to vector<8x256xbf16>
    %23 = arith.truncf %20 : vector<8x256xf32> to vector<8x256xbf16>
    %24 = arith.truncf %21 : vector<8x256xf32> to vector<8x256xbf16>
    %25 = vector.extract_strided_slice %22 {offsets = [0, 0], sizes = [8, 64], strides = [1, 1]} : vector<8x256xbf16> to vector<8x64xbf16>
    %26 = vector.extract_strided_slice %23 {offsets = [0, 0], sizes = [8, 64], strides = [1, 1]} : vector<8x256xbf16> to vector<8x64xbf16>
    %27 = vector.extract_strided_slice %24 {offsets = [0, 0], sizes = [8, 64], strides = [1, 1]} : vector<8x256xbf16> to vector<8x64xbf16>
    %cst_27 = arith.constant dense<0.000000e+00> : vector<8x8xf32>
    %28 = tpu.matmul %25, %26, %cst_27 {dimension_numbers = #tpu.dot_dimension_numbers<[1], [1], [0], [0], [0, 0, 1, 0], [], []>} : vector<8x64xbf16>, vector<8x64xbf16>, vector<8x8xf32> -> vector<8x8xf32>
    %cst_28 = arith.constant 1.250000e-01 : f32
    %29 = vector.broadcast %cst_28 : f32 to vector<8x8xf32>
    %30 = arith.mulf %28, %29 : vector<8x8xf32>
    %cst_29 = arith.constant dense<0xFF800000> : vector<8xf32>
    %31 = vector.multi_reduction <maximumf>, %30, %cst_29 [1] : vector<8x8xf32> to vector<8xf32>
    %32 = vector.shape_cast %31 : vector<8xf32> to vector<8x1xf32>
    %33 = vector.broadcast %32 : vector<8x1xf32> to vector<8x8xf32>
    %34 = arith.subf %30, %33 : vector<8x8xf32>
    %35 = math.exp %34 : vector<8x8xf32>
    %cst_30 = arith.constant dense<0.000000e+00> : vector<8xf32>
    %36 = vector.multi_reduction <add>, %35, %cst_30 [1] : vector<8x8xf32> to vector<8xf32>
    %37 = vector.shape_cast %36 : vector<8xf32> to vector<8x1xf32>
    %38 = tpu.reciprocal %37 {approx = true} : vector<8x1xf32> -> vector<8x1xf32>
    %39 = vector.broadcast %38 : vector<8x1xf32> to vector<8x8xf32>
    %40 = arith.mulf %35, %39 : vector<8x8xf32>
    %41 = arith.truncf %40 : vector<8x8xf32> to vector<8x8xbf16>
    %cst_31 = arith.constant dense<0.000000e+00> : vector<8x64xf32>
    %42 = tpu.matmul %41, %27, %cst_31 {dimension_numbers = #tpu.dot_dimension_numbers<[1], [0], [0], [1], [0, 0, 1, 1], [], []>} : vector<8x8xbf16>, vector<8x64xbf16>, vector<8x64xf32> -> vector<8x64xf32>
    %43 = arith.truncf %42 : vector<8x64xf32> to vector<8x64xbf16>
    %c0_32 = arith.constant 0 : index
    %c0_33 = arith.constant 0 : index
    %44 = vector.load %arg11[%c0_32, %c0_33] : memref<8x256xbf16, #tpu.memory_space<vmem>>, vector<8x64xbf16>
    tpu.vector_store %arg11[%c0_32, %c0_33], %43 {strides = array<i32>} : memref<8x256xbf16, #tpu.memory_space<vmem>>, vector<8x64xbf16>,
    %45 = vector.extract_strided_slice %22 {offsets = [0, 64], sizes = [8, 64], strides = [1, 1]} : vector<8x256xbf16> to vector<8x64xbf16>
    %46 = vector.extract_strided_slice %23 {offsets = [0, 64], sizes = [8, 64], strides = [1, 1]} : vector<8x256xbf16> to vector<8x64xbf16>
    %47 = vector.extract_strided_slice %24 {offsets = [0, 64], sizes = [8, 64], strides = [1, 1]} : vector<8x256xbf16> to vector<8x64xbf16>
    %cst_34 = arith.constant dense<0.000000e+00> : vector<8x8xf32>
    %48 = tpu.matmul %45, %46, %cst_34 {dimension_numbers = #tpu.dot_dimension_numbers<[1], [1], [0], [0], [0, 0, 1, 0], [], []>} : vector<8x64xbf16>, vector<8x64xbf16>, vector<8x8xf32> -> vector<8x8xf32>
    %cst_35 = arith.constant 1.250000e-01 : f32
    %49 = vector.broadcast %cst_35 : f32 to vector<8x8xf32>
    %50 = arith.mulf %48, %49 : vector<8x8xf32>
    %cst_36 = arith.constant dense<0xFF800000> : vector<8xf32>
    %51 = vector.multi_reduction <maximumf>, %50, %cst_36 [1] : vector<8x8xf32> to vector<8xf32>
    %52 = vector.shape_cast %51 : vector<8xf32> to vector<8x1xf32>
    %53 = vector.broadcast %52 : vector<8x1xf32> to vector<8x8xf32>
    %54 = arith.subf %50, %53 : vector<8x8xf32>
    %55 = math.exp %54 : vector<8x8xf32>
    %cst_37 = arith.constant dense<0.000000e+00> : vector<8xf32>
    %56 = vector.multi_reduction <add>, %55, %cst_37 [1] : vector<8x8xf32> to vector<8xf32>
    %57 = vector.shape_cast %56 : vector<8xf32> to vector<8x1xf32>
    %58 = tpu.reciprocal %57 {approx = true} : vector<8x1xf32> -> vector<8x1xf32>
    %59 = vector.broadcast %58 : vector<8x1xf32> to vector<8x8xf32>
    %60 = arith.mulf %55, %59 : vector<8x8xf32>
    %61 = arith.truncf %60 : vector<8x8xf32> to vector<8x8xbf16>
    %cst_38 = arith.constant dense<0.000000e+00> : vector<8x64xf32>
    %62 = tpu.matmul %61, %47, %cst_38 {dimension_numbers = #tpu.dot_dimension_numbers<[1], [0], [0], [1], [0, 0, 1, 1], [], []>} : vector<8x8xbf16>, vector<8x64xbf16>, vector<8x64xf32> -> vector<8x64xf32>
    %63 = arith.truncf %62 : vector<8x64xf32> to vector<8x64xbf16>
    %c0_39 = arith.constant 0 : index
    %c64 = arith.constant 64 : index
    %64 = vector.load %arg11[%c0_39, %c64] : memref<8x256xbf16, #tpu.memory_space<vmem>>, vector<8x64xbf16>
    tpu.vector_store %arg11[%c0_39, %c64], %63 {strides = array<i32>} : memref<8x256xbf16, #tpu.memory_space<vmem>>, vector<8x64xbf16>,
    %65 = vector.extract_strided_slice %22 {offsets = [0, 128], sizes = [8, 64], strides = [1, 1]} : vector<8x256xbf16> to vector<8x64xbf16>
    %66 = vector.extract_strided_slice %23 {offsets = [0, 128], sizes = [8, 64], strides = [1, 1]} : vector<8x256xbf16> to vector<8x64xbf16>
    %67 = vector.extract_strided_slice %24 {offsets = [0, 128], sizes = [8, 64], strides = [1, 1]} : vector<8x256xbf16> to vector<8x64xbf16>
    %cst_40 = arith.constant dense<0.000000e+00> : vector<8x8xf32>
    %68 = tpu.matmul %65, %66, %cst_40 {dimension_numbers = #tpu.dot_dimension_numbers<[1], [1], [0], [0], [0, 0, 1, 0], [], []>} : vector<8x64xbf16>, vector<8x64xbf16>, vector<8x8xf32> -> vector<8x8xf32>
    %cst_41 = arith.constant 1.250000e-01 : f32
    %69 = vector.broadcast %cst_41 : f32 to vector<8x8xf32>
    %70 = arith.mulf %68, %69 : vector<8x8xf32>
    %cst_42 = arith.constant dense<0xFF800000> : vector<8xf32>
    %71 = vector.multi_reduction <maximumf>, %70, %cst_42 [1] : vector<8x8xf32> to vector<8xf32>
    %72 = vector.shape_cast %71 : vector<8xf32> to vector<8x1xf32>
    %73 = vector.broadcast %72 : vector<8x1xf32> to vector<8x8xf32>
    %74 = arith.subf %70, %73 : vector<8x8xf32>
    %75 = math.exp %74 : vector<8x8xf32>
    %cst_43 = arith.constant dense<0.000000e+00> : vector<8xf32>
    %76 = vector.multi_reduction <add>, %75, %cst_43 [1] : vector<8x8xf32> to vector<8xf32>
    %77 = vector.shape_cast %76 : vector<8xf32> to vector<8x1xf32>
    %78 = tpu.reciprocal %77 {approx = true} : vector<8x1xf32> -> vector<8x1xf32>
    %79 = vector.broadcast %78 : vector<8x1xf32> to vector<8x8xf32>
    %80 = arith.mulf %75, %79 : vector<8x8xf32>
    %81 = arith.truncf %80 : vector<8x8xf32> to vector<8x8xbf16>
    %cst_44 = arith.constant dense<0.000000e+00> : vector<8x64xf32>
    %82 = tpu.matmul %81, %67, %cst_44 {dimension_numbers = #tpu.dot_dimension_numbers<[1], [0], [0], [1], [0, 0, 1, 1], [], []>} : vector<8x8xbf16>, vector<8x64xbf16>, vector<8x64xf32> -> vector<8x64xf32>
    %83 = arith.truncf %82 : vector<8x64xf32> to vector<8x64xbf16>
    %c0_45 = arith.constant 0 : index
    %c128 = arith.constant 128 : index
    %84 = vector.load %arg11[%c0_45, %c128] : memref<8x256xbf16, #tpu.memory_space<vmem>>, vector<8x64xbf16>
    tpu.vector_store %arg11[%c0_45, %c128], %83 {strides = array<i32>} : memref<8x256xbf16, #tpu.memory_space<vmem>>, vector<8x64xbf16>,
    %85 = vector.extract_strided_slice %22 {offsets = [0, 192], sizes = [8, 64], strides = [1, 1]} : vector<8x256xbf16> to vector<8x64xbf16>
    %86 = vector.extract_strided_slice %23 {offsets = [0, 192], sizes = [8, 64], strides = [1, 1]} : vector<8x256xbf16> to vector<8x64xbf16>
    %87 = vector.extract_strided_slice %24 {offsets = [0, 192], sizes = [8, 64], strides = [1, 1]} : vector<8x256xbf16> to vector<8x64xbf16>
    %cst_46 = arith.constant dense<0.000000e+00> : vector<8x8xf32>
    %88 = tpu.matmul %85, %86, %cst_46 {dimension_numbers = #tpu.dot_dimension_numbers<[1], [1], [0], [0], [0, 0, 1, 0], [], []>} : vector<8x64xbf16>, vector<8x64xbf16>, vector<8x8xf32> -> vector<8x8xf32>
    %cst_47 = arith.constant 1.250000e-01 : f32
    %89 = vector.broadcast %cst_47 : f32 to vector<8x8xf32>
    %90 = arith.mulf %88, %89 : vector<8x8xf32>
    %cst_48 = arith.constant dense<0xFF800000> : vector<8xf32>
    %91 = vector.multi_reduction <maximumf>, %90, %cst_48 [1] : vector<8x8xf32> to vector<8xf32>
    %92 = vector.shape_cast %91 : vector<8xf32> to vector<8x1xf32>
    %93 = vector.broadcast %92 : vector<8x1xf32> to vector<8x8xf32>
    %94 = arith.subf %90, %93 : vector<8x8xf32>
    %95 = math.exp %94 : vector<8x8xf32>
    %cst_49 = arith.constant dense<0.000000e+00> : vector<8xf32>
    %96 = vector.multi_reduction <add>, %95, %cst_49 [1] : vector<8x8xf32> to vector<8xf32>
    %97 = vector.shape_cast %96 : vector<8xf32> to vector<8x1xf32>
    %98 = tpu.reciprocal %97 {approx = true} : vector<8x1xf32> -> vector<8x1xf32>
    %99 = vector.broadcast %98 : vector<8x1xf32> to vector<8x8xf32>
    %100 = arith.mulf %95, %99 : vector<8x8xf32>
    %101 = arith.truncf %100 : vector<8x8xf32> to vector<8x8xbf16>
    %cst_50 = arith.constant dense<0.000000e+00> : vector<8x64xf32>
    %102 = tpu.matmul %101, %87, %cst_50 {dimension_numbers = #tpu.dot_dimension_numbers<[1], [0], [0], [1], [0, 0, 1, 1], [], []>} : vector<8x8xbf16>, vector<8x64xbf16>, vector<8x64xf32> -> vector<8x64xf32>
    %103 = arith.truncf %102 : vector<8x64xf32> to vector<8x64xbf16>
    %c0_51 = arith.constant 0 : index
    %c192 = arith.constant 192 : index
    %104 = vector.load %arg11[%c0_51, %c192] : memref<8x256xbf16, #tpu.memory_space<vmem>>, vector<8x64xbf16>
    tpu.vector_store %arg11[%c0_51, %c192], %103 {strides = array<i32>} : memref<8x256xbf16, #tpu.memory_space<vmem>>, vector<8x64xbf16>,
    %c0_52 = arith.constant 0 : index
    %c0_53 = arith.constant 0 : index
    %105 = vector.load %arg11[%c0_52, %c0_53] : memref<8x256xbf16, #tpu.memory_space<vmem>>, vector<8x256xbf16>
    %cst_54 = arith.constant dense<0.000000e+00> : vector<8x32xf32>
    %106 = tpu.matmul %105, %11, %cst_54 {dimension_numbers = #tpu.dot_dimension_numbers<[1], [0], [0], [1], [0, 0, 1, 1], [], []>} : vector<8x256xbf16>, vector<256x32xbf16>, vector<8x32xf32> -> vector<8x32xf32>
    %107 = arith.addf %106, %3 : vector<8x32xf32>
    %108 = vector.extract_strided_slice %17 {offsets = [0, 0], sizes = [1, 32], strides = [1, 1]} : vector<4x32xf32> to vector<1x32xf32>
    %109 = vector.extract_strided_slice %17 {offsets = [1, 0], sizes = [1, 32], strides = [1, 1]} : vector<4x32xf32> to vector<1x32xf32>
    %cst_55 = arith.constant dense<0.000000e+00> : vector<8xf32>
    %110 = vector.multi_reduction <add>, %107, %cst_55 [1] : vector<8x32xf32> to vector<8xf32>
    %111 = vector.shape_cast %110 : vector<8xf32> to vector<8x1xf32>
    %cst_56 = arith.constant 3.200000e+01 : f32
    %112 = vector.broadcast %cst_56 : f32 to vector<8x1xf32>
    %113 = arith.divf %111, %112 : vector<8x1xf32>
    %114 = vector.broadcast %113 : vector<8x1xf32> to vector<8x32xf32>
    %115 = arith.subf %107, %114 : vector<8x32xf32>
    %116 = arith.mulf %115, %115 : vector<8x32xf32>
    %cst_57 = arith.constant dense<0.000000e+00> : vector<8xf32>
    %117 = vector.multi_reduction <add>, %116, %cst_57 [1] : vector<8x32xf32> to vector<8xf32>
    %118 = vector.shape_cast %117 : vector<8xf32> to vector<8x1xf32>
    %cst_58 = arith.constant 3.200000e+01 : f32
    %119 = vector.broadcast %cst_58 : f32 to vector<8x1xf32>
    %120 = arith.divf %118, %119 : vector<8x1xf32>
    %cst_59 = arith.constant 9.99999974E-6 : f32
    %121 = vector.broadcast %cst_59 : f32 to vector<8x1xf32>
    %122 = arith.addf %120, %121 : vector<8x1xf32>
    %123 = math.rsqrt %122 : vector<8x1xf32>
    %124 = vector.broadcast %123 : vector<8x1xf32> to vector<8x32xf32>
    %125 = arith.mulf %115, %124 : vector<8x32xf32>
    %126 = vector.broadcast %108 : vector<1x32xf32> to vector<8x32xf32>
    %127 = arith.mulf %125, %126 : vector<8x32xf32>
    %128 = vector.broadcast %109 : vector<1x32xf32> to vector<8x32xf32>
    %129 = arith.addf %127, %128 : vector<8x32xf32>
    %130 = arith.truncf %129 : vector<8x32xf32> to vector<8x32xbf16>
    %cst_60 = arith.constant dense<0.000000e+00> : vector<8x512xf32>
    %131 = tpu.matmul %130, %13, %cst_60 {dimension_numbers = #tpu.dot_dimension_numbers<[1], [0], [0], [1], [0, 0, 1, 1], [], []>} : vector<8x32xbf16>, vector<32x512xbf16>, vector<8x512xf32> -> vector<8x512xf32>
    %cst_61 = arith.constant 0.000000e+00 : f32
    %132 = vector.broadcast %cst_61 : f32 to vector<8x512xf32>
    %133 = arith.maximumf %131, %132 : vector<8x512xf32>
    %134 = arith.truncf %133 : vector<8x512xf32> to vector<8x512xbf16>
    %cst_62 = arith.constant dense<0.000000e+00> : vector<8x32xf32>
    %135 = tpu.matmul %134, %15, %cst_62 {dimension_numbers = #tpu.dot_dimension_numbers<[1], [0], [0], [1], [0, 0, 1, 1], [], []>} : vector<8x512xbf16>, vector<512x32xbf16>, vector<8x32xf32> -> vector<8x32xf32>
    %136 = arith.addf %135, %129 : vector<8x32xf32>
    %137 = vector.extract_strided_slice %17 {offsets = [2, 0], sizes = [1, 32], strides = [1, 1]} : vector<4x32xf32> to vector<1x32xf32>
    %138 = vector.extract_strided_slice %17 {offsets = [3, 0], sizes = [1, 32], strides = [1, 1]} : vector<4x32xf32> to vector<1x32xf32>
    %cst_63 = arith.constant dense<0.000000e+00> : vector<8xf32>
    %139 = vector.multi_reduction <add>, %136, %cst_63 [1] : vector<8x32xf32> to vector<8xf32>
    %140 = vector.shape_cast %139 : vector<8xf32> to vector<8x1xf32>
    %cst_64 = arith.constant 3.200000e+01 : f32
    %141 = vector.broadcast %cst_64 : f32 to vector<8x1xf32>
    %142 = arith.divf %140, %141 : vector<8x1xf32>
    %143 = vector.broadcast %142 : vector<8x1xf32> to vector<8x32xf32>
    %144 = arith.subf %136, %143 : vector<8x32xf32>
    %145 = arith.mulf %144, %144 : vector<8x32xf32>
    %cst_65 = arith.constant dense<0.000000e+00> : vector<8xf32>
    %146 = vector.multi_reduction <add>, %145, %cst_65 [1] : vector<8x32xf32> to vector<8xf32>
    %147 = vector.shape_cast %146 : vector<8xf32> to vector<8x1xf32>
    %cst_66 = arith.constant 3.200000e+01 : f32
    %148 = vector.broadcast %cst_66 : f32 to vector<8x1xf32>
    %149 = arith.divf %147, %148 : vector<8x1xf32>
    %cst_67 = arith.constant 9.99999974E-6 : f32
    %150 = vector.broadcast %cst_67 : f32 to vector<8x1xf32>
    %151 = arith.addf %149, %150 : vector<8x1xf32>
    %152 = math.rsqrt %151 : vector<8x1xf32>
    %153 = vector.broadcast %152 : vector<8x1xf32> to vector<8x32xf32>
    %154 = arith.mulf %144, %153 : vector<8x32xf32>
    %155 = vector.broadcast %137 : vector<1x32xf32> to vector<8x32xf32>
    %156 = arith.mulf %154, %155 : vector<8x32xf32>
    %157 = vector.broadcast %138 : vector<1x32xf32> to vector<8x32xf32>
    %158 = arith.addf %156, %157 : vector<8x32xf32>
    %c1 = arith.constant 1 : index
    %c0_68 = arith.constant 0 : index
    %c0_69 = arith.constant 0 : index
    %159 = vector.load %arg3[%c1, %c0_68, %c0_69] : memref<3x32x256xbf16, #tpu.memory_space<vmem>>, vector<1x32x256xbf16>
    %160 = vector.shape_cast %159 : vector<1x32x256xbf16> to vector<32x256xbf16>
    %c1_70 = arith.constant 1 : index
    %c0_71 = arith.constant 0 : index
    %c0_72 = arith.constant 0 : index
    %161 = vector.load %arg4[%c1_70, %c0_71, %c0_72] : memref<3x32x256xbf16, #tpu.memory_space<vmem>>, vector<1x32x256xbf16>
    %162 = vector.shape_cast %161 : vector<1x32x256xbf16> to vector<32x256xbf16>
    %c1_73 = arith.constant 1 : index
    %c0_74 = arith.constant 0 : index
    %c0_75 = arith.constant 0 : index
    %163 = vector.load %arg5[%c1_73, %c0_74, %c0_75] : memref<3x32x256xbf16, #tpu.memory_space<vmem>>, vector<1x32x256xbf16>
    %164 = vector.shape_cast %163 : vector<1x32x256xbf16> to vector<32x256xbf16>
    %c1_76 = arith.constant 1 : index
    %c0_77 = arith.constant 0 : index
    %c0_78 = arith.constant 0 : index
    %165 = vector.load %arg6[%c1_76, %c0_77, %c0_78] : memref<3x256x32xbf16, #tpu.memory_space<vmem>>, vector<1x256x32xbf16>
    %166 = vector.shape_cast %165 : vector<1x256x32xbf16> to vector<256x32xbf16>
    %c1_79 = arith.constant 1 : index
    %c0_80 = arith.constant 0 : index
    %c0_81 = arith.constant 0 : index
    %167 = vector.load %arg7[%c1_79, %c0_80, %c0_81] : memref<3x32x512xbf16, #tpu.memory_space<vmem>>, vector<1x32x512xbf16>
    %168 = vector.shape_cast %167 : vector<1x32x512xbf16> to vector<32x512xbf16>
    %c1_82 = arith.constant 1 : index
    %c0_83 = arith.constant 0 : index
    %c0_84 = arith.constant 0 : index
    %169 = vector.load %arg8[%c1_82, %c0_83, %c0_84] : memref<3x512x32xbf16, #tpu.memory_space<vmem>>, vector<1x512x32xbf16>
    %170 = vector.shape_cast %169 : vector<1x512x32xbf16> to vector<512x32xbf16>
    %c1_85 = arith.constant 1 : index
    %c0_86 = arith.constant 0 : index
    %c0_87 = arith.constant 0 : index
    %171 = vector.load %arg9[%c1_85, %c0_86, %c0_87] : memref<3x4x32xf32, #tpu.memory_space<vmem>>, vector<1x4x32xf32>
    %172 = vector.shape_cast %171 : vector<1x4x32xf32> to vector<4x32xf32>
    %173 = arith.truncf %158 : vector<8x32xf32> to vector<8x32xbf16>
    %cst_88 = arith.constant dense<0.000000e+00> : vector<8x256xf32>
    %174 = tpu.matmul %173, %160, %cst_88 {dimension_numbers = #tpu.dot_dimension_numbers<[1], [0], [0], [1], [0, 0, 1, 1], [], []>} : vector<8x32xbf16>, vector<32x256xbf16>, vector<8x256xf32> -> vector<8x256xf32>
    %cst_89 = arith.constant dense<0.000000e+00> : vector<8x256xf32>
    %175 = tpu.matmul %173, %162, %cst_89 {dimension_numbers = #tpu.dot_dimension_numbers<[1], [0], [0], [1], [0, 0, 1, 1], [], []>} : vector<8x32xbf16>, vector<32x256xbf16>, vector<8x256xf32> -> vector<8x256xf32>
    %cst_90 = arith.constant dense<0.000000e+00> : vector<8x256xf32>
    %176 = tpu.matmul %173, %164, %cst_90 {dimension_numbers = #tpu.dot_dimension_numbers<[1], [0], [0], [1], [0, 0, 1, 1], [], []>} : vector<8x32xbf16>, vector<32x256xbf16>, vector<8x256xf32> -> vector<8x256xf32>
    %177 = arith.truncf %174 : vector<8x256xf32> to vector<8x256xbf16>
    %178 = arith.truncf %175 : vector<8x256xf32> to vector<8x256xbf16>
    %179 = arith.truncf %176 : vector<8x256xf32> to vector<8x256xbf16>
    %180 = vector.extract_strided_slice %177 {offsets = [0, 0], sizes = [8, 64], strides = [1, 1]} : vector<8x256xbf16> to vector<8x64xbf16>
    %181 = vector.extract_strided_slice %178 {offsets = [0, 0], sizes = [8, 64], strides = [1, 1]} : vector<8x256xbf16> to vector<8x64xbf16>
    %182 = vector.extract_strided_slice %179 {offsets = [0, 0], sizes = [8, 64], strides = [1, 1]} : vector<8x256xbf16> to vector<8x64xbf16>
    %cst_91 = arith.constant dense<0.000000e+00> : vector<8x8xf32>
    %183 = tpu.matmul %180, %181, %cst_91 {dimension_numbers = #tpu.dot_dimension_numbers<[1], [1], [0], [0], [0, 0, 1, 0], [], []>} : vector<8x64xbf16>, vector<8x64xbf16>, vector<8x8xf32> -> vector<8x8xf32>
    %cst_92 = arith.constant 1.250000e-01 : f32
    %184 = vector.broadcast %cst_92 : f32 to vector<8x8xf32>
    %185 = arith.mulf %183, %184 : vector<8x8xf32>
    %cst_93 = arith.constant dense<0xFF800000> : vector<8xf32>
    %186 = vector.multi_reduction <maximumf>, %185, %cst_93 [1] : vector<8x8xf32> to vector<8xf32>
    %187 = vector.shape_cast %186 : vector<8xf32> to vector<8x1xf32>
    %188 = vector.broadcast %187 : vector<8x1xf32> to vector<8x8xf32>
    %189 = arith.subf %185, %188 : vector<8x8xf32>
    %190 = math.exp %189 : vector<8x8xf32>
    %cst_94 = arith.constant dense<0.000000e+00> : vector<8xf32>
    %191 = vector.multi_reduction <add>, %190, %cst_94 [1] : vector<8x8xf32> to vector<8xf32>
    %192 = vector.shape_cast %191 : vector<8xf32> to vector<8x1xf32>
    %193 = tpu.reciprocal %192 {approx = true} : vector<8x1xf32> -> vector<8x1xf32>
    %194 = vector.broadcast %193 : vector<8x1xf32> to vector<8x8xf32>
    %195 = arith.mulf %190, %194 : vector<8x8xf32>
    %196 = arith.truncf %195 : vector<8x8xf32> to vector<8x8xbf16>
    %cst_95 = arith.constant dense<0.000000e+00> : vector<8x64xf32>
    %197 = tpu.matmul %196, %182, %cst_95 {dimension_numbers = #tpu.dot_dimension_numbers<[1], [0], [0], [1], [0, 0, 1, 1], [], []>} : vector<8x8xbf16>, vector<8x64xbf16>, vector<8x64xf32> -> vector<8x64xf32>
    %198 = arith.truncf %197 : vector<8x64xf32> to vector<8x64xbf16>
    %c0_96 = arith.constant 0 : index
    %c0_97 = arith.constant 0 : index
    %199 = vector.load %arg11[%c0_96, %c0_97] : memref<8x256xbf16, #tpu.memory_space<vmem>>, vector<8x64xbf16>
    tpu.vector_store %arg11[%c0_96, %c0_97], %198 {strides = array<i32>} : memref<8x256xbf16, #tpu.memory_space<vmem>>, vector<8x64xbf16>,
    %200 = vector.extract_strided_slice %177 {offsets = [0, 64], sizes = [8, 64], strides = [1, 1]} : vector<8x256xbf16> to vector<8x64xbf16>
    %201 = vector.extract_strided_slice %178 {offsets = [0, 64], sizes = [8, 64], strides = [1, 1]} : vector<8x256xbf16> to vector<8x64xbf16>
    %202 = vector.extract_strided_slice %179 {offsets = [0, 64], sizes = [8, 64], strides = [1, 1]} : vector<8x256xbf16> to vector<8x64xbf16>
    %cst_98 = arith.constant dense<0.000000e+00> : vector<8x8xf32>
    %203 = tpu.matmul %200, %201, %cst_98 {dimension_numbers = #tpu.dot_dimension_numbers<[1], [1], [0], [0], [0, 0, 1, 0], [], []>} : vector<8x64xbf16>, vector<8x64xbf16>, vector<8x8xf32> -> vector<8x8xf32>
    %cst_99 = arith.constant 1.250000e-01 : f32
    %204 = vector.broadcast %cst_99 : f32 to vector<8x8xf32>
    %205 = arith.mulf %203, %204 : vector<8x8xf32>
    %cst_100 = arith.constant dense<0xFF800000> : vector<8xf32>
    %206 = vector.multi_reduction <maximumf>, %205, %cst_100 [1] : vector<8x8xf32> to vector<8xf32>
    %207 = vector.shape_cast %206 : vector<8xf32> to vector<8x1xf32>
    %208 = vector.broadcast %207 : vector<8x1xf32> to vector<8x8xf32>
    %209 = arith.subf %205, %208 : vector<8x8xf32>
    %210 = math.exp %209 : vector<8x8xf32>
    %cst_101 = arith.constant dense<0.000000e+00> : vector<8xf32>
    %211 = vector.multi_reduction <add>, %210, %cst_101 [1] : vector<8x8xf32> to vector<8xf32>
    %212 = vector.shape_cast %211 : vector<8xf32> to vector<8x1xf32>
    %213 = tpu.reciprocal %212 {approx = true} : vector<8x1xf32> -> vector<8x1xf32>
    %214 = vector.broadcast %213 : vector<8x1xf32> to vector<8x8xf32>
    %215 = arith.mulf %210, %214 : vector<8x8xf32>
    %216 = arith.truncf %215 : vector<8x8xf32> to vector<8x8xbf16>
    %cst_102 = arith.constant dense<0.000000e+00> : vector<8x64xf32>
    %217 = tpu.matmul %216, %202, %cst_102 {dimension_numbers = #tpu.dot_dimension_numbers<[1], [0], [0], [1], [0, 0, 1, 1], [], []>} : vector<8x8xbf16>, vector<8x64xbf16>, vector<8x64xf32> -> vector<8x64xf32>
    %218 = arith.truncf %217 : vector<8x64xf32> to vector<8x64xbf16>
    %c0_103 = arith.constant 0 : index
    %c64_104 = arith.constant 64 : index
    %219 = vector.load %arg11[%c0_103, %c64_104] : memref<8x256xbf16, #tpu.memory_space<vmem>>, vector<8x64xbf16>
    tpu.vector_store %arg11[%c0_103, %c64_104], %218 {strides = array<i32>} : memref<8x256xbf16, #tpu.memory_space<vmem>>, vector<8x64xbf16>,
    %220 = vector.extract_strided_slice %177 {offsets = [0, 128], sizes = [8, 64], strides = [1, 1]} : vector<8x256xbf16> to vector<8x64xbf16>
    %221 = vector.extract_strided_slice %178 {offsets = [0, 128], sizes = [8, 64], strides = [1, 1]} : vector<8x256xbf16> to vector<8x64xbf16>
    %222 = vector.extract_strided_slice %179 {offsets = [0, 128], sizes = [8, 64], strides = [1, 1]} : vector<8x256xbf16> to vector<8x64xbf16>
    %cst_105 = arith.constant dense<0.000000e+00> : vector<8x8xf32>
    %223 = tpu.matmul %220, %221, %cst_105 {dimension_numbers = #tpu.dot_dimension_numbers<[1], [1], [0], [0], [0, 0, 1, 0], [], []>} : vector<8x64xbf16>, vector<8x64xbf16>, vector<8x8xf32> -> vector<8x8xf32>
    %cst_106 = arith.constant 1.250000e-01 : f32
    %224 = vector.broadcast %cst_106 : f32 to vector<8x8xf32>
    %225 = arith.mulf %223, %224 : vector<8x8xf32>
    %cst_107 = arith.constant dense<0xFF800000> : vector<8xf32>
    %226 = vector.multi_reduction <maximumf>, %225, %cst_107 [1] : vector<8x8xf32> to vector<8xf32>
    %227 = vector.shape_cast %226 : vector<8xf32> to vector<8x1xf32>
    %228 = vector.broadcast %227 : vector<8x1xf32> to vector<8x8xf32>
    %229 = arith.subf %225, %228 : vector<8x8xf32>
    %230 = math.exp %229 : vector<8x8xf32>
    %cst_108 = arith.constant dense<0.000000e+00> : vector<8xf32>
    %231 = vector.multi_reduction <add>, %230, %cst_108 [1] : vector<8x8xf32> to vector<8xf32>
    %232 = vector.shape_cast %231 : vector<8xf32> to vector<8x1xf32>
    %233 = tpu.reciprocal %232 {approx = true} : vector<8x1xf32> -> vector<8x1xf32>
    %234 = vector.broadcast %233 : vector<8x1xf32> to vector<8x8xf32>
    %235 = arith.mulf %230, %234 : vector<8x8xf32>
    %236 = arith.truncf %235 : vector<8x8xf32> to vector<8x8xbf16>
    %cst_109 = arith.constant dense<0.000000e+00> : vector<8x64xf32>
    %237 = tpu.matmul %236, %222, %cst_109 {dimension_numbers = #tpu.dot_dimension_numbers<[1], [0], [0], [1], [0, 0, 1, 1], [], []>} : vector<8x8xbf16>, vector<8x64xbf16>, vector<8x64xf32> -> vector<8x64xf32>
    %238 = arith.truncf %237 : vector<8x64xf32> to vector<8x64xbf16>
    %c0_110 = arith.constant 0 : index
    %c128_111 = arith.constant 128 : index
    %239 = vector.load %arg11[%c0_110, %c128_111] : memref<8x256xbf16, #tpu.memory_space<vmem>>, vector<8x64xbf16>
    tpu.vector_store %arg11[%c0_110, %c128_111], %238 {strides = array<i32>} : memref<8x256xbf16, #tpu.memory_space<vmem>>, vector<8x64xbf16>,
    %240 = vector.extract_strided_slice %177 {offsets = [0, 192], sizes = [8, 64], strides = [1, 1]} : vector<8x256xbf16> to vector<8x64xbf16>
    %241 = vector.extract_strided_slice %178 {offsets = [0, 192], sizes = [8, 64], strides = [1, 1]} : vector<8x256xbf16> to vector<8x64xbf16>
    %242 = vector.extract_strided_slice %179 {offsets = [0, 192], sizes = [8, 64], strides = [1, 1]} : vector<8x256xbf16> to vector<8x64xbf16>
    %cst_112 = arith.constant dense<0.000000e+00> : vector<8x8xf32>
    %243 = tpu.matmul %240, %241, %cst_112 {dimension_numbers = #tpu.dot_dimension_numbers<[1], [1], [0], [0], [0, 0, 1, 0], [], []>} : vector<8x64xbf16>, vector<8x64xbf16>, vector<8x8xf32> -> vector<8x8xf32>
    %cst_113 = arith.constant 1.250000e-01 : f32
    %244 = vector.broadcast %cst_113 : f32 to vector<8x8xf32>
    %245 = arith.mulf %243, %244 : vector<8x8xf32>
    %cst_114 = arith.constant dense<0xFF800000> : vector<8xf32>
    %246 = vector.multi_reduction <maximumf>, %245, %cst_114 [1] : vector<8x8xf32> to vector<8xf32>
    %247 = vector.shape_cast %246 : vector<8xf32> to vector<8x1xf32>
    %248 = vector.broadcast %247 : vector<8x1xf32> to vector<8x8xf32>
    %249 = arith.subf %245, %248 : vector<8x8xf32>
    %250 = math.exp %249 : vector<8x8xf32>
    %cst_115 = arith.constant dense<0.000000e+00> : vector<8xf32>
    %251 = vector.multi_reduction <add>, %250, %cst_115 [1] : vector<8x8xf32> to vector<8xf32>
    %252 = vector.shape_cast %251 : vector<8xf32> to vector<8x1xf32>
    %253 = tpu.reciprocal %252 {approx = true} : vector<8x1xf32> -> vector<8x1xf32>
    %254 = vector.broadcast %253 : vector<8x1xf32> to vector<8x8xf32>
    %255 = arith.mulf %250, %254 : vector<8x8xf32>
    %256 = arith.truncf %255 : vector<8x8xf32> to vector<8x8xbf16>
    %cst_116 = arith.constant dense<0.000000e+00> : vector<8x64xf32>
    %257 = tpu.matmul %256, %242, %cst_116 {dimension_numbers = #tpu.dot_dimension_numbers<[1], [0], [0], [1], [0, 0, 1, 1], [], []>} : vector<8x8xbf16>, vector<8x64xbf16>, vector<8x64xf32> -> vector<8x64xf32>
    %258 = arith.truncf %257 : vector<8x64xf32> to vector<8x64xbf16>
    %c0_117 = arith.constant 0 : index
    %c192_118 = arith.constant 192 : index
    %259 = vector.load %arg11[%c0_117, %c192_118] : memref<8x256xbf16, #tpu.memory_space<vmem>>, vector<8x64xbf16>
    tpu.vector_store %arg11[%c0_117, %c192_118], %258 {strides = array<i32>} : memref<8x256xbf16, #tpu.memory_space<vmem>>, vector<8x64xbf16>,
    %c0_119 = arith.constant 0 : index
    %c0_120 = arith.constant 0 : index
    %260 = vector.load %arg11[%c0_119, %c0_120] : memref<8x256xbf16, #tpu.memory_space<vmem>>, vector<8x256xbf16>
    %cst_121 = arith.constant dense<0.000000e+00> : vector<8x32xf32>
    %261 = tpu.matmul %260, %166, %cst_121 {dimension_numbers = #tpu.dot_dimension_numbers<[1], [0], [0], [1], [0, 0, 1, 1], [], []>} : vector<8x256xbf16>, vector<256x32xbf16>, vector<8x32xf32> -> vector<8x32xf32>
    %262 = arith.addf %261, %158 : vector<8x32xf32>
    %263 = vector.extract_strided_slice %172 {offsets = [0, 0], sizes = [1, 32], strides = [1, 1]} : vector<4x32xf32> to vector<1x32xf32>
    %264 = vector.extract_strided_slice %172 {offsets = [1, 0], sizes = [1, 32], strides = [1, 1]} : vector<4x32xf32> to vector<1x32xf32>
    %cst_122 = arith.constant dense<0.000000e+00> : vector<8xf32>
    %265 = vector.multi_reduction <add>, %262, %cst_122 [1] : vector<8x32xf32> to vector<8xf32>
    %266 = vector.shape_cast %265 : vector<8xf32> to vector<8x1xf32>
    %cst_123 = arith.constant 3.200000e+01 : f32
    %267 = vector.broadcast %cst_123 : f32 to vector<8x1xf32>
    %268 = arith.divf %266, %267 : vector<8x1xf32>
    %269 = vector.broadcast %268 : vector<8x1xf32> to vector<8x32xf32>
    %270 = arith.subf %262, %269 : vector<8x32xf32>
    %271 = arith.mulf %270, %270 : vector<8x32xf32>
    %cst_124 = arith.constant dense<0.000000e+00> : vector<8xf32>
    %272 = vector.multi_reduction <add>, %271, %cst_124 [1] : vector<8x32xf32> to vector<8xf32>
    %273 = vector.shape_cast %272 : vector<8xf32> to vector<8x1xf32>
    %cst_125 = arith.constant 3.200000e+01 : f32
    %274 = vector.broadcast %cst_125 : f32 to vector<8x1xf32>
    %275 = arith.divf %273, %274 : vector<8x1xf32>
    %cst_126 = arith.constant 9.99999974E-6 : f32
    %276 = vector.broadcast %cst_126 : f32 to vector<8x1xf32>
    %277 = arith.addf %275, %276 : vector<8x1xf32>
    %278 = math.rsqrt %277 : vector<8x1xf32>
    %279 = vector.broadcast %278 : vector<8x1xf32> to vector<8x32xf32>
    %280 = arith.mulf %270, %279 : vector<8x32xf32>
    %281 = vector.broadcast %263 : vector<1x32xf32> to vector<8x32xf32>
    %282 = arith.mulf %280, %281 : vector<8x32xf32>
    %283 = vector.broadcast %264 : vector<1x32xf32> to vector<8x32xf32>
    %284 = arith.addf %282, %283 : vector<8x32xf32>
    %285 = arith.truncf %284 : vector<8x32xf32> to vector<8x32xbf16>
    %cst_127 = arith.constant dense<0.000000e+00> : vector<8x512xf32>
    %286 = tpu.matmul %285, %168, %cst_127 {dimension_numbers = #tpu.dot_dimension_numbers<[1], [0], [0], [1], [0, 0, 1, 1], [], []>} : vector<8x32xbf16>, vector<32x512xbf16>, vector<8x512xf32> -> vector<8x512xf32>
    %cst_128 = arith.constant 0.000000e+00 : f32
    %287 = vector.broadcast %cst_128 : f32 to vector<8x512xf32>
    %288 = arith.maximumf %286, %287 : vector<8x512xf32>
    %289 = arith.truncf %288 : vector<8x512xf32> to vector<8x512xbf16>
    %cst_129 = arith.constant dense<0.000000e+00> : vector<8x32xf32>
    %290 = tpu.matmul %289, %170, %cst_129 {dimension_numbers = #tpu.dot_dimension_numbers<[1], [0], [0], [1], [0, 0, 1, 1], [], []>} : vector<8x512xbf16>, vector<512x32xbf16>, vector<8x32xf32> -> vector<8x32xf32>
    %291 = arith.addf %290, %284 : vector<8x32xf32>
    %292 = vector.extract_strided_slice %172 {offsets = [2, 0], sizes = [1, 32], strides = [1, 1]} : vector<4x32xf32> to vector<1x32xf32>
    %293 = vector.extract_strided_slice %172 {offsets = [3, 0], sizes = [1, 32], strides = [1, 1]} : vector<4x32xf32> to vector<1x32xf32>
    %cst_130 = arith.constant dense<0.000000e+00> : vector<8xf32>
    %294 = vector.multi_reduction <add>, %291, %cst_130 [1] : vector<8x32xf32> to vector<8xf32>
    %295 = vector.shape_cast %294 : vector<8xf32> to vector<8x1xf32>
    %cst_131 = arith.constant 3.200000e+01 : f32
    %296 = vector.broadcast %cst_131 : f32 to vector<8x1xf32>
    %297 = arith.divf %295, %296 : vector<8x1xf32>
    %298 = vector.broadcast %297 : vector<8x1xf32> to vector<8x32xf32>
    %299 = arith.subf %291, %298 : vector<8x32xf32>
    %300 = arith.mulf %299, %299 : vector<8x32xf32>
    %cst_132 = arith.constant dense<0.000000e+00> : vector<8xf32>
    %301 = vector.multi_reduction <add>, %300, %cst_132 [1] : vector<8x32xf32> to vector<8xf32>
    %302 = vector.shape_cast %301 : vector<8xf32> to vector<8x1xf32>
    %cst_133 = arith.constant 3.200000e+01 : f32
    %303 = vector.broadcast %cst_133 : f32 to vector<8x1xf32>
    %304 = arith.divf %302, %303 : vector<8x1xf32>
    %cst_134 = arith.constant 9.99999974E-6 : f32
    %305 = vector.broadcast %cst_134 : f32 to vector<8x1xf32>
    %306 = arith.addf %304, %305 : vector<8x1xf32>
    %307 = math.rsqrt %306 : vector<8x1xf32>
    %308 = vector.broadcast %307 : vector<8x1xf32> to vector<8x32xf32>
    %309 = arith.mulf %299, %308 : vector<8x32xf32>
    %310 = vector.broadcast %292 : vector<1x32xf32> to vector<8x32xf32>
    %311 = arith.mulf %309, %310 : vector<8x32xf32>
    %312 = vector.broadcast %293 : vector<1x32xf32> to vector<8x32xf32>
    %313 = arith.addf %311, %312 : vector<8x32xf32>
    %c2 = arith.constant 2 : index
    %c0_135 = arith.constant 0 : index
    %c0_136 = arith.constant 0 : index
    %314 = vector.load %arg3[%c2, %c0_135, %c0_136] : memref<3x32x256xbf16, #tpu.memory_space<vmem>>, vector<1x32x256xbf16>
    %315 = vector.shape_cast %314 : vector<1x32x256xbf16> to vector<32x256xbf16>
    %c2_137 = arith.constant 2 : index
    %c0_138 = arith.constant 0 : index
    %c0_139 = arith.constant 0 : index
    %316 = vector.load %arg4[%c2_137, %c0_138, %c0_139] : memref<3x32x256xbf16, #tpu.memory_space<vmem>>, vector<1x32x256xbf16>
    %317 = vector.shape_cast %316 : vector<1x32x256xbf16> to vector<32x256xbf16>
    %c2_140 = arith.constant 2 : index
    %c0_141 = arith.constant 0 : index
    %c0_142 = arith.constant 0 : index
    %318 = vector.load %arg5[%c2_140, %c0_141, %c0_142] : memref<3x32x256xbf16, #tpu.memory_space<vmem>>, vector<1x32x256xbf16>
    %319 = vector.shape_cast %318 : vector<1x32x256xbf16> to vector<32x256xbf16>
    %c2_143 = arith.constant 2 : index
    %c0_144 = arith.constant 0 : index
    %c0_145 = arith.constant 0 : index
    %320 = vector.load %arg6[%c2_143, %c0_144, %c0_145] : memref<3x256x32xbf16, #tpu.memory_space<vmem>>, vector<1x256x32xbf16>
    %321 = vector.shape_cast %320 : vector<1x256x32xbf16> to vector<256x32xbf16>
    %c2_146 = arith.constant 2 : index
    %c0_147 = arith.constant 0 : index
    %c0_148 = arith.constant 0 : index
    %322 = vector.load %arg7[%c2_146, %c0_147, %c0_148] : memref<3x32x512xbf16, #tpu.memory_space<vmem>>, vector<1x32x512xbf16>
    %323 = vector.shape_cast %322 : vector<1x32x512xbf16> to vector<32x512xbf16>
    %c2_149 = arith.constant 2 : index
    %c0_150 = arith.constant 0 : index
    %c0_151 = arith.constant 0 : index
    %324 = vector.load %arg8[%c2_149, %c0_150, %c0_151] : memref<3x512x32xbf16, #tpu.memory_space<vmem>>, vector<1x512x32xbf16>
    %325 = vector.shape_cast %324 : vector<1x512x32xbf16> to vector<512x32xbf16>
    %c2_152 = arith.constant 2 : index
    %c0_153 = arith.constant 0 : index
    %c0_154 = arith.constant 0 : index
    %326 = vector.load %arg9[%c2_152, %c0_153, %c0_154] : memref<3x4x32xf32, #tpu.memory_space<vmem>>, vector<1x4x32xf32>
    %327 = vector.shape_cast %326 : vector<1x4x32xf32> to vector<4x32xf32>
    %328 = arith.truncf %313 : vector<8x32xf32> to vector<8x32xbf16>
    %cst_155 = arith.constant dense<0.000000e+00> : vector<8x256xf32>
    %329 = tpu.matmul %328, %315, %cst_155 {dimension_numbers = #tpu.dot_dimension_numbers<[1], [0], [0], [1], [0, 0, 1, 1], [], []>} : vector<8x32xbf16>, vector<32x256xbf16>, vector<8x256xf32> -> vector<8x256xf32>
    %cst_156 = arith.constant dense<0.000000e+00> : vector<8x256xf32>
    %330 = tpu.matmul %328, %317, %cst_156 {dimension_numbers = #tpu.dot_dimension_numbers<[1], [0], [0], [1], [0, 0, 1, 1], [], []>} : vector<8x32xbf16>, vector<32x256xbf16>, vector<8x256xf32> -> vector<8x256xf32>
    %cst_157 = arith.constant dense<0.000000e+00> : vector<8x256xf32>
    %331 = tpu.matmul %328, %319, %cst_157 {dimension_numbers = #tpu.dot_dimension_numbers<[1], [0], [0], [1], [0, 0, 1, 1], [], []>} : vector<8x32xbf16>, vector<32x256xbf16>, vector<8x256xf32> -> vector<8x256xf32>
    %332 = arith.truncf %329 : vector<8x256xf32> to vector<8x256xbf16>
    %333 = arith.truncf %330 : vector<8x256xf32> to vector<8x256xbf16>
    %334 = arith.truncf %331 : vector<8x256xf32> to vector<8x256xbf16>
    %335 = vector.extract_strided_slice %332 {offsets = [0, 0], sizes = [8, 64], strides = [1, 1]} : vector<8x256xbf16> to vector<8x64xbf16>
    %336 = vector.extract_strided_slice %333 {offsets = [0, 0], sizes = [8, 64], strides = [1, 1]} : vector<8x256xbf16> to vector<8x64xbf16>
    %337 = vector.extract_strided_slice %334 {offsets = [0, 0], sizes = [8, 64], strides = [1, 1]} : vector<8x256xbf16> to vector<8x64xbf16>
    %cst_158 = arith.constant dense<0.000000e+00> : vector<8x8xf32>
    %338 = tpu.matmul %335, %336, %cst_158 {dimension_numbers = #tpu.dot_dimension_numbers<[1], [1], [0], [0], [0, 0, 1, 0], [], []>} : vector<8x64xbf16>, vector<8x64xbf16>, vector<8x8xf32> -> vector<8x8xf32>
    %cst_159 = arith.constant 1.250000e-01 : f32
    %339 = vector.broadcast %cst_159 : f32 to vector<8x8xf32>
    %340 = arith.mulf %338, %339 : vector<8x8xf32>
    %cst_160 = arith.constant dense<0xFF800000> : vector<8xf32>
    %341 = vector.multi_reduction <maximumf>, %340, %cst_160 [1] : vector<8x8xf32> to vector<8xf32>
    %342 = vector.shape_cast %341 : vector<8xf32> to vector<8x1xf32>
    %343 = vector.broadcast %342 : vector<8x1xf32> to vector<8x8xf32>
    %344 = arith.subf %340, %343 : vector<8x8xf32>
    %345 = math.exp %344 : vector<8x8xf32>
    %cst_161 = arith.constant dense<0.000000e+00> : vector<8xf32>
    %346 = vector.multi_reduction <add>, %345, %cst_161 [1] : vector<8x8xf32> to vector<8xf32>
    %347 = vector.shape_cast %346 : vector<8xf32> to vector<8x1xf32>
    %348 = tpu.reciprocal %347 {approx = true} : vector<8x1xf32> -> vector<8x1xf32>
    %349 = vector.broadcast %348 : vector<8x1xf32> to vector<8x8xf32>
    %350 = arith.mulf %345, %349 : vector<8x8xf32>
    %351 = arith.truncf %350 : vector<8x8xf32> to vector<8x8xbf16>
    %cst_162 = arith.constant dense<0.000000e+00> : vector<8x64xf32>
    %352 = tpu.matmul %351, %337, %cst_162 {dimension_numbers = #tpu.dot_dimension_numbers<[1], [0], [0], [1], [0, 0, 1, 1], [], []>} : vector<8x8xbf16>, vector<8x64xbf16>, vector<8x64xf32> -> vector<8x64xf32>
    %353 = arith.truncf %352 : vector<8x64xf32> to vector<8x64xbf16>
    %c0_163 = arith.constant 0 : index
    %c0_164 = arith.constant 0 : index
    %354 = vector.load %arg11[%c0_163, %c0_164] : memref<8x256xbf16, #tpu.memory_space<vmem>>, vector<8x64xbf16>
    tpu.vector_store %arg11[%c0_163, %c0_164], %353 {strides = array<i32>} : memref<8x256xbf16, #tpu.memory_space<vmem>>, vector<8x64xbf16>,
    %355 = vector.extract_strided_slice %332 {offsets = [0, 64], sizes = [8, 64], strides = [1, 1]} : vector<8x256xbf16> to vector<8x64xbf16>
    %356 = vector.extract_strided_slice %333 {offsets = [0, 64], sizes = [8, 64], strides = [1, 1]} : vector<8x256xbf16> to vector<8x64xbf16>
    %357 = vector.extract_strided_slice %334 {offsets = [0, 64], sizes = [8, 64], strides = [1, 1]} : vector<8x256xbf16> to vector<8x64xbf16>
    %cst_165 = arith.constant dense<0.000000e+00> : vector<8x8xf32>
    %358 = tpu.matmul %355, %356, %cst_165 {dimension_numbers = #tpu.dot_dimension_numbers<[1], [1], [0], [0], [0, 0, 1, 0], [], []>} : vector<8x64xbf16>, vector<8x64xbf16>, vector<8x8xf32> -> vector<8x8xf32>
    %cst_166 = arith.constant 1.250000e-01 : f32
    %359 = vector.broadcast %cst_166 : f32 to vector<8x8xf32>
    %360 = arith.mulf %358, %359 : vector<8x8xf32>
    %cst_167 = arith.constant dense<0xFF800000> : vector<8xf32>
    %361 = vector.multi_reduction <maximumf>, %360, %cst_167 [1] : vector<8x8xf32> to vector<8xf32>
    %362 = vector.shape_cast %361 : vector<8xf32> to vector<8x1xf32>
    %363 = vector.broadcast %362 : vector<8x1xf32> to vector<8x8xf32>
    %364 = arith.subf %360, %363 : vector<8x8xf32>
    %365 = math.exp %364 : vector<8x8xf32>
    %cst_168 = arith.constant dense<0.000000e+00> : vector<8xf32>
    %366 = vector.multi_reduction <add>, %365, %cst_168 [1] : vector<8x8xf32> to vector<8xf32>
    %367 = vector.shape_cast %366 : vector<8xf32> to vector<8x1xf32>
    %368 = tpu.reciprocal %367 {approx = true} : vector<8x1xf32> -> vector<8x1xf32>
    %369 = vector.broadcast %368 : vector<8x1xf32> to vector<8x8xf32>
    %370 = arith.mulf %365, %369 : vector<8x8xf32>
    %371 = arith.truncf %370 : vector<8x8xf32> to vector<8x8xbf16>
    %cst_169 = arith.constant dense<0.000000e+00> : vector<8x64xf32>
    %372 = tpu.matmul %371, %357, %cst_169 {dimension_numbers = #tpu.dot_dimension_numbers<[1], [0], [0], [1], [0, 0, 1, 1], [], []>} : vector<8x8xbf16>, vector<8x64xbf16>, vector<8x64xf32> -> vector<8x64xf32>
    %373 = arith.truncf %372 : vector<8x64xf32> to vector<8x64xbf16>
    %c0_170 = arith.constant 0 : index
    %c64_171 = arith.constant 64 : index
    %374 = vector.load %arg11[%c0_170, %c64_171] : memref<8x256xbf16, #tpu.memory_space<vmem>>, vector<8x64xbf16>
    tpu.vector_store %arg11[%c0_170, %c64_171], %373 {strides = array<i32>} : memref<8x256xbf16, #tpu.memory_space<vmem>>, vector<8x64xbf16>,
    %375 = vector.extract_strided_slice %332 {offsets = [0, 128], sizes = [8, 64], strides = [1, 1]} : vector<8x256xbf16> to vector<8x64xbf16>
    %376 = vector.extract_strided_slice %333 {offsets = [0, 128], sizes = [8, 64], strides = [1, 1]} : vector<8x256xbf16> to vector<8x64xbf16>
    %377 = vector.extract_strided_slice %334 {offsets = [0, 128], sizes = [8, 64], strides = [1, 1]} : vector<8x256xbf16> to vector<8x64xbf16>
    %cst_172 = arith.constant dense<0.000000e+00> : vector<8x8xf32>
    %378 = tpu.matmul %375, %376, %cst_172 {dimension_numbers = #tpu.dot_dimension_numbers<[1], [1], [0], [0], [0, 0, 1, 0], [], []>} : vector<8x64xbf16>, vector<8x64xbf16>, vector<8x8xf32> -> vector<8x8xf32>
    %cst_173 = arith.constant 1.250000e-01 : f32
    %379 = vector.broadcast %cst_173 : f32 to vector<8x8xf32>
    %380 = arith.mulf %378, %379 : vector<8x8xf32>
    %cst_174 = arith.constant dense<0xFF800000> : vector<8xf32>
    %381 = vector.multi_reduction <maximumf>, %380, %cst_174 [1] : vector<8x8xf32> to vector<8xf32>
    %382 = vector.shape_cast %381 : vector<8xf32> to vector<8x1xf32>
    %383 = vector.broadcast %382 : vector<8x1xf32> to vector<8x8xf32>
    %384 = arith.subf %380, %383 : vector<8x8xf32>
    %385 = math.exp %384 : vector<8x8xf32>
    %cst_175 = arith.constant dense<0.000000e+00> : vector<8xf32>
    %386 = vector.multi_reduction <add>, %385, %cst_175 [1] : vector<8x8xf32> to vector<8xf32>
    %387 = vector.shape_cast %386 : vector<8xf32> to vector<8x1xf32>
    %388 = tpu.reciprocal %387 {approx = true} : vector<8x1xf32> -> vector<8x1xf32>
    %389 = vector.broadcast %388 : vector<8x1xf32> to vector<8x8xf32>
    %390 = arith.mulf %385, %389 : vector<8x8xf32>
    %391 = arith.truncf %390 : vector<8x8xf32> to vector<8x8xbf16>
    %cst_176 = arith.constant dense<0.000000e+00> : vector<8x64xf32>
    %392 = tpu.matmul %391, %377, %cst_176 {dimension_numbers = #tpu.dot_dimension_numbers<[1], [0], [0], [1], [0, 0, 1, 1], [], []>} : vector<8x8xbf16>, vector<8x64xbf16>, vector<8x64xf32> -> vector<8x64xf32>
    %393 = arith.truncf %392 : vector<8x64xf32> to vector<8x64xbf16>
    %c0_177 = arith.constant 0 : index
    %c128_178 = arith.constant 128 : index
    %394 = vector.load %arg11[%c0_177, %c128_178] : memref<8x256xbf16, #tpu.memory_space<vmem>>, vector<8x64xbf16>
    tpu.vector_store %arg11[%c0_177, %c128_178], %393 {strides = array<i32>} : memref<8x256xbf16, #tpu.memory_space<vmem>>, vector<8x64xbf16>,
    %395 = vector.extract_strided_slice %332 {offsets = [0, 192], sizes = [8, 64], strides = [1, 1]} : vector<8x256xbf16> to vector<8x64xbf16>
    %396 = vector.extract_strided_slice %333 {offsets = [0, 192], sizes = [8, 64], strides = [1, 1]} : vector<8x256xbf16> to vector<8x64xbf16>
    %397 = vector.extract_strided_slice %334 {offsets = [0, 192], sizes = [8, 64], strides = [1, 1]} : vector<8x256xbf16> to vector<8x64xbf16>
    %cst_179 = arith.constant dense<0.000000e+00> : vector<8x8xf32>
    %398 = tpu.matmul %395, %396, %cst_179 {dimension_numbers = #tpu.dot_dimension_numbers<[1], [1], [0], [0], [0, 0, 1, 0], [], []>} : vector<8x64xbf16>, vector<8x64xbf16>, vector<8x8xf32> -> vector<8x8xf32>
    %cst_180 = arith.constant 1.250000e-01 : f32
    %399 = vector.broadcast %cst_180 : f32 to vector<8x8xf32>
    %400 = arith.mulf %398, %399 : vector<8x8xf32>
    %cst_181 = arith.constant dense<0xFF800000> : vector<8xf32>
    %401 = vector.multi_reduction <maximumf>, %400, %cst_181 [1] : vector<8x8xf32> to vector<8xf32>
    %402 = vector.shape_cast %401 : vector<8xf32> to vector<8x1xf32>
    %403 = vector.broadcast %402 : vector<8x1xf32> to vector<8x8xf32>
    %404 = arith.subf %400, %403 : vector<8x8xf32>
    %405 = math.exp %404 : vector<8x8xf32>
    %cst_182 = arith.constant dense<0.000000e+00> : vector<8xf32>
    %406 = vector.multi_reduction <add>, %405, %cst_182 [1] : vector<8x8xf32> to vector<8xf32>
    %407 = vector.shape_cast %406 : vector<8xf32> to vector<8x1xf32>
    %408 = tpu.reciprocal %407 {approx = true} : vector<8x1xf32> -> vector<8x1xf32>
    %409 = vector.broadcast %408 : vector<8x1xf32> to vector<8x8xf32>
    %410 = arith.mulf %405, %409 : vector<8x8xf32>
    %411 = arith.truncf %410 : vector<8x8xf32> to vector<8x8xbf16>
    %cst_183 = arith.constant dense<0.000000e+00> : vector<8x64xf32>
    %412 = tpu.matmul %411, %397, %cst_183 {dimension_numbers = #tpu.dot_dimension_numbers<[1], [0], [0], [1], [0, 0, 1, 1], [], []>} : vector<8x8xbf16>, vector<8x64xbf16>, vector<8x64xf32> -> vector<8x64xf32>
    %413 = arith.truncf %412 : vector<8x64xf32> to vector<8x64xbf16>
    %c0_184 = arith.constant 0 : index
    %c192_185 = arith.constant 192 : index
    %414 = vector.load %arg11[%c0_184, %c192_185] : memref<8x256xbf16, #tpu.memory_space<vmem>>, vector<8x64xbf16>
    tpu.vector_store %arg11[%c0_184, %c192_185], %413 {strides = array<i32>} : memref<8x256xbf16, #tpu.memory_space<vmem>>, vector<8x64xbf16>,
    %c0_186 = arith.constant 0 : index
    %c0_187 = arith.constant 0 : index
    %415 = vector.load %arg11[%c0_186, %c0_187] : memref<8x256xbf16, #tpu.memory_space<vmem>>, vector<8x256xbf16>
    %cst_188 = arith.constant dense<0.000000e+00> : vector<8x32xf32>
    %416 = tpu.matmul %415, %321, %cst_188 {dimension_numbers = #tpu.dot_dimension_numbers<[1], [0], [0], [1], [0, 0, 1, 1], [], []>} : vector<8x256xbf16>, vector<256x32xbf16>, vector<8x32xf32> -> vector<8x32xf32>
    %417 = arith.addf %416, %313 : vector<8x32xf32>
    %418 = vector.extract_strided_slice %327 {offsets = [0, 0], sizes = [1, 32], strides = [1, 1]} : vector<4x32xf32> to vector<1x32xf32>
    %419 = vector.extract_strided_slice %327 {offsets = [1, 0], sizes = [1, 32], strides = [1, 1]} : vector<4x32xf32> to vector<1x32xf32>
    %cst_189 = arith.constant dense<0.000000e+00> : vector<8xf32>
    %420 = vector.multi_reduction <add>, %417, %cst_189 [1] : vector<8x32xf32> to vector<8xf32>
    %421 = vector.shape_cast %420 : vector<8xf32> to vector<8x1xf32>
    %cst_190 = arith.constant 3.200000e+01 : f32
    %422 = vector.broadcast %cst_190 : f32 to vector<8x1xf32>
    %423 = arith.divf %421, %422 : vector<8x1xf32>
    %424 = vector.broadcast %423 : vector<8x1xf32> to vector<8x32xf32>
    %425 = arith.subf %417, %424 : vector<8x32xf32>
    %426 = arith.mulf %425, %425 : vector<8x32xf32>
    %cst_191 = arith.constant dense<0.000000e+00> : vector<8xf32>
    %427 = vector.multi_reduction <add>, %426, %cst_191 [1] : vector<8x32xf32> to vector<8xf32>
    %428 = vector.shape_cast %427 : vector<8xf32> to vector<8x1xf32>
    %cst_192 = arith.constant 3.200000e+01 : f32
    %429 = vector.broadcast %cst_192 : f32 to vector<8x1xf32>
    %430 = arith.divf %428, %429 : vector<8x1xf32>
    %cst_193 = arith.constant 9.99999974E-6 : f32
    %431 = vector.broadcast %cst_193 : f32 to vector<8x1xf32>
    %432 = arith.addf %430, %431 : vector<8x1xf32>
    %433 = math.rsqrt %432 : vector<8x1xf32>
    %434 = vector.broadcast %433 : vector<8x1xf32> to vector<8x32xf32>
    %435 = arith.mulf %425, %434 : vector<8x32xf32>
    %436 = vector.broadcast %418 : vector<1x32xf32> to vector<8x32xf32>
    %437 = arith.mulf %435, %436 : vector<8x32xf32>
    %438 = vector.broadcast %419 : vector<1x32xf32> to vector<8x32xf32>
    %439 = arith.addf %437, %438 : vector<8x32xf32>
    %440 = arith.truncf %439 : vector<8x32xf32> to vector<8x32xbf16>
    %cst_194 = arith.constant dense<0.000000e+00> : vector<8x512xf32>
    %441 = tpu.matmul %440, %323, %cst_194 {dimension_numbers = #tpu.dot_dimension_numbers<[1], [0], [0], [1], [0, 0, 1, 1], [], []>} : vector<8x32xbf16>, vector<32x512xbf16>, vector<8x512xf32> -> vector<8x512xf32>
    %cst_195 = arith.constant 0.000000e+00 : f32
    %442 = vector.broadcast %cst_195 : f32 to vector<8x512xf32>
    %443 = arith.maximumf %441, %442 : vector<8x512xf32>
    %444 = arith.truncf %443 : vector<8x512xf32> to vector<8x512xbf16>
    %cst_196 = arith.constant dense<0.000000e+00> : vector<8x32xf32>
    %445 = tpu.matmul %444, %325, %cst_196 {dimension_numbers = #tpu.dot_dimension_numbers<[1], [0], [0], [1], [0, 0, 1, 1], [], []>} : vector<8x512xbf16>, vector<512x32xbf16>, vector<8x32xf32> -> vector<8x32xf32>
    %446 = arith.addf %445, %439 : vector<8x32xf32>
    %447 = vector.extract_strided_slice %327 {offsets = [2, 0], sizes = [1, 32], strides = [1, 1]} : vector<4x32xf32> to vector<1x32xf32>
    %448 = vector.extract_strided_slice %327 {offsets = [3, 0], sizes = [1, 32], strides = [1, 1]} : vector<4x32xf32> to vector<1x32xf32>
    %cst_197 = arith.constant dense<0.000000e+00> : vector<8xf32>
    %449 = vector.multi_reduction <add>, %446, %cst_197 [1] : vector<8x32xf32> to vector<8xf32>
    %450 = vector.shape_cast %449 : vector<8xf32> to vector<8x1xf32>
    %cst_198 = arith.constant 3.200000e+01 : f32
    %451 = vector.broadcast %cst_198 : f32 to vector<8x1xf32>
    %452 = arith.divf %450, %451 : vector<8x1xf32>
    %453 = vector.broadcast %452 : vector<8x1xf32> to vector<8x32xf32>
    %454 = arith.subf %446, %453 : vector<8x32xf32>
    %455 = arith.mulf %454, %454 : vector<8x32xf32>
    %cst_199 = arith.constant dense<0.000000e+00> : vector<8xf32>
    %456 = vector.multi_reduction <add>, %455, %cst_199 [1] : vector<8x32xf32> to vector<8xf32>
    %457 = vector.shape_cast %456 : vector<8xf32> to vector<8x1xf32>
    %cst_200 = arith.constant 3.200000e+01 : f32
    %458 = vector.broadcast %cst_200 : f32 to vector<8x1xf32>
    %459 = arith.divf %457, %458 : vector<8x1xf32>
    %cst_201 = arith.constant 9.99999974E-6 : f32
    %460 = vector.broadcast %cst_201 : f32 to vector<8x1xf32>
    %461 = arith.addf %459, %460 : vector<8x1xf32>
    %462 = math.rsqrt %461 : vector<8x1xf32>
    %463 = vector.broadcast %462 : vector<8x1xf32> to vector<8x32xf32>
    %464 = arith.mulf %454, %463 : vector<8x32xf32>
    %465 = vector.broadcast %447 : vector<1x32xf32> to vector<8x32xf32>
    %466 = arith.mulf %464, %465 : vector<8x32xf32>
    %467 = vector.broadcast %448 : vector<1x32xf32> to vector<8x32xf32>
    %468 = arith.addf %466, %467 : vector<8x32xf32>
    %c0_202 = arith.constant 0 : index
    %c0_203 = arith.constant 0 : index
    %c0_204 = arith.constant 0 : index
    %469 = vector.load %arg10[%c0_202, %c0_203, %c0_204] : memref<1x8x32xf32, #tpu.memory_space<vmem>>, vector<1x8x32xf32>
    %470 = vector.shape_cast %469 : vector<1x8x32xf32> to vector<8x32xf32>
    %471 = vector.shape_cast %468 : vector<8x32xf32> to vector<1x8x32xf32>
    tpu.vector_store %arg10[%c0_202, %c0_203, %c0_204], %471 {strides = array<i32>} : memref<1x8x32xf32, #tpu.memory_space<vmem>>, vector<1x8x32xf32>,
    return
  }
  func.func @transform_0(%arg0: i32) -> (i32, i32, i32) {
    %c0_i32 = arith.constant 0 : i32
    %c0_i32_0 = arith.constant 0 : i32
    %c0_i32_1 = arith.constant 0 : i32
    return %arg0, %c0_i32, %c0_i32_0 : i32, i32, i32
  }
  func.func @transform_1(%arg0: i32) -> (i32, i32) {
    %c0_i32 = arith.constant 0 : i32
    %c0_i32_0 = arith.constant 0 : i32
    %c0_i32_1 = arith.constant 0 : i32
    return %c0_i32, %c0_i32_0 : i32, i32
  }
  func.func @transform_2(%arg0: i32) -> (i32, i32, i32) {
    %c0_i32 = arith.constant 0 : i32
    %c0_i32_0 = arith.constant 0 : i32
    %c0_i32_1 = arith.constant 0 : i32
    %c0_i32_2 = arith.constant 0 : i32
    return %c0_i32, %c0_i32_0, %c0_i32_1 : i32, i32, i32
  }
  func.func @transform_3(%arg0: i32) -> (i32, i32, i32) {
    %c0_i32 = arith.constant 0 : i32
    %c0_i32_0 = arith.constant 0 : i32
    %c0_i32_1 = arith.constant 0 : i32
    %c0_i32_2 = arith.constant 0 : i32
    return %c0_i32, %c0_i32_0, %c0_i32_1 : i32, i32, i32
  }
  func.func @transform_4(%arg0: i32) -> (i32, i32, i32) {
    %c0_i32 = arith.constant 0 : i32
    %c0_i32_0 = arith.constant 0 : i32
    %c0_i32_1 = arith.constant 0 : i32
    %c0_i32_2 = arith.constant 0 : i32
    return %c0_i32, %c0_i32_0, %c0_i32_1 : i32, i32, i32
  }
  func.func @transform_5(%arg0: i32) -> (i32, i32, i32) {
    %c0_i32 = arith.constant 0 : i32
    %c0_i32_0 = arith.constant 0 : i32
    %c0_i32_1 = arith.constant 0 : i32
    %c0_i32_2 = arith.constant 0 : i32
    return %c0_i32, %c0_i32_0, %c0_i32_1 : i32, i32, i32
  }
  func.func @transform_6(%arg0: i32) -> (i32, i32, i32) {
    %c0_i32 = arith.constant 0 : i32
    %c0_i32_0 = arith.constant 0 : i32
    %c0_i32_1 = arith.constant 0 : i32
    %c0_i32_2 = arith.constant 0 : i32
    return %c0_i32, %c0_i32_0, %c0_i32_1 : i32, i32, i32
  }
  func.func @transform_7(%arg0: i32) -> (i32, i32, i32) {
    %c0_i32 = arith.constant 0 : i32
    %c0_i32_0 = arith.constant 0 : i32
    %c0_i32_1 = arith.constant 0 : i32
    %c0_i32_2 = arith.constant 0 : i32
    return %c0_i32, %c0_i32_0, %c0_i32_1 : i32, i32, i32
  }
  func.func @transform_8(%arg0: i32) -> (i32, i32, i32) {
    %c0_i32 = arith.constant 0 : i32
    %c0_i32_0 = arith.constant 0 : i32
    %c0_i32_1 = arith.constant 0 : i32
    %c0_i32_2 = arith.constant 0 : i32
    return %c0_i32, %c0_i32_0, %c0_i32_1 : i32, i32, i32
  }
  func.func @transform_9(%arg0: i32) -> (i32, i32, i32) {
    %c0_i32 = arith.constant 0 : i32
    %c0_i32_0 = arith.constant 0 : i32
    %c0_i32_1 = arith.constant 0 : i32
    return %arg0, %c0_i32, %c0_i32_0 : i32, i32, i32
  }
}

</mosaic_0001>

<llo_original>
// kernel: tpu_custom_call.1
$region0: #{tpu_custom_call.1}
  #allocation0 [shape = 'u32[]', space=smem, size = 0x4, offset = 0x4, fixed_abs, tag = 'smem constant byte address 0x4 - core index']
  #allocation1 [shape = 'u32[144,128]{1,0:T(1,128)}', space=vmem, size = 0x12000, scoped, tag = 'internal scratch']
  #allocation2 [shape = 'bf16[8,256]{1,0:T(8,128)(2,1)}', space=vmem, size = 0x1000, scoped, tag = 'scratch operand']
  %s0 = inlined_call_operand.vmem [shape: f32[2,8,32], index: 0, kind: input, shape index: {}]
  %s1 = inlined_call_operand.vmem [shape: f32[8,32], index: 1, kind: input, shape index: {}]
  %s2 = inlined_call_operand.vmem [shape: bf16[3,32,256], index: 2, kind: input, shape index: {}]
  %s3 = inlined_call_operand.vmem [shape: bf16[3,32,256], index: 3, kind: input, shape index: {}]
  %s4 = inlined_call_operand.vmem [shape: bf16[3,32,256], index: 4, kind: input, shape index: {}]
  %s5 = inlined_call_operand.vmem [shape: bf16[3,256,32], index: 5, kind: input, shape index: {}]
  %s6 = inlined_call_operand.vmem [shape: bf16[3,32,512], index: 6, kind: input, shape index: {}]
  %s7 = inlined_call_operand.vmem [shape: bf16[3,512,32], index: 7, kind: input, shape index: {}]
  %s8 = inlined_call_operand.vmem [shape: f32[3,4,32], index: 8, kind: input, shape index: {}]
  %s9 = inlined_call_operand.hbm [shape: f32[2,8,32], index: 9, kind: output, shape index: {}]
  %s10 = sld [smem:[#allocation0]]
  $region69: #{tpu_custom_call.1} parent=0
    _
  %s12 = ssub.s32 1, %s10
  %s13 = scalar_select 0, %s12, %s10
  $region1: #{tpu_custom_call.1} parent=0
    #allocation3 [shape = 'u8[8192]{0}', space=vmem, size = 0x2000, scoped, tag = 'output window, operand 0']
    #allocation4 [shape = 's32[2]{0}', space=sflag, size = 0x8, scoped, tag = 'scoped memory for tpu_custom_call.1']
    %14 = vsyncpa [#allocation4], 0
    %s15 = scalar_lea.sflag [#allocation4], 1
    %16 = vsyncpa %s15, 0
    loop: start=0, step=1, limit=4
    $region2: #{tpu_custom_call.1} parent=1 // loop_pre_header
      _
    $region3: #{tpu_custom_call.1} parent=1 // loop_header
      %s18 = sphi 0, %s22
      %p19 = scmp.ge.s32.totalorder %s18, 4
      %s28 = sphi 0, %s30
      %s31 = sphi 0, %s28
      %s32 = sphi 0, %s31
      %s48 = sphi 0, %s32
      %s52 = sphi 0, %s52
      %s54 = sphi 0, %s52
      %s55 = sphi 0, %s54
      %s69 = sphi 0, %s55
      %s73 = sphi 0, %s73
      %s75 = sphi 0, %s73
      %s76 = sphi 0, %s75
      %s90 = sphi 0, %s76
      %s94 = sphi 0, %s94
      %s96 = sphi 0, %s94
      %s97 = sphi 0, %s96
      %s111 = sphi 0, %s97
      %s115 = sphi 0, %s115
      %s117 = sphi 0, %s115
      %s118 = sphi 0, %s117
      %s132 = sphi 0, %s118
      %s136 = sphi 0, %s136
      %s138 = sphi 0, %s136
      %s139 = sphi 0, %s138
      %s153 = sphi 0, %s139
      %s157 = sphi 0, %s157
      %s159 = sphi 0, %s157
      %s160 = sphi 0, %s159
      %s174 = sphi 0, %s160
      %s178 = sphi 0, %s178
      %s180 = sphi 0, %s178
      %s181 = sphi 0, %s180
      %s195 = sphi 0, %s181
      %s199 = sphi 0, %s199
      %s201 = sphi 0, %s199
      %s202 = sphi 0, %s201
      %s216 = sphi 0, %s202
      %s222 = sphi 0, %s224
      %s225 = sphi 0, %s222
      %s226 = sphi 0, %s225
      %s242 = sphi 0, %s226
    $region4: #{tpu_custom_call.1} parent=1 // loop_header_branch
      %21 = sbr.rel (%p19) target = $region8
    $region5: #{tpu_custom_call.1} parent=1 // loop_body
      %s23 = ssub.s32 %s18, 1
      %s24 = ssub.s32 %s18, 2
      %s25 = sadd.s32 %s18, 1
      %s26 = ssub.s32 %s18, %s25
      %p27 = scmp.eq.s32.totalorder %s26, 0
      %s29 = sadd.s32 %s28, 1
      %s30 = scalar_select %p27, %s28, %s29
      %p33 = pneg %p27
      %p34 = scmp.eq.s32.totalorder %s18, 1
      %p35 = por %p33, %p34
      %p36 = scmp.ne.s32.totalorder %s28, %s31
      %p37 = scmp.eq.s32.totalorder %s18, 0
      %p38 = por %p36, %p37
      %p39 = scmp.ne.s32.totalorder %s28, %s31
      %p40 = scmp.eq.s32.totalorder %s23, 1
      %p41 = por %p39, %p40
      %p42 = scmp.ne.s32.totalorder %s31, %s32
      %p43 = scmp.eq.s32.totalorder %s23, 0
      %p44 = por %p42, %p43
      %p45 = scmp.ne.s32.totalorder %s31, %s32
      %p46 = scmp.eq.s32.totalorder %s24, 1
      %p47 = por %p45, %p46
      %p49 = scmp.ne.s32.totalorder %s32, %s48
      %p50 = scmp.eq.s32.totalorder %s24, 0
      %p51 = por %p49, %p50
      %s53 = sadd.s32 %s52, 1
      %p56 = scmp.eq.s32.totalorder %s18, 1
      %p57 = scmp.ne.s32.totalorder %s52, %s54
      %p58 = scmp.eq.s32.totalorder %s18, 0
      %p59 = por %p57, %p58
      %p60 = scmp.ne.s32.totalorder %s52, %s54
      %p61 = scmp.eq.s32.totalorder %s23, 1
      %p62 = por %p60, %p61
      %p63 = scmp.ne.s32.totalorder %s54, %s55
      %p64 = scmp.eq.s32.totalorder %s23, 0
      %p65 = por %p63, %p64
      %p66 = scmp.ne.s32.totalorder %s54, %s55
      %p67 = scmp.eq.s32.totalorder %s24, 1
      %p68 = por %p66, %p67
      %p70 = scmp.ne.s32.totalorder %s55, %s69
      %p71 = scmp.eq.s32.totalorder %s24, 0
      %p72 = por %p70, %p71
      %s74 = sadd.s32 %s73, 1
      %p77 = scmp.eq.s32.totalorder %s18, 1
      %p78 = scmp.ne.s32.totalorder %s73, %s75
      %p79 = scmp.eq.s32.totalorder %s18, 0
      %p80 = por %p78, %p79
      %p81 = scmp.ne.s32.totalorder %s73, %s75
      %p82 = scmp.eq.s32.totalorder %s23, 1
      %p83 = por %p81, %p82
      %p84 = scmp.ne.s32.totalorder %s75, %s76
      %p85 = scmp.eq.s32.totalorder %s23, 0
      %p86 = por %p84, %p85
      %p87 = scmp.ne.s32.totalorder %s75, %s76
      %p88 = scmp.eq.s32.totalorder %s24, 1
      %p89 = por %p87, %p88
      %p91 = scmp.ne.s32.totalorder %s76, %s90
      %p92 = scmp.eq.s32.totalorder %s24, 0
      %p93 = por %p91, %p92
      %s95 = sadd.s32 %s94, 1
      %p98 = scmp.eq.s32.totalorder %s18, 1
      %p99 = scmp.ne.s32.totalorder %s94, %s96
      %p100 = scmp.eq.s32.totalorder %s18, 0
      %p101 = por %p99, %p100
      %p102 = scmp.ne.s32.totalorder %s94, %s96
      %p103 = scmp.eq.s32.totalorder %s23, 1
      %p104 = por %p102, %p103
      %p105 = scmp.ne.s32.totalorder %s96, %s97
      %p106 = scmp.eq.s32.totalorder %s23, 0
      %p107 = por %p105, %p106
      %p108 = scmp.ne.s32.totalorder %s96, %s97
      %p109 = scmp.eq.s32.totalorder %s24, 1
      %p110 = por %p108, %p109
      %p112 = scmp.ne.s32.totalorder %s97, %s111
      %p113 = scmp.eq.s32.totalorder %s24, 0
      %p114 = por %p112, %p113
      %s116 = sadd.s32 %s115, 1
      %p119 = scmp.eq.s32.totalorder %s18, 1
      %p120 = scmp.ne.s32.totalorder %s115, %s117
      %p121 = scmp.eq.s32.totalorder %s18, 0
      %p122 = por %p120, %p121
      %p123 = scmp.ne.s32.totalorder %s115, %s117
      %p124 = scmp.eq.s32.totalorder %s23, 1
      %p125 = por %p123, %p124
      %p126 = scmp.ne.s32.totalorder %s117, %s118
      %p127 = scmp.eq.s32.totalorder %s23, 0
      %p128 = por %p126, %p127
      %p129 = scmp.ne.s32.totalorder %s117, %s118
      %p130 = scmp.eq.s32.totalorder %s24, 1
      %p131 = por %p129, %p130
      %p133 = scmp.ne.s32.totalorder %s118, %s132
      %p134 = scmp.eq.s32.totalorder %s24, 0
      %p135 = por %p133, %p134
      %s137 = sadd.s32 %s136, 1
      %p140 = scmp.eq.s32.totalorder %s18, 1
      %p141 = scmp.ne.s32.totalorder %s136, %s138
      %p142 = scmp.eq.s32.totalorder %s18, 0
      %p143 = por %p141, %p142
      %p144 = scmp.ne.s32.totalorder %s136, %s138
      %p145 = scmp.eq.s32.totalorder %s23, 1
      %p146 = por %p144, %p145
      %p147 = scmp.ne.s32.totalorder %s138, %s139
      %p148 = scmp.eq.s32.totalorder %s23, 0
      %p149 = por %p147, %p148
      %p150 = scmp.ne.s32.totalorder %s138, %s139
      %p151 = scmp.eq.s32.totalorder %s24, 1
      %p152 = por %p150, %p151
      %p154 = scmp.ne.s32.totalorder %s139, %s153
      %p155 = scmp.eq.s32.totalorder %s24, 0
      %p156 = por %p154, %p155
      %s158 = sadd.s32 %s157, 1
      %p161 = scmp.eq.s32.totalorder %s18, 1
      %p162 = scmp.ne.s32.totalorder %s157, %s159
      %p163 = scmp.eq.s32.totalorder %s18, 0
      %p164 = por %p162, %p163
      %p165 = scmp.ne.s32.totalorder %s157, %s159
      %p166 = scmp.eq.s32.totalorder %s23, 1
      %p167 = por %p165, %p166
      %p168 = scmp.ne.s32.totalorder %s159, %s160
      %p169 = scmp.eq.s32.totalorder %s23, 0
      %p170 = por %p168, %p169
      %p171 = scmp.ne.s32.totalorder %s159, %s160
      %p172 = scmp.eq.s32.totalorder %s24, 1
      %p173 = por %p171, %p172
      %p175 = scmp.ne.s32.totalorder %s160, %s174
      %p176 = scmp.eq.s32.totalorder %s24, 0
      %p177 = por %p175, %p176
      %s179 = sadd.s32 %s178, 1
      %p182 = scmp.eq.s32.totalorder %s18, 1
      %p183 = scmp.ne.s32.totalorder %s178, %s180
      %p184 = scmp.eq.s32.totalorder %s18, 0
      %p185 = por %p183, %p184
      %p186 = scmp.ne.s32.totalorder %s178, %s180
      %p187 = scmp.eq.s32.totalorder %s23, 1
      %p188 = por %p186, %p187
      %p189 = scmp.ne.s32.totalorder %s180, %s181
      %p190 = scmp.eq.s32.totalorder %s23, 0
      %p191 = por %p189, %p190
      %p192 = scmp.ne.s32.totalorder %s180, %s181
      %p193 = scmp.eq.s32.totalorder %s24, 1
      %p194 = por %p192, %p193
      %p196 = scmp.ne.s32.totalorder %s181, %s195
      %p197 = scmp.eq.s32.totalorder %s24, 0
      %p198 = por %p196, %p197
      %s200 = sadd.s32 %s199, 1
      %p203 = scmp.eq.s32.totalorder %s18, 1
      %p204 = scmp.ne.s32.totalorder %s199, %s201
      %p205 = scmp.eq.s32.totalorder %s18, 0
      %p206 = por %p204, %p205
      %p207 = scmp.ne.s32.totalorder %s199, %s201
      %p208 = scmp.eq.s32.totalorder %s23, 1
      %p209 = por %p207, %p208
      %p210 = scmp.ne.s32.totalorder %s201, %s202
      %p211 = scmp.eq.s32.totalorder %s23, 0
      %p212 = por %p210, %p211
      %p213 = scmp.ne.s32.totalorder %s201, %s202
      %p214 = scmp.eq.s32.totalorder %s24, 1
      %p215 = por %p213, %p214
      %p217 = scmp.ne.s32.totalorder %s202, %s216
      %p218 = scmp.eq.s32.totalorder %s24, 0
      %p219 = por %p217, %p218
      %s220 = ssub.s32 %s18, %s25
      %p221 = scmp.eq.s32.totalorder %s220, 0
      %s223 = sadd.s32 %s222, 1
      %s224 = scalar_select %p221, %s222, %s223
      %p227 = pneg %p221
      %p228 = scmp.eq.s32.totalorder %s18, 1
      %p229 = por %p227, %p228
      %p230 = scmp.ne.s32.totalorder %s222, %s225
      %p231 = scmp.eq.s32.totalorder %s18, 0
      %p232 = por %p230, %p231
      %p233 = scmp.ne.s32.totalorder %s222, %s225
      %p234 = scmp.eq.s32.totalorder %s23, 1
      %p235 = por %p233, %p234
      %p236 = scmp.ne.s32.totalorder %s225, %s226
      %p237 = scmp.eq.s32.totalorder %s23, 0
      %p238 = por %p236, %p237
      %p239 = scmp.ne.s32.totalorder %s225, %s226
      %p240 = scmp.eq.s32.totalorder %s24, 1
      %p241 = por %p239, %p240
      %p243 = scmp.ne.s32.totalorder %s226, %s242
      %p244 = scmp.eq.s32.totalorder %s24, 0
      %p245 = por %p243, %p244
      %p246 = scmp.le.s32.totalorder 1, %s18
      %p247 = scmp.lt.s32.totalorder %s18, 3
      %p248 = pnand %p246, %p247
      %p249 = pneg %p248
      // Predicated region
      $region9: #{tpu_custom_call.1} parent=5 // pred_check
        _
      $region10: #{tpu_custom_call.1} parent=5 // pred_check_branch
        %251 = sbr.rel (%p248) target = $region12
      $region11: #{tpu_custom_call.1} parent=5 // pred_region
        %s252 = ssub.s32 %s18, 1
        // Predicated region
        $region13: #{tpu_custom_call.1} parent=11 // pred_check
          %p253 = pneg %p65
        $region14: #{tpu_custom_call.1} parent=11 // pred_check_branch
          %255 = sbr.rel (%p253) target = $region16
        $region15: #{tpu_custom_call.1} parent=11 // pred_region
          _
        $region16: #{tpu_custom_call.1} parent=11 // pred_fallthru
          _
        // Predicated region
        $region17: #{tpu_custom_call.1} parent=11 // pred_check
          %p256 = pneg %p86
        $region18: #{tpu_custom_call.1} parent=11 // pred_check_branch
          %258 = sbr.rel (%p256) target = $region20
        $region19: #{tpu_custom_call.1} parent=11 // pred_region
          _
        $region20: #{tpu_custom_call.1} parent=11 // pred_fallthru
          _
        // Predicated region
        $region21: #{tpu_custom_call.1} parent=11 // pred_check
          %p259 = pneg %p107
        $region22: #{tpu_custom_call.1} parent=11 // pred_check_branch
          %261 = sbr.rel (%p259) target = $region24
        $region23: #{tpu_custom_call.1} parent=11 // pred_region
          _
        $region24: #{tpu_custom_call.1} parent=11 // pred_fallthru
          _
        // Predicated region
        $region25: #{tpu_custom_call.1} parent=11 // pred_check
          %p262 = pneg %p128
        $region26: #{tpu_custom_call.1} parent=11 // pred_check_branch
          %264 = sbr.rel (%p262) target = $region28
        $region27: #{tpu_custom_call.1} parent=11 // pred_region
          _
        $region28: #{tpu_custom_call.1} parent=11 // pred_fallthru
          _
        // Predicated region
        $region29: #{tpu_custom_call.1} parent=11 // pred_check
          %p265 = pneg %p149
        $region30: #{tpu_custom_call.1} parent=11 // pred_check_branch
          %267 = sbr.rel (%p265) target = $region32
        $region31: #{tpu_custom_call.1} parent=11 // pred_region
          _
        $region32: #{tpu_custom_call.1} parent=11 // pred_fallthru
          _
        // Predicated region
        $region33: #{tpu_custom_call.1} parent=11 // pred_check
          %p268 = pneg %p170
        $region34: #{tpu_custom_call.1} parent=11 // pred_check_branch
          %270 = sbr.rel (%p268) target = $region36
        $region35: #{tpu_custom_call.1} parent=11 // pred_region
          _
        $region36: #{tpu_custom_call.1} parent=11 // pred_fallthru
          _
        // Predicated region
        $region37: #{tpu_custom_call.1} parent=11 // pred_check
          %p271 = pneg %p191
        $region38: #{tpu_custom_call.1} parent=11 // pred_check_branch
          %273 = sbr.rel (%p271) target = $region40
        $region39: #{tpu_custom_call.1} parent=11 // pred_region
          _
        $region40: #{tpu_custom_call.1} parent=11 // pred_fallthru
          _
        // Predicated region
        $region41: #{tpu_custom_call.1} parent=11 // pred_check
          %p274 = pneg %p212
        $region42: #{tpu_custom_call.1} parent=11 // pred_check_branch
          %276 = sbr.rel (%p274) target = $region44
        $region43: #{tpu_custom_call.1} parent=11 // pred_region
          _
        $region44: #{tpu_custom_call.1} parent=11 // pred_fallthru
          _
      $region12: #{tpu_custom_call.1} parent=5 // pred_fallthru
        _
      %p277 = scmp.lt.s32.totalorder %s18, 2
      // Predicated region
      $region45: #{tpu_custom_call.1} parent=5 // pred_check
        %p278 = pneg %p277
      $region46: #{tpu_custom_call.1} parent=5 // pred_check_branch
        %280 = sbr.rel (%p278) target = $region48
      $region47: #{tpu_custom_call.1} parent=5 // pred_region
        // Predicated region
        $region49: #{tpu_custom_call.1} parent=47 // pred_check
          %p281 = pneg %p38
        $region50: #{tpu_custom_call.1} parent=47 // pred_check_branch
          %283 = sbr.rel (%p281) target = $region52
        $region51: #{tpu_custom_call.1} parent=47 // pred_region
          %p284 = scmp.lt.s32.totalorder %s18, 1
          %s285 = scalar_select %p284, %s18, 1
          %s286 = smul.addr %s285, 8
          %s287 = scalar_lea.vmem %s0, %s286
        $region52: #{tpu_custom_call.1} parent=47 // pred_fallthru
          _
      $region48: #{tpu_custom_call.1} parent=5 // pred_fallthru
        _
      %p288 = scmp.le.s32.totalorder 1, %s18
      %p289 = scmp.lt.s32.totalorder %s18, 3
      %p290 = pnand %p288, %p289
      %p291 = pneg %p290
      // Predicated region
      $region53: #{tpu_custom_call.1} parent=5 // pred_check
        _
      $region54: #{tpu_custom_call.1} parent=5 // pred_check_branch
        %293 = sbr.rel (%p290) target = $region56
      $region55: #{tpu_custom_call.1} parent=5 // pred_region
        %s294 = ssub.s32 %s18, 1
        %p295 = scmp.lt.s32.totalorder %s23, 1
        %s296 = scalar_select %p295, %s23, 1
        %s297 = smul.addr %s296, 8
        %s298 = scalar_lea.vmem %s0, %s297
        %p299 = pneg %p44
        %p300 = pneg %p41
        %p301 = pneg %p65
        %p302 = pneg %p62
        %p303 = pneg %p86
        %p304 = pneg %p83
        %p305 = pneg %p107
        %p306 = pneg %p104
        %p307 = pneg %p128
        %p308 = pneg %p125
        %p309 = pneg %p149
        %p310 = pneg %p146
        %p311 = pneg %p170
        %p312 = pneg %p167
        %p313 = pneg %p191
        %p314 = pneg %p188
        %p315 = pneg %p212
        %p316 = pneg %p209
        %p317 = pneg %p238
        %p318 = pneg %p235
        %s319 = sand.u32 %s225, 1
        %s320 = scalar_lea.sflag [#allocation4], %s319
        %s321 = sand.u32 %s225, 1
        %s322 = smul.addr %s321, 8
        %s323 = scalar_lea.vmem [#allocation3], %s322
        %p324 = scmp.lt.s32.totalorder %s23, 1
        %s325 = scalar_select %p324, %s23, 1
        %s326 = smul.addr %s325, 8
        %s327 = scalar_lea.vmem %s0, %s326
        %v329 = vld [vmem:[%s327] sm:$0xff]
        %v330 = vld [vmem:[%s1] sm:$0xff]
        %v331 = vadd.f32 %v329, %v330
        %v332 = vld [vmem:[%s2] sm:$0xff]
        %v333 = vld [vmem:[%s2 + $0x8] sm:$0xff]
        %v334 = vld [vmem:[%s2 + $0x10] sm:$0xff]
        %v335 = vld [vmem:[%s2 + $0x18] sm:$0xff]
        %v336 = vld [vmem:[%s3] sm:$0xff]
        %v337 = vld [vmem:[%s3 + $0x8] sm:$0xff]
        %v338 = vld [vmem:[%s3 + $0x10] sm:$0xff]
        %v339 = vld [vmem:[%s3 + $0x18] sm:$0xff]
        %v340 = vld [vmem:[%s4] sm:$0xff]
        %v341 = vld [vmem:[%s4 + $0x8] sm:$0xff]
        %v342 = vld [vmem:[%s4 + $0x10] sm:$0xff]
        %v343 = vld [vmem:[%s4 + $0x18] sm:$0xff]
        %v344 = vld [vmem:[%s5] sm:$0xf]
        %v345 = vld [vmem:[%s5 + $0x4] sm:$0xf]
        %v346 = vld [vmem:[%s5 + $0x8] sm:$0xf]
        %v347 = vld [vmem:[%s5 + $0xc] sm:$0xf]
        %v348 = vld [vmem:[%s5 + $0x10] sm:$0xf]
        %v349 = vld [vmem:[%s5 + $0x14] sm:$0xf]
        %v350 = vld [vmem:[%s5 + $0x18] sm:$0xf]
        %v351 = vld [vmem:[%s5 + $0x1c] sm:$0xf]
        %v352 = vld [vmem:[%s5 + $0x20] sm:$0xf]
        %v353 = vld [vmem:[%s5 + $0x24] sm:$0xf]
        %v354 = vld [vmem:[%s5 + $0x28] sm:$0xf]
        %v355 = vld [vmem:[%s5 + $0x2c] sm:$0xf]
        %v356 = vld [vmem:[%s5 + $0x30] sm:$0xf]
        %v357 = vld [vmem:[%s5 + $0x34] sm:$0xf]
        %v358 = vld [vmem:[%s5 + $0x38] sm:$0xf]
        %v359 = vld [vmem:[%s5 + $0x3c] sm:$0xf]
        %v360 = vld [vmem:[%s5 + $0x40] sm:$0xf]
        %v361 = vld [vmem:[%s5 + $0x44] sm:$0xf]
        %v362 = vld [vmem:[%s5 + $0x48] sm:$0xf]
        %v363 = vld [vmem:[%s5 + $0x4c] sm:$0xf]
        %v364 = vld [vmem:[%s5 + $0x50] sm:$0xf]
        %v365 = vld [vmem:[%s5 + $0x54] sm:$0xf]
        %v366 = vld [vmem:[%s5 + $0x58] sm:$0xf]
        %v367 = vld [vmem:[%s5 + $0x5c] sm:$0xf]
        %v368 = vld [vmem:[%s5 + $0x60] sm:$0xf]
        %v369 = vld [vmem:[%s5 + $0x64] sm:$0xf]
        %v370 = vld [vmem:[%s5 + $0x68] sm:$0xf]
        %v371 = vld [vmem:[%s5 + $0x6c] sm:$0xf]
        %v372 = vld [vmem:[%s5 + $0x70] sm:$0xf]
        %v373 = vld [vmem:[%s5 + $0x74] sm:$0xf]
        %v374 = vld [vmem:[%s5 + $0x78] sm:$0xf]
        %v375 = vld [vmem:[%s5 + $0x7c] sm:$0xf]
        %v376 = vld [vmem:[%s6] sm:$0xff]
        %v377 = vld [vmem:[%s6 + $0x8] sm:$0xff]
        %v378 = vld [vmem:[%s6 + $0x10] sm:$0xff]
        %v379 = vld [vmem:[%s6 + $0x18] sm:$0xff]
        %v380 = vld [vmem:[%s6 + $0x20] sm:$0xff]
        %v381 = vld [vmem:[%s6 + $0x28] sm:$0xff]
        %v382 = vld [vmem:[%s6 + $0x30] sm:$0xff]
        %v383 = vld [vmem:[%s6 + $0x38] sm:$0xff]
        %v384 = vld [vmem:[%s7] sm:$0xf]
        %v385 = vld [vmem:[%s7 + $0x4] sm:$0xf]
        %v386 = vld [vmem:[%s7 + $0x8] sm:$0xf]
        %v387 = vld [vmem:[%s7 + $0xc] sm:$0xf]
        %v388 = vld [vmem:[%s7 + $0x10] sm:$0xf]
        %v389 = vld [vmem:[%s7 + $0x14] sm:$0xf]
        %v390 = vld [vmem:[%s7 + $0x18] sm:$0xf]
        %v391 = vld [vmem:[%s7 + $0x1c] sm:$0xf]
        %v392 = vld [vmem:[%s7 + $0x20] sm:$0xf]
        %v393 = vld [vmem:[%s7 + $0x24] sm:$0xf]
        %v394 = vld [vmem:[%s7 + $0x28] sm:$0xf]
        %v395 = vld [vmem:[%s7 + $0x2c] sm:$0xf]
        %v396 = vld [vmem:[%s7 + $0x30] sm:$0xf]
        %v397 = vld [vmem:[%s7 + $0x34] sm:$0xf]
        %v398 = vld [vmem:[%s7 + $0x38] sm:$0xf]
        %v399 = vld [vmem:[%s7 + $0x3c] sm:$0xf]
        %v400 = vld [vmem:[%s7 + $0x40] sm:$0xf]
        %v401 = vld [vmem:[%s7 + $0x44] sm:$0xf]
        %v402 = vld [vmem:[%s7 + $0x48] sm:$0xf]
        %v403 = vld [vmem:[%s7 + $0x4c] sm:$0xf]
        %v404 = vld [vmem:[%s7 + $0x50] sm:$0xf]
        %v405 = vld [vmem:[%s7 + $0x54] sm:$0xf]
        %v406 = vld [vmem:[%s7 + $0x58] sm:$0xf]
        %v407 = vld [vmem:[%s7 + $0x5c] sm:$0xf]
        %v408 = vld [vmem:[%s7 + $0x60] sm:$0xf]
        %v409 = vld [vmem:[%s7 + $0x64] sm:$0xf]
        %v410 = vld [vmem:[%s7 + $0x68] sm:$0xf]
        %v411 = vld [vmem:[%s7 + $0x6c] sm:$0xf]
        %v412 = vld [vmem:[%s7 + $0x70] sm:$0xf]
        %v413 = vld [vmem:[%s7 + $0x74] sm:$0xf]
        %v414 = vld [vmem:[%s7 + $0x78] sm:$0xf]
        %v415 = vld [vmem:[%s7 + $0x7c] sm:$0xf]
        %v416 = vld [vmem:[%s7 + $0x80] sm:$0xf]
        %v417 = vld [vmem:[%s7 + $0x84] sm:$0xf]
        %v418 = vld [vmem:[%s7 + $0x88] sm:$0xf]
        %v419 = vld [vmem:[%s7 + $0x8c] sm:$0xf]
        %v420 = vld [vmem:[%s7 + $0x90] sm:$0xf]
        %v421 = vld [vmem:[%s7 + $0x94] sm:$0xf]
        %v422 = vld [vmem:[%s7 + $0x98] sm:$0xf]
        %v423 = vld [vmem:[%s7 + $0x9c] sm:$0xf]
        %v424 = vld [vmem:[%s7 + $0xa0] sm:$0xf]
        %v425 = vld [vmem:[%s7 + $0xa4] sm:$0xf]
        %v426 = vld [vmem:[%s7 + $0xa8] sm:$0xf]
        %v427 = vld [vmem:[%s7 + $0xac] sm:$0xf]
        %v428 = vld [vmem:[%s7 + $0xb0] sm:$0xf]
        %v429 = vld [vmem:[%s7 + $0xb4] sm:$0xf]
        %v430 = vld [vmem:[%s7 + $0xb8] sm:$0xf]
        %v431 = vld [vmem:[%s7 + $0xbc] sm:$0xf]
        %v432 = vld [vmem:[%s7 + $0xc0] sm:$0xf]
        %v433 = vld [vmem:[%s7 + $0xc4] sm:$0xf]
        %v434 = vld [vmem:[%s7 + $0xc8] sm:$0xf]
        %v435 = vld [vmem:[%s7 + $0xcc] sm:$0xf]
        %v436 = vld [vmem:[%s7 + $0xd0] sm:$0xf]
        %v437 = vld [vmem:[%s7 + $0xd4] sm:$0xf]
        %v438 = vld [vmem:[%s7 + $0xd8] sm:$0xf]
        %v439 = vld [vmem:[%s7 + $0xdc] sm:$0xf]
        %v440 = vld [vmem:[%s7 + $0xe0] sm:$0xf]
        %v441 = vld [vmem:[%s7 + $0xe4] sm:$0xf]
        %v442 = vld [vmem:[%s7 + $0xe8] sm:$0xf]
        %v443 = vld [vmem:[%s7 + $0xec] sm:$0xf]
        %v444 = vld [vmem:[%s7 + $0xf0] sm:$0xf]
        %v445 = vld [vmem:[%s7 + $0xf4] sm:$0xf]
        %v446 = vld [vmem:[%s7 + $0xf8] sm:$0xf]
        %v447 = vld [vmem:[%s7 + $0xfc] sm:$0xf]
        %v448 = vld [vmem:[%s8] sm:$0xf]
        %v449 = vpack.c.bf16 %v331, %v331
        %v454 = vunpack.c.l.b16 %v332
        %v455 = vunpack.c.h.b16 %v332
        %v456 = vunpack.c.l.b16 %v333
        %v457 = vunpack.c.h.b16 %v333
        %v458 = vunpack.c.l.b16 %v334
        %v459 = vunpack.c.h.b16 %v334
        %v460 = vunpack.c.l.b16 %v335
        %v461 = vunpack.c.h.b16 %v335
        %v462 = vpack.c.b16 %v456, %v454
        %v463 = vpack.c.b16 %v457, %v455
        %v464 = vpack.c.b16 %v460, %v458
        %v465 = vpack.c.b16 %v461, %v459
        %vm470 = vcmask 261120
        %v472 = vsel %vm470, %v449, 0
        %474 = vmatprep.subr.bf16.mxu0 %v463
        %475 = vmatpush1.bf16.msra.mxu0 %v462
        %476 = vmatprep.subr.bf16.mxu0 %v465
        %477 = vmatpush1.bf16.msra.mxu0 %v464
        %478 = vmatprep.subr.bf16.mxu0 0
        %479 = vmatpush1.bf16.msra.mxu0 0
        %480 = vmatprep.subr.bf16.mxu0 0
        %481 = vmatpush1.bf16.msra.mxu0 0
        %482 = vmatprep.subr.bf16.mxu0 0
        %483 = vmatpush1.bf16.msra.mxu0 0
        %484 = vmatprep.subr.bf16.mxu0 0
        %485 = vmatpush1.bf16.msra.mxu0 0
        %486 = vmatprep.subr.bf16.mxu0 0
        %487 = vmatpush1.bf16.msra.mxu0 0
        %488 = vmatprep.subr.bf16.mxu0 0
        %489 = vmatpush1.bf16.msra.mxu0 0
        %490 = vmatprep.subr.bf16.mxu0 0
        %491 = vmatpush1.bf16.msra.mxu0 0
        %492 = vmatprep.subr.bf16.mxu0 0
        %493 = vmatpush1.bf16.msra.mxu0 0
        %494 = vmatprep.subr.bf16.mxu0 0
        %495 = vmatpush1.bf16.msra.mxu0 0
        %496 = vmatprep.subr.bf16.mxu0 0
        %497 = vmatpush1.bf16.msra.mxu0 0
        %498 = vmatprep.subr.bf16.mxu0 0
        %499 = vmatpush1.bf16.msra.mxu0 0
        %500 = vmatprep.subr.bf16.mxu0 0
        %501 = vmatpush1.bf16.msra.mxu0 0
        %502 = vmatprep.subr.bf16.mxu0 0
        %503 = vmatpush1.bf16.msra.mxu0 0
        %504 = vmatprep.subr.bf16.mxu0 0
        %505 = vmatpush1.bf16.msra.mxu0 0
        %506 = vmatprep.mubr.bf16.mxu0 0
        %507 = vmatmul.mubr.bf16.gmra.mrb[0].mxu0 %v472
        %v508 = vpop.f32.mrb[0].mxu0
        %v509 = vadd.f32 0.0, %v508
        %v510 = vpop.f32.mrb[0].mxu0
        %v511 = vadd.f32 0.0, %v510
        %v512 = vpop.f32.mrb[0].mxu0
        %v513 = vpop.f32.mrb[0].mxu0
        %514 = vdwg.mxu0
        %v519 = vunpack.c.l.b16 %v336
        %v520 = vunpack.c.h.b16 %v336
        %v521 = vunpack.c.l.b16 %v337
        %v522 = vunpack.c.h.b16 %v337
        %v523 = vunpack.c.l.b16 %v338
        %v524 = vunpack.c.h.b16 %v338
        %v525 = vunpack.c.l.b16 %v339
        %v526 = vunpack.c.h.b16 %v339
        %v527 = vpack.c.b16 %v521, %v519
        %v528 = vpack.c.b16 %v522, %v520
        %v529 = vpack.c.b16 %v525, %v523
        %v530 = vpack.c.b16 %v526, %v524
        %535 = vmatprep.subr.bf16.mxu0 %v528
        %536 = vmatpush1.bf16.msra.mxu0 %v527
        %537 = vmatprep.subr.bf16.mxu0 %v530
        %538 = vmatpush1.bf16.msra.mxu0 %v529
        %539 = vmatprep.subr.bf16.mxu0 0
        %540 = vmatpush1.bf16.msra.mxu0 0
        %541 = vmatprep.subr.bf16.mxu0 0
        %542 = vmatpush1.bf16.msra.mxu0 0
        %543 = vmatprep.subr.bf16.mxu0 0
        %544 = vmatpush1.bf16.msra.mxu0 0
        %545 = vmatprep.subr.bf16.mxu0 0
        %546 = vmatpush1.bf16.msra.mxu0 0
        %547 = vmatprep.subr.bf16.mxu0 0
        %548 = vmatpush1.bf16.msra.mxu0 0
        %549 = vmatprep.subr.bf16.mxu0 0
        %550 = vmatpush1.bf16.msra.mxu0 0
        %551 = vmatprep.subr.bf16.mxu0 0
        %552 = vmatpush1.bf16.msra.mxu0 0
        %553 = vmatprep.subr.bf16.mxu0 0
        %554 = vmatpush1.bf16.msra.mxu0 0
        %555 = vmatprep.subr.bf16.mxu0 0
        %556 = vmatpush1.bf16.msra.mxu0 0
        %557 = vmatprep.subr.bf16.mxu0 0
        %558 = vmatpush1.bf16.msra.mxu0 0
        %559 = vmatprep.subr.bf16.mxu0 0
        %560 = vmatpush1.bf16.msra.mxu0 0
        %561 = vmatprep.subr.bf16.mxu0 0
        %562 = vmatpush1.bf16.msra.mxu0 0
        %563 = vmatprep.subr.bf16.mxu0 0
        %564 = vmatpush1.bf16.msra.mxu0 0
        %565 = vmatprep.subr.bf16.mxu0 0
        %566 = vmatpush1.bf16.msra.mxu0 0
        %567 = vmatprep.mubr.bf16.mxu0 0
        %568 = vmatmul.mubr.bf16.gmra.mrb[0].mxu0 %v472
        %v569 = vpop.f32.mrb[0].mxu0
        %v570 = vadd.f32 0.0, %v569
        %v571 = vpop.f32.mrb[0].mxu0
        %v572 = vadd.f32 0.0, %v571
        %v573 = vpop.f32.mrb[0].mxu0
        %v574 = vpop.f32.mrb[0].mxu0
        %575 = vdwg.mxu0
        %v580 = vunpack.c.l.b16 %v340
        %v581 = vunpack.c.h.b16 %v340
        %v582 = vunpack.c.l.b16 %v341
        %v583 = vunpack.c.h.b16 %v341
        %v584 = vunpack.c.l.b16 %v342
        %v585 = vunpack.c.h.b16 %v342
        %v586 = vunpack.c.l.b16 %v343
        %v587 = vunpack.c.h.b16 %v343
        %v588 = vpack.c.b16 %v582, %v580
        %v589 = vpack.c.b16 %v583, %v581
        %v590 = vpack.c.b16 %v586, %v584
        %v591 = vpack.c.b16 %v587, %v585
        %596 = vmatprep.subr.bf16.mxu0 %v589
        %597 = vmatpush1.bf16.msra.mxu0 %v588
        %598 = vmatprep.subr.bf16.mxu0 %v591
        %599 = vmatpush1.bf16.msra.mxu0 %v590
        %600 = vmatprep.subr.bf16.mxu0 0
        %601 = vmatpush1.bf16.msra.mxu0 0
        %602 = vmatprep.subr.bf16.mxu0 0
        %603 = vmatpush1.bf16.msra.mxu0 0
        %604 = vmatprep.subr.bf16.mxu0 0
        %605 = vmatpush1.bf16.msra.mxu0 0
        %606 = vmatprep.subr.bf16.mxu0 0
        %607 = vmatpush1.bf16.msra.mxu0 0
        %608 = vmatprep.subr.bf16.mxu0 0
        %609 = vmatpush1.bf16.msra.mxu0 0
        %610 = vmatprep.subr.bf16.mxu0 0
        %611 = vmatpush1.bf16.msra.mxu0 0
        %612 = vmatprep.subr.bf16.mxu0 0
        %613 = vmatpush1.bf16.msra.mxu0 0
        %614 = vmatprep.subr.bf16.mxu0 0
        %615 = vmatpush1.bf16.msra.mxu0 0
        %616 = vmatprep.subr.bf16.mxu0 0
        %617 = vmatpush1.bf16.msra.mxu0 0
        %618 = vmatprep.subr.bf16.mxu0 0
        %619 = vmatpush1.bf16.msra.mxu0 0
        %620 = vmatprep.subr.bf16.mxu0 0
        %621 = vmatpush1.bf16.msra.mxu0 0
        %622 = vmatprep.subr.bf16.mxu0 0
        %623 = vmatpush1.bf16.msra.mxu0 0
        %624 = vmatprep.subr.bf16.mxu0 0
        %625 = vmatpush1.bf16.msra.mxu0 0
        %626 = vmatprep.subr.bf16.mxu0 0
        %627 = vmatpush1.bf16.msra.mxu0 0
        %628 = vmatprep.mubr.bf16.mxu0 0
        %629 = vmatmul.mubr.bf16.gmra.mrb[0].mxu0 %v472
        %v630 = vpop.f32.mrb[0].mxu0
        %v631 = vadd.f32 0.0, %v630
        %v632 = vpop.f32.mrb[0].mxu0
        %v633 = vadd.f32 0.0, %v632
        %v634 = vpop.f32.mrb[0].mxu0
        %v635 = vpop.f32.mrb[0].mxu0
        %636 = vdwg.mxu0
        %v637 = vpack.c.bf16 %v509, %v509
        %v638 = vpack.c.bf16 %v511, %v511
        %v639 = vpack.c.bf16 %v570, %v570
        %v640 = vpack.c.bf16 %v572, %v572
        %v641 = vpack.c.bf16 %v631, %v631
        %v642 = vpack.c.bf16 %v633, %v633
        %vm643 = vcmask 523264
        %v645 = vsel %vm643, %v637, 0
        %v648 = vsel %vm643, %v639, 0
        %650 = vmatprep.subr.bf16.mxu0 0
        %651 = vmatpush1.bf16.xpose.msra.mxu0 %v648
        %652 = vmatprep.subr.bf16.mxu0 0
        %653 = vmatpush1.bf16.xpose.msra.mxu0 0
        %654 = vmatprep.subr.bf16.mxu0 0
        %655 = vmatpush1.bf16.xpose.msra.mxu0 0
        %656 = vmatprep.subr.bf16.mxu0 0
        %657 = vmatpush1.bf16.xpose.msra.mxu0 0
        %658 = vmatprep.subr.bf16.mxu0 0
        %659 = vmatpush1.bf16.xpose.msra.mxu0 0
        %660 = vmatprep.subr.bf16.mxu0 0
        %661 = vmatpush1.bf16.xpose.msra.mxu0 0
        %662 = vmatprep.subr.bf16.mxu0 0
        %663 = vmatpush1.bf16.xpose.msra.mxu0 0
        %664 = vmatprep.subr.bf16.mxu0 0
        %665 = vmatpush1.bf16.xpose.msra.mxu0 0
        %666 = vmatprep.subr.bf16.mxu0 0
        %667 = vmatpush1.bf16.xpose.msra.mxu0 0
        %668 = vmatprep.subr.bf16.mxu0 0
        %669 = vmatpush1.bf16.xpose.msra.mxu0 0
        %670 = vmatprep.subr.bf16.mxu0 0
        %671 = vmatpush1.bf16.xpose.msra.mxu0 0
        %672 = vmatprep.subr.bf16.mxu0 0
        %673 = vmatpush1.bf16.xpose.msra.mxu0 0
        %674 = vmatprep.subr.bf16.mxu0 0
        %675 = vmatpush1.bf16.xpose.msra.mxu0 0
        %676 = vmatprep.subr.bf16.mxu0 0
        %677 = vmatpush1.bf16.xpose.msra.mxu0 0
        %678 = vmatprep.subr.bf16.mxu0 0
        %679 = vmatpush1.bf16.xpose.msra.mxu0 0
        %680 = vmatprep.subr.bf16.mxu0 0
        %681 = vmatpush1.bf16.xpose.msra.mxu0 0
        %682 = vmatprep.mubr.bf16.mxu0 0
        %683 = vmatmul.mubr.bf16.gmra.mrb[0].mxu0 %v645
        %v684 = vpop.f32.mrb[0].mxu0
        %v685 = vadd.f32 0.0, %v684
        %v686 = vpop.f32.mrb[0].mxu0
        %v687 = vpop.f32.mrb[0].mxu0
        %v688 = vpop.f32.mrb[0].mxu0
        %689 = vdwg.mxu0
        %v690 = vmul.f32 %v685, 0.125
        %vm691 = vcmask 64512
        %v692 = vsel %vm691, %v690, -inf
        %693 = vmax.xlane.f32.xlu0 %v692
        %v694 = vpop.xlane.xlu0 %693
        %v695 = vsub.f32 %v690, %v694
        %v696 = vmul.f32 %v695, 1.442695
        %v697 = vpow.pop %v696
        %v698 = vsel %vm691, %v697, 0.0
        %699 = vadd.xlane.f32.xlu0 %v698
        %v700 = vpop.xlane.xlu0 %699
        %v701 = vrcp.pop %v700
        %v702 = vmul.f32 %v697, %v701
        %v703 = vpack.c.bf16 %v702, %v702
        %v705 = vsel %vm691, %v703, 0
        %vm707 = vcmask 1043456
        %v709 = vsel %vm707, %v641, 0
        %711 = vmatprep.subr.bf16.mxu0 0
        %712 = vmatpush1.bf16.msra.mxu0 %v709
        %713 = vmatprep.subr.bf16.mxu0 0
        %714 = vmatpush1.bf16.msra.mxu0 0
        %715 = vmatprep.subr.bf16.mxu0 0
        %716 = vmatpush1.bf16.msra.mxu0 0
        %717 = vmatprep.subr.bf16.mxu0 0
        %718 = vmatpush1.bf16.msra.mxu0 0
        %719 = vmatprep.subr.bf16.mxu0 0
        %720 = vmatpush1.bf16.msra.mxu0 0
        %721 = vmatprep.subr.bf16.mxu0 0
        %722 = vmatpush1.bf16.msra.mxu0 0
        %723 = vmatprep.subr.bf16.mxu0 0
        %724 = vmatpush1.bf16.msra.mxu0 0
        %725 = vmatprep.subr.bf16.mxu0 0
        %726 = vmatpush1.bf16.msra.mxu0 0
        %727 = vmatprep.subr.bf16.mxu0 0
        %728 = vmatpush1.bf16.msra.mxu0 0
        %729 = vmatprep.subr.bf16.mxu0 0
        %730 = vmatpush1.bf16.msra.mxu0 0
        %731 = vmatprep.subr.bf16.mxu0 0
        %732 = vmatpush1.bf16.msra.mxu0 0
        %733 = vmatprep.subr.bf16.mxu0 0
        %734 = vmatpush1.bf16.msra.mxu0 0
        %735 = vmatprep.subr.bf16.mxu0 0
        %736 = vmatpush1.bf16.msra.mxu0 0
        %737 = vmatprep.subr.bf16.mxu0 0
        %738 = vmatpush1.bf16.msra.mxu0 0
        %739 = vmatprep.subr.bf16.mxu0 0
        %740 = vmatpush1.bf16.msra.mxu0 0
        %741 = vmatprep.subr.bf16.mxu0 0
        %742 = vmatpush1.bf16.msra.mxu0 0
        %743 = vmatprep.mubr.bf16.mxu0 0
        %744 = vmatmul.mubr.bf16.gmra.mrb[0].mxu0 %v705
        %v745 = vpop.f32.mrb[0].mxu0
        %v746 = vadd.f32 0.0, %v745
        %v747 = vpop.f32.mrb[0].mxu0
        %v748 = vpop.f32.mrb[0].mxu0
        %v749 = vpop.f32.mrb[0].mxu0
        %750 = vdwg.mxu0
        %v751 = vpack.c.bf16 %v746, %v746
        %vm752 = vcmask 519168
        %753 = vst.msk [vmem:[#allocation2] sm:$0xf] %vm752, %v751
        %755 = vrot.lane.b32.xlu0 %v637, 64
        %v756 = vpop.permute.xlu0 %755
        %758 = vrot.lane.b32.xlu0 %v639, 64
        %v759 = vpop.permute.xlu0 %758
        %v761 = vsel %vm643, %v756, 0
        %v764 = vsel %vm643, %v759, 0
        %766 = vmatprep.subr.bf16.mxu0 0
        %767 = vmatpush1.bf16.xpose.msra.mxu0 %v764
        %768 = vmatprep.subr.bf16.mxu0 0
        %769 = vmatpush1.bf16.xpose.msra.mxu0 0
        %770 = vmatprep.subr.bf16.mxu0 0
        %771 = vmatpush1.bf16.xpose.msra.mxu0 0
        %772 = vmatprep.subr.bf16.mxu0 0
        %773 = vmatpush1.bf16.xpose.msra.mxu0 0
        %774 = vmatprep.subr.bf16.mxu0 0
        %775 = vmatpush1.bf16.xpose.msra.mxu0 0
        %776 = vmatprep.subr.bf16.mxu0 0
        %777 = vmatpush1.bf16.xpose.msra.mxu0 0
        %778 = vmatprep.subr.bf16.mxu0 0
        %779 = vmatpush1.bf16.xpose.msra.mxu0 0
        %780 = vmatprep.subr.bf16.mxu0 0
        %781 = vmatpush1.bf16.xpose.msra.mxu0 0
        %782 = vmatprep.subr.bf16.mxu0 0
        %783 = vmatpush1.bf16.xpose.msra.mxu0 0
        %784 = vmatprep.subr.bf16.mxu0 0
        %785 = vmatpush1.bf16.xpose.msra.mxu0 0
        %786 = vmatprep.subr.bf16.mxu0 0
        %787 = vmatpush1.bf16.xpose.msra.mxu0 0
        %788 = vmatprep.subr.bf16.mxu0 0
        %789 = vmatpush1.bf16.xpose.msra.mxu0 0
        %790 = vmatprep.subr.bf16.mxu0 0
        %791 = vmatpush1.bf16.xpose.msra.mxu0 0
        %792 = vmatprep.subr.bf16.mxu0 0
        %793 = vmatpush1.bf16.xpose.msra.mxu0 0
        %794 = vmatprep.subr.bf16.mxu0 0
        %795 = vmatpush1.bf16.xpose.msra.mxu0 0
        %796 = vmatprep.subr.bf16.mxu0 0
        %797 = vmatpush1.bf16.xpose.msra.mxu0 0
        %798 = vmatprep.mubr.bf16.mxu0 0
        %799 = vmatmul.mubr.bf16.gmra.mrb[0].mxu0 %v761
        %v800 = vpop.f32.mrb[0].mxu0
        %v801 = vadd.f32 0.0, %v800
        %v802 = vpop.f32.mrb[0].mxu0
        %v803 = vpop.f32.mrb[0].mxu0
        %v804 = vpop.f32.mrb[0].mxu0
        %805 = vdwg.mxu0
        %v806 = vmul.f32 %v801, 0.125
        %v807 = vsel %vm691, %v806, -inf
        %808 = vmax.xlane.f32.xlu0 %v807
        %v809 = vpop.xlane.xlu0 %808
        %v810 = vsub.f32 %v806, %v809
        %v811 = vmul.f32 %v810, 1.442695
        %v812 = vpow.pop %v811
        %v813 = vsel %vm691, %v812, 0.0
        %814 = vadd.xlane.f32.xlu0 %v813
        %v815 = vpop.xlane.xlu0 %814
        %v816 = vrcp.pop %v815
        %v817 = vmul.f32 %v812, %v816
        %v818 = vpack.c.bf16 %v817, %v817
        %820 = vrot.lane.b32.xlu0 %v641, 64
        %v821 = vpop.permute.xlu0 %820
        %v823 = vsel %vm691, %v818, 0
        %v826 = vsel %vm707, %v821, 0
        %828 = vmatprep.subr.bf16.mxu0 0
        %829 = vmatpush1.bf16.msra.mxu0 %v826
        %830 = vmatprep.subr.bf16.mxu0 0
        %831 = vmatpush1.bf16.msra.mxu0 0
        %832 = vmatprep.subr.bf16.mxu0 0
        %833 = vmatpush1.bf16.msra.mxu0 0
        %834 = vmatprep.subr.bf16.mxu0 0
        %835 = vmatpush1.bf16.msra.mxu0 0
        %836 = vmatprep.subr.bf16.mxu0 0
        %837 = vmatpush1.bf16.msra.mxu0 0
        %838 = vmatprep.subr.bf16.mxu0 0
        %839 = vmatpush1.bf16.msra.mxu0 0
        %840 = vmatprep.subr.bf16.mxu0 0
        %841 = vmatpush1.bf16.msra.mxu0 0
        %842 = vmatprep.subr.bf16.mxu0 0
        %843 = vmatpush1.bf16.msra.mxu0 0
        %844 = vmatprep.subr.bf16.mxu0 0
        %845 = vmatpush1.bf16.msra.mxu0 0
        %846 = vmatprep.subr.bf16.mxu0 0
        %847 = vmatpush1.bf16.msra.mxu0 0
        %848 = vmatprep.subr.bf16.mxu0 0
        %849 = vmatpush1.bf16.msra.mxu0 0
        %850 = vmatprep.subr.bf16.mxu0 0
        %851 = vmatpush1.bf16.msra.mxu0 0
        %852 = vmatprep.subr.bf16.mxu0 0
        %853 = vmatpush1.bf16.msra.mxu0 0
        %854 = vmatprep.subr.bf16.mxu0 0
        %855 = vmatpush1.bf16.msra.mxu0 0
        %856 = vmatprep.subr.bf16.mxu0 0
        %857 = vmatpush1.bf16.msra.mxu0 0
        %858 = vmatprep.subr.bf16.mxu0 0
        %859 = vmatpush1.bf16.msra.mxu0 0
        %860 = vmatprep.mubr.bf16.mxu0 0
        %861 = vmatmul.mubr.bf16.gmra.mrb[0].mxu0 %v823
        %v862 = vpop.f32.mrb[0].mxu0
        %v863 = vadd.f32 0.0, %v862
        %v864 = vpop.f32.mrb[0].mxu0
        %v865 = vpop.f32.mrb[0].mxu0
        %v866 = vpop.f32.mrb[0].mxu0
        %867 = vdwg.mxu0
        %v868 = vpack.c.bf16 %v863, %v863
        %v870 = vunpack.c.l.b16 %v868
        %v871 = vpack.c.b16 %v870, %v870
        %872 = vrot.lane.b32.xlu0 %v871, 64
        %v873 = vpop.permute.xlu0 %872
        %vm875 = vcmask 1043968
        %876 = vst.msk [vmem:[#allocation2] sm:$0xf] %vm875, %v873
        %v878 = vsel %vm643, %v638, 0
        %v881 = vsel %vm643, %v640, 0
        %883 = vmatprep.subr.bf16.mxu0 0
        %884 = vmatpush1.bf16.xpose.msra.mxu0 %v881
        %885 = vmatprep.subr.bf16.mxu0 0
        %886 = vmatpush1.bf16.xpose.msra.mxu0 0
        %887 = vmatprep.subr.bf16.mxu0 0
        %888 = vmatpush1.bf16.xpose.msra.mxu0 0
        %889 = vmatprep.subr.bf16.mxu0 0
        %890 = vmatpush1.bf16.xpose.msra.mxu0 0
        %891 = vmatprep.subr.bf16.mxu0 0
        %892 = vmatpush1.bf16.xpose.msra.mxu0 0
        %893 = vmatprep.subr.bf16.mxu0 0
        %894 = vmatpush1.bf16.xpose.msra.mxu0 0
        %895 = vmatprep.subr.bf16.mxu0 0
        %896 = vmatpush1.bf16.xpose.msra.mxu0 0
        %897 = vmatprep.subr.bf16.mxu0 0
        %898 = vmatpush1.bf16.xpose.msra.mxu0 0
        %899 = vmatprep.subr.bf16.mxu0 0
        %900 = vmatpush1.bf16.xpose.msra.mxu0 0
        %901 = vmatprep.subr.bf16.mxu0 0
        %902 = vmatpush1.bf16.xpose.msra.mxu0 0
        %903 = vmatprep.subr.bf16.mxu0 0
        %904 = vmatpush1.bf16.xpose.msra.mxu0 0
        %905 = vmatprep.subr.bf16.mxu0 0
        %906 = vmatpush1.bf16.xpose.msra.mxu0 0
        %907 = vmatprep.subr.bf16.mxu0 0
        %908 = vmatpush1.bf16.xpose.msra.mxu0 0
        %909 = vmatprep.subr.bf16.mxu0 0
        %910 = vmatpush1.bf16.xpose.msra.mxu0 0
        %911 = vmatprep.subr.bf16.mxu0 0
        %912 = vmatpush1.bf16.xpose.msra.mxu0 0
        %913 = vmatprep.subr.bf16.mxu0 0
        %914 = vmatpush1.bf16.xpose.msra.mxu0 0
        %915 = vmatprep.mubr.bf16.mxu0 0
        %916 = vmatmul.mubr.bf16.gmra.mrb[0].mxu0 %v878
        %v917 = vpop.f32.mrb[0].mxu0
        %v918 = vadd.f32 0.0, %v917
        %v919 = vpop.f32.mrb[0].mxu0
        %v920 = vpop.f32.mrb[0].mxu0
        %v921 = vpop.f32.mrb[0].mxu0
        %922 = vdwg.mxu0
        %v923 = vmul.f32 %v918, 0.125
        %v924 = vsel %vm691, %v923, -inf
        %925 = vmax.xlane.f32.xlu0 %v924
        %v926 = vpop.xlane.xlu0 %925
        %v927 = vsub.f32 %v923, %v926
        %v928 = vmul.f32 %v927, 1.442695
        %v929 = vpow.pop %v928
        %v930 = vsel %vm691, %v929, 0.0
        %931 = vadd.xlane.f32.xlu0 %v930
        %v932 = vpop.xlane.xlu0 %931
        %v933 = vrcp.pop %v932
        %v934 = vmul.f32 %v929, %v933
        %v935 = vpack.c.bf16 %v934, %v934
        %v937 = vsel %vm691, %v935, 0
        %v940 = vsel %vm707, %v642, 0
        %942 = vmatprep.subr.bf16.mxu0 0
        %943 = vmatpush1.bf16.msra.mxu0 %v940
        %944 = vmatprep.subr.bf16.mxu0 0
        %945 = vmatpush1.bf16.msra.mxu0 0
        %946 = vmatprep.subr.bf16.mxu0 0
        %947 = vmatpush1.bf16.msra.mxu0 0
        %948 = vmatprep.subr.bf16.mxu0 0
        %949 = vmatpush1.bf16.msra.mxu0 0
        %950 = vmatprep.subr.bf16.mxu0 0
        %951 = vmatpush1.bf16.msra.mxu0 0
        %952 = vmatprep.subr.bf16.mxu0 0
        %953 = vmatpush1.bf16.msra.mxu0 0
        %954 = vmatprep.subr.bf16.mxu0 0
        %955 = vmatpush1.bf16.msra.mxu0 0
        %956 = vmatprep.subr.bf16.mxu0 0
        %957 = vmatpush1.bf16.msra.mxu0 0
        %958 = vmatprep.subr.bf16.mxu0 0
        %959 = vmatpush1.bf16.msra.mxu0 0
        %960 = vmatprep.subr.bf16.mxu0 0
        %961 = vmatpush1.bf16.msra.mxu0 0
        %962 = vmatprep.subr.bf16.mxu0 0
        %963 = vmatpush1.bf16.msra.mxu0 0
        %964 = vmatprep.subr.bf16.mxu0 0
        %965 = vmatpush1.bf16.msra.mxu0 0
        %966 = vmatprep.subr.bf16.mxu0 0
        %967 = vmatpush1.bf16.msra.mxu0 0
        %968 = vmatprep.subr.bf16.mxu0 0
        %969 = vmatpush1.bf16.msra.mxu0 0
        %970 = vmatprep.subr.bf16.mxu0 0
        %971 = vmatpush1.bf16.msra.mxu0 0
        %972 = vmatprep.subr.bf16.mxu0 0
        %973 = vmatpush1.bf16.msra.mxu0 0
        %974 = vmatprep.mubr.bf16.mxu0 0
        %975 = vmatmul.mubr.bf16.gmra.mrb[0].mxu0 %v937
        %v976 = vpop.f32.mrb[0].mxu0
        %v977 = vadd.f32 0.0, %v976
        %v978 = vpop.f32.mrb[0].mxu0
        %v979 = vpop.f32.mrb[0].mxu0
        %v980 = vpop.f32.mrb[0].mxu0
        %981 = vdwg.mxu0
        %v982 = vpack.c.bf16 %v977, %v977
        %983 = vst.msk [vmem:[#allocation2 + $0x4] sm:$0xf] %vm752, %v982
        %985 = vrot.lane.b32.xlu0 %v638, 64
        %v986 = vpop.permute.xlu0 %985
        %988 = vrot.lane.b32.xlu0 %v640, 64
        %v989 = vpop.permute.xlu0 %988
        %v991 = vsel %vm643, %v986, 0
        %v994 = vsel %vm643, %v989, 0
        %996 = vmatprep.subr.bf16.mxu0 0
        %997 = vmatpush1.bf16.xpose.msra.mxu0 %v994
        %998 = vmatprep.subr.bf16.mxu0 0
        %999 = vmatpush1.bf16.xpose.msra.mxu0 0
        %1000 = vmatprep.subr.bf16.mxu0 0
        %1001 = vmatpush1.bf16.xpose.msra.mxu0 0
        %1002 = vmatprep.subr.bf16.mxu0 0
        %1003 = vmatpush1.bf16.xpose.msra.mxu0 0
        %1004 = vmatprep.subr.bf16.mxu0 0
        %1005 = vmatpush1.bf16.xpose.msra.mxu0 0
        %1006 = vmatprep.subr.bf16.mxu0 0
        %1007 = vmatpush1.bf16.xpose.msra.mxu0 0
        %1008 = vmatprep.subr.bf16.mxu0 0
        %1009 = vmatpush1.bf16.xpose.msra.mxu0 0
        %1010 = vmatprep.subr.bf16.mxu0 0
        %1011 = vmatpush1.bf16.xpose.msra.mxu0 0
        %1012 = vmatprep.subr.bf16.mxu0 0
        %1013 = vmatpush1.bf16.xpose.msra.mxu0 0
        %1014 = vmatprep.subr.bf16.mxu0 0
        %1015 = vmatpush1.bf16.xpose.msra.mxu0 0
        %1016 = vmatprep.subr.bf16.mxu0 0
        %1017 = vmatpush1.bf16.xpose.msra.mxu0 0
        %1018 = vmatprep.subr.bf16.mxu0 0
        %1019 = vmatpush1.bf16.xpose.msra.mxu0 0
        %1020 = vmatprep.subr.bf16.mxu0 0
        %1021 = vmatpush1.bf16.xpose.msra.mxu0 0
        %1022 = vmatprep.subr.bf16.mxu0 0
        %1023 = vmatpush1.bf16.xpose.msra.mxu0 0
        %1024 = vmatprep.subr.bf16.mxu0 0
        %1025 = vmatpush1.bf16.xpose.msra.mxu0 0
        %1026 = vmatprep.subr.bf16.mxu0 0
        %1027 = vmatpush1.bf16.xpose.msra.mxu0 0
        %1028 = vmatprep.mubr.bf16.mxu0 0
        %1029 = vmatmul.mubr.bf16.gmra.mrb[0].mxu0 %v991
        %v1030 = vpop.f32.mrb[0].mxu0
        %v1031 = vadd.f32 0.0, %v1030
        %v1032 = vpop.f32.mrb[0].mxu0
        %v1033 = vpop.f32.mrb[0].mxu0
        %v1034 = vpop.f32.mrb[0].mxu0
        %1035 = vdwg.mxu0
        %v1036 = vmul.f32 %v1031, 0.125
        %v1037 = vsel %vm691, %v1036, -inf
        %1038 = vmax.xlane.f32.xlu0 %v1037
        %v1039 = vpop.xlane.xlu0 %1038
        %v1040 = vsub.f32 %v1036, %v1039
        %v1041 = vmul.f32 %v1040, 1.442695
        %v1042 = vpow.pop %v1041
        %v1043 = vsel %vm691, %v1042, 0.0
        %1044 = vadd.xlane.f32.xlu0 %v1043
        %v1045 = vpop.xlane.xlu0 %1044
        %v1046 = vrcp.pop %v1045
        %v1047 = vmul.f32 %v1042, %v1046
        %v1048 = vpack.c.bf16 %v1047, %v1047
        %1050 = vrot.lane.b32.xlu0 %v642, 64
        %v1051 = vpop.permute.xlu0 %1050
        %v1053 = vsel %vm691, %v1048, 0
        %v1056 = vsel %vm707, %v1051, 0
        %1058 = vmatprep.subr.bf16.mxu0 0
        %1059 = vmatpush1.bf16.msra.mxu0 %v1056
        %1060 = vmatprep.subr.bf16.mxu0 0
        %1061 = vmatpush1.bf16.msra.mxu0 0
        %1062 = vmatprep.subr.bf16.mxu0 0
        %1063 = vmatpush1.bf16.msra.mxu0 0
        %1064 = vmatprep.subr.bf16.mxu0 0
        %1065 = vmatpush1.bf16.msra.mxu0 0
        %1066 = vmatprep.subr.bf16.mxu0 0
        %1067 = vmatpush1.bf16.msra.mxu0 0
        %1068 = vmatprep.subr.bf16.mxu0 0
        %1069 = vmatpush1.bf16.msra.mxu0 0
        %1070 = vmatprep.subr.bf16.mxu0 0
        %1071 = vmatpush1.bf16.msra.mxu0 0
        %1072 = vmatprep.subr.bf16.mxu0 0
        %1073 = vmatpush1.bf16.msra.mxu0 0
        %1074 = vmatprep.subr.bf16.mxu0 0
        %1075 = vmatpush1.bf16.msra.mxu0 0
        %1076 = vmatprep.subr.bf16.mxu0 0
        %1077 = vmatpush1.bf16.msra.mxu0 0
        %1078 = vmatprep.subr.bf16.mxu0 0
        %1079 = vmatpush1.bf16.msra.mxu0 0
        %1080 = vmatprep.subr.bf16.mxu0 0
        %1081 = vmatpush1.bf16.msra.mxu0 0
        %1082 = vmatprep.subr.bf16.mxu0 0
        %1083 = vmatpush1.bf16.msra.mxu0 0
        %1084 = vmatprep.subr.bf16.mxu0 0
        %1085 = vmatpush1.bf16.msra.mxu0 0
        %1086 = vmatprep.subr.bf16.mxu0 0
        %1087 = vmatpush1.bf16.msra.mxu0 0
        %1088 = vmatprep.subr.bf16.mxu0 0
        %1089 = vmatpush1.bf16.msra.mxu0 0
        %1090 = vmatprep.mubr.bf16.mxu0 0
        %1091 = vmatmul.mubr.bf16.gmra.mrb[0].mxu0 %v1053
        %v1092 = vpop.f32.mrb[0].mxu0
        %v1093 = vadd.f32 0.0, %v1092
        %v1094 = vpop.f32.mrb[0].mxu0
        %v1095 = vpop.f32.mrb[0].mxu0
        %v1096 = vpop.f32.mrb[0].mxu0
        %1097 = vdwg.mxu0
        %v1098 = vpack.c.bf16 %v1093, %v1093
        %v1100 = vunpack.c.l.b16 %v1098
        %v1101 = vpack.c.b16 %v1100, %v1100
        %1102 = vrot.lane.b32.xlu0 %v1101, 64
        %v1103 = vpop.permute.xlu0 %1102
        %1105 = vst.msk [vmem:[#allocation2 + $0x4] sm:$0xf] %vm875, %v1103
        %v1106 = vld [vmem:[#allocation2] sm:$0xff]
        %v1108 = vunpack.c.l.b16 %v1106
        %v1109 = vunpack.c.h.b16 %v1106
        %v1110 = vpack.c.b16 %v1108, %v1108
        %v1111 = vpack.c.b16 %v1109, %v1109
        %v1146 = vunpack.c.l.b16 %v344
        %v1147 = vunpack.c.l.b16 %v345
        %v1148 = vunpack.c.l.b16 %v346
        %v1149 = vunpack.c.l.b16 %v347
        %v1150 = vunpack.c.l.b16 %v348
        %v1151 = vunpack.c.l.b16 %v349
        %v1152 = vunpack.c.l.b16 %v350
        %v1153 = vunpack.c.l.b16 %v351
        %v1154 = vunpack.c.l.b16 %v352
        %v1155 = vunpack.c.l.b16 %v353
        %v1156 = vunpack.c.l.b16 %v354
        %v1157 = vunpack.c.l.b16 %v355
        %v1158 = vunpack.c.l.b16 %v356
        %v1159 = vunpack.c.l.b16 %v357
        %v1160 = vunpack.c.l.b16 %v358
        %v1161 = vunpack.c.l.b16 %v359
        %v1162 = vunpack.c.l.b16 %v360
        %v1163 = vunpack.c.l.b16 %v361
        %v1164 = vunpack.c.l.b16 %v362
        %v1165 = vunpack.c.l.b16 %v363
        %v1166 = vunpack.c.l.b16 %v364
        %v1167 = vunpack.c.l.b16 %v365
        %v1168 = vunpack.c.l.b16 %v366
        %v1169 = vunpack.c.l.b16 %v367
        %v1170 = vunpack.c.l.b16 %v368
        %v1171 = vunpack.c.l.b16 %v369
        %v1172 = vunpack.c.l.b16 %v370
        %v1173 = vunpack.c.l.b16 %v371
        %v1174 = vunpack.c.l.b16 %v372
        %v1175 = vunpack.c.l.b16 %v373
        %v1176 = vunpack.c.l.b16 %v374
        %v1177 = vunpack.c.l.b16 %v375
        %v1178 = vpack.c.b16 %v1147, %v1146
        %v1179 = vpack.c.b16 %v1149, %v1148
        %v1180 = vpack.c.b16 %v1151, %v1150
        %v1181 = vpack.c.b16 %v1153, %v1152
        %v1182 = vpack.c.b16 %v1155, %v1154
        %v1183 = vpack.c.b16 %v1157, %v1156
        %v1184 = vpack.c.b16 %v1159, %v1158
        %v1185 = vpack.c.b16 %v1161, %v1160
        %v1186 = vpack.c.b16 %v1163, %v1162
        %v1187 = vpack.c.b16 %v1165, %v1164
        %v1188 = vpack.c.b16 %v1167, %v1166
        %v1189 = vpack.c.b16 %v1169, %v1168
        %v1190 = vpack.c.b16 %v1171, %v1170
        %v1191 = vpack.c.b16 %v1173, %v1172
        %v1192 = vpack.c.b16 %v1175, %v1174
        %v1193 = vpack.c.b16 %v1177, %v1176
        %1210 = vmatprep.subr.bf16.mxu0 0
        %1211 = vmatpush1.bf16.msra.mxu0 %v1178
        %1212 = vmatprep.subr.bf16.mxu0 0
        %1213 = vmatpush1.bf16.msra.mxu0 %v1179
        %1214 = vmatprep.subr.bf16.mxu0 0
        %1215 = vmatpush1.bf16.msra.mxu0 %v1180
        %1216 = vmatprep.subr.bf16.mxu0 0
        %1217 = vmatpush1.bf16.msra.mxu0 %v1181
        %1218 = vmatprep.subr.bf16.mxu0 0
        %1219 = vmatpush1.bf16.msra.mxu0 %v1182
        %1220 = vmatprep.subr.bf16.mxu0 0
        %1221 = vmatpush1.bf16.msra.mxu0 %v1183
        %1222 = vmatprep.subr.bf16.mxu0 0
        %1223 = vmatpush1.bf16.msra.mxu0 %v1184
        %1224 = vmatprep.subr.bf16.mxu0 0
        %1225 = vmatpush1.bf16.msra.mxu0 %v1185
        %1226 = vmatprep.subr.bf16.mxu0 0
        %1227 = vmatpush1.bf16.msra.mxu0 %v1186
        %1228 = vmatprep.subr.bf16.mxu0 0
        %1229 = vmatpush1.bf16.msra.mxu0 %v1187
        %1230 = vmatprep.subr.bf16.mxu0 0
        %1231 = vmatpush1.bf16.msra.mxu0 %v1188
        %1232 = vmatprep.subr.bf16.mxu0 0
        %1233 = vmatpush1.bf16.msra.mxu0 %v1189
        %1234 = vmatprep.subr.bf16.mxu0 0
        %1235 = vmatpush1.bf16.msra.mxu0 %v1190
        %1236 = vmatprep.subr.bf16.mxu0 0
        %1237 = vmatpush1.bf16.msra.mxu0 %v1191
        %1238 = vmatprep.subr.bf16.mxu0 0
        %1239 = vmatpush1.bf16.msra.mxu0 %v1192
        %1240 = vmatprep.subr.bf16.mxu0 0
        %1241 = vmatpush1.bf16.msra.mxu0 %v1193
        %1242 = vmatprep.mubr.bf16.mxu0 %v1111
        %1243 = vmatmul.mubr.bf16.gmra.mrb[0].mxu0 %v1110
        %v1244 = vpop.f32.mrb[0].mxu0
        %v1245 = vadd.f32 %v331, %v1244
        %v1246 = vpop.f32.mrb[0].mxu0
        %v1247 = vpop.f32.mrb[0].mxu0
        %v1248 = vpop.f32.mrb[0].mxu0
        %1249 = vdwg.mxu0
        %v1250 = vsel %vm470, %v1245, 0.0
        %1251 = vadd.xlane.f32.xlu0 %v1250
        %v1252 = vpop.xlane.xlu0 %1251
        %v1253 = vrcp.pop 32.0
        %v1254 = vmul.f32 %v1252, %v1253
        %v1255 = vsub.f32 %v1245, %v1254
        %v1256 = vmul.f32 %v1255, %v1255
        %v1257 = vsel %vm470, %v1256, 0.0
        %1258 = vadd.xlane.f32.xlu0 %v1257
        %v1259 = vpop.xlane.xlu0 %1258
        %v1260 = vmul.f32 %v1259, %v1253
        %v1261 = vadd.f32 %v1260, 1e-05
        %v1262 = vrsqrt.pop %v1261
        %v1263 = vmul.f32 %v1255, %v1262
        %v1264 = vlaneseq
        %v1265 = vshrl.u32 %v1264, 7
        %v1266 = vsub.s32 0, %v1265
        %v1267 = vrot.slane %v448, %v1266
        %v1268 = vmul.f32 %v1263, %v1267
        %v1269 = vlaneseq
        %v1270 = vshrl.u32 %v1269, 7
        %v1271 = vsub.s32 1, %v1270
        %v1272 = vrot.slane %v448, %v1271
        %v1273 = vadd.f32 %v1268, %v1272
        %v1274 = vpack.c.bf16 %v1273, %v1273
        %v1283 = vunpack.c.l.b16 %v376
        %v1284 = vunpack.c.h.b16 %v376
        %v1285 = vunpack.c.l.b16 %v377
        %v1286 = vunpack.c.h.b16 %v377
        %v1287 = vunpack.c.l.b16 %v378
        %v1288 = vunpack.c.h.b16 %v378
        %v1289 = vunpack.c.l.b16 %v379
        %v1290 = vunpack.c.h.b16 %v379
        %v1291 = vunpack.c.l.b16 %v380
        %v1292 = vunpack.c.h.b16 %v380
        %v1293 = vunpack.c.l.b16 %v381
        %v1294 = vunpack.c.h.b16 %v381
        %v1295 = vunpack.c.l.b16 %v382
        %v1296 = vunpack.c.h.b16 %v382
        %v1297 = vunpack.c.l.b16 %v383
        %v1298 = vunpack.c.h.b16 %v383
        %v1299 = vpack.c.b16 %v1287, %v1283
        %v1300 = vpack.c.b16 %v1288, %v1284
        %v1301 = vpack.c.b16 %v1289, %v1285
        %v1302 = vpack.c.b16 %v1290, %v1286
        %v1303 = vpack.c.b16 %v1295, %v1291
        %v1304 = vpack.c.b16 %v1296, %v1292
        %v1305 = vpack.c.b16 %v1297, %v1293
        %v1306 = vpack.c.b16 %v1298, %v1294
        %v1316 = vsel %vm470, %v1274, 0
        %1318 = vmatprep.subr.bf16.mxu0 %v1300
        %1319 = vmatpush1.bf16.msra.mxu0 %v1299
        %1320 = vmatprep.subr.bf16.mxu0 %v1304
        %1321 = vmatpush1.bf16.msra.mxu0 %v1303
        %1322 = vmatprep.subr.bf16.mxu0 0
        %1323 = vmatpush1.bf16.msra.mxu0 0
        %1324 = vmatprep.subr.bf16.mxu0 0
        %1325 = vmatpush1.bf16.msra.mxu0 0
        %1326 = vmatprep.subr.bf16.mxu0 0
        %1327 = vmatpush1.bf16.msra.mxu0 0
        %1328 = vmatprep.subr.bf16.mxu0 0
        %1329 = vmatpush1.bf16.msra.mxu0 0
        %1330 = vmatprep.subr.bf16.mxu0 0
        %1331 = vmatpush1.bf16.msra.mxu0 0
        %1332 = vmatprep.subr.bf16.mxu0 0
        %1333 = vmatpush1.bf16.msra.mxu0 0
        %1334 = vmatprep.subr.bf16.mxu0 0
        %1335 = vmatpush1.bf16.msra.mxu0 0
        %1336 = vmatprep.subr.bf16.mxu0 0
        %1337 = vmatpush1.bf16.msra.mxu0 0
        %1338 = vmatprep.subr.bf16.mxu0 0
        %1339 = vmatpush1.bf16.msra.mxu0 0
        %1340 = vmatprep.subr.bf16.mxu0 0
        %1341 = vmatpush1.bf16.msra.mxu0 0
        %1342 = vmatprep.subr.bf16.mxu0 0
        %1343 = vmatpush1.bf16.msra.mxu0 0
        %1344 = vmatprep.subr.bf16.mxu0 0
        %1345 = vmatpush1.bf16.msra.mxu0 0
        %1346 = vmatprep.subr.bf16.mxu0 0
        %1347 = vmatpush1.bf16.msra.mxu0 0
        %1348 = vmatprep.subr.bf16.mxu0 0
        %1349 = vmatpush1.bf16.msra.mxu0 0
        %1350 = vmatprep.mubr.bf16.mxu0 0
        %1351 = vmatmul.mubr.bf16.gmra.mrb[0].mxu0 %v1316
        %v1352 = vpop.f32.mrb[0].mxu0
        %v1353 = vadd.f32 0.0, %v1352
        %v1354 = vpop.f32.mrb[0].mxu0
        %v1355 = vadd.f32 0.0, %v1354
        %v1356 = vpop.f32.mrb[0].mxu0
        %v1357 = vpop.f32.mrb[0].mxu0
        %1358 = vdwg.mxu0
        %1359 = vmatprep.subr.bf16.mxu0 %v1302
        %1360 = vmatpush1.bf16.msra.mxu0 %v1301
        %1361 = vmatprep.subr.bf16.mxu0 %v1306
        %1362 = vmatpush1.bf16.msra.mxu0 %v1305
        %1363 = vmatprep.subr.bf16.mxu0 0
        %1364 = vmatpush1.bf16.msra.mxu0 0
        %1365 = vmatprep.subr.bf16.mxu0 0
        %1366 = vmatpush1.bf16.msra.mxu0 0
        %1367 = vmatprep.subr.bf16.mxu0 0
        %1368 = vmatpush1.bf16.msra.mxu0 0
        %1369 = vmatprep.subr.bf16.mxu0 0
        %1370 = vmatpush1.bf16.msra.mxu0 0
        %1371 = vmatprep.subr.bf16.mxu0 0
        %1372 = vmatpush1.bf16.msra.mxu0 0
        %1373 = vmatprep.subr.bf16.mxu0 0
        %1374 = vmatpush1.bf16.msra.mxu0 0
        %1375 = vmatprep.subr.bf16.mxu0 0
        %1376 = vmatpush1.bf16.msra.mxu0 0
        %1377 = vmatprep.subr.bf16.mxu0 0
        %1378 = vmatpush1.bf16.msra.mxu0 0
        %1379 = vmatprep.subr.bf16.mxu0 0
        %1380 = vmatpush1.bf16.msra.mxu0 0
        %1381 = vmatprep.subr.bf16.mxu0 0
        %1382 = vmatpush1.bf16.msra.mxu0 0
        %1383 = vmatprep.subr.bf16.mxu0 0
        %1384 = vmatpush1.bf16.msra.mxu0 0
        %1385 = vmatprep.subr.bf16.mxu0 0
        %1386 = vmatpush1.bf16.msra.mxu0 0
        %1387 = vmatprep.subr.bf16.mxu0 0
        %1388 = vmatpush1.bf16.msra.mxu0 0
        %1389 = vmatprep.subr.bf16.mxu0 0
        %1390 = vmatpush1.bf16.msra.mxu0 0
        %1391 = vmatprep.mubr.bf16.mxu0 0
        %1392 = vmatmul.mubr.bf16.gmra.mrb[0].mxu0 %v1316
        %v1393 = vpop.f32.mrb[0].mxu0
        %v1394 = vadd.f32 0.0, %v1393
        %v1395 = vpop.f32.mrb[0].mxu0
        %v1396 = vadd.f32 0.0, %v1395
        %v1397 = vpop.f32.mrb[0].mxu0
        %v1398 = vpop.f32.mrb[0].mxu0
        %1399 = vdwg.mxu0
        %v1400 = vmax.f32 %v1353, 0.0
        %v1401 = vmax.f32 %v1355, 0.0
        %v1402 = vmax.f32 %v1394, 0.0
        %v1403 = vmax.f32 %v1396, 0.0
        %v1404 = vpack.c.bf16 %v1400, %v1400
        %v1405 = vpack.c.bf16 %v1401, %v1401
        %v1406 = vpack.c.bf16 %v1402, %v1402
        %v1407 = vpack.c.bf16 %v1403, %v1403
        %v1472 = vunpack.c.l.b16 %v384
        %v1473 = vunpack.c.l.b16 %v385
        %v1474 = vunpack.c.l.b16 %v386
        %v1475 = vunpack.c.l.b16 %v387
        %v1476 = vunpack.c.l.b16 %v388
        %v1477 = vunpack.c.l.b16 %v389
        %v1478 = vunpack.c.l.b16 %v390
        %v1479 = vunpack.c.l.b16 %v391
        %v1480 = vunpack.c.l.b16 %v392
        %v1481 = vunpack.c.l.b16 %v393
        %v1482 = vunpack.c.l.b16 %v394
        %v1483 = vunpack.c.l.b16 %v395
        %v1484 = vunpack.c.l.b16 %v396
        %v1485 = vunpack.c.l.b16 %v397
        %v1486 = vunpack.c.l.b16 %v398
        %v1487 = vunpack.c.l.b16 %v399
        %v1488 = vunpack.c.l.b16 %v400
        %v1489 = vunpack.c.l.b16 %v401
        %v1490 = vunpack.c.l.b16 %v402
        %v1491 = vunpack.c.l.b16 %v403
        %v1492 = vunpack.c.l.b16 %v404
        %v1493 = vunpack.c.l.b16 %v405
        %v1494 = vunpack.c.l.b16 %v406
        %v1495 = vunpack.c.l.b16 %v407
        %v1496 = vunpack.c.l.b16 %v408
        %v1497 = vunpack.c.l.b16 %v409
        %v1498 = vunpack.c.l.b16 %v410
        %v1499 = vunpack.c.l.b16 %v411
        %v1500 = vunpack.c.l.b16 %v412
        %v1501 = vunpack.c.l.b16 %v413
        %v1502 = vunpack.c.l.b16 %v414
        %v1503 = vunpack.c.l.b16 %v415
        %v1504 = vunpack.c.l.b16 %v416
        %v1505 = vunpack.c.l.b16 %v417
        %v1506 = vunpack.c.l.b16 %v418
        %v1507 = vunpack.c.l.b16 %v419
        %v1508 = vunpack.c.l.b16 %v420
        %v1509 = vunpack.c.l.b16 %v421
        %v1510 = vunpack.c.l.b16 %v422
        %v1511 = vunpack.c.l.b16 %v423
        %v1512 = vunpack.c.l.b16 %v424
        %v1513 = vunpack.c.l.b16 %v425
        %v1514 = vunpack.c.l.b16 %v426
        %v1515 = vunpack.c.l.b16 %v427
        %v1516 = vunpack.c.l.b16 %v428
        %v1517 = vunpack.c.l.b16 %v429
        %v1518 = vunpack.c.l.b16 %v430
        %v1519 = vunpack.c.l.b16 %v431
        %v1520 = vunpack.c.l.b16 %v432
        %v1521 = vunpack.c.l.b16 %v433
        %v1522 = vunpack.c.l.b16 %v434
        %v1523 = vunpack.c.l.b16 %v435
        %v1524 = vunpack.c.l.b16 %v436
        %v1525 = vunpack.c.l.b16 %v437
        %v1526 = vunpack.c.l.b16 %v438
        %v1527 = vunpack.c.l.b16 %v439
        %v1528 = vunpack.c.l.b16 %v440
        %v1529 = vunpack.c.l.b16 %v441
        %v1530 = vunpack.c.l.b16 %v442
        %v1531 = vunpack.c.l.b16 %v443
        %v1532 = vunpack.c.l.b16 %v444
        %v1533 = vunpack.c.l.b16 %v445
        %v1534 = vunpack.c.l.b16 %v446
        %v1535 = vunpack.c.l.b16 %v447
        %v1536 = vpack.c.b16 %v1473, %v1472
        %v1537 = vpack.c.b16 %v1475, %v1474
        %v1538 = vpack.c.b16 %v1477, %v1476
        %v1539 = vpack.c.b16 %v1479, %v1478
        %v1540 = vpack.c.b16 %v1481, %v1480
        %v1541 = vpack.c.b16 %v1483, %v1482
        %v1542 = vpack.c.b16 %v1485, %v1484
        %v1543 = vpack.c.b16 %v1487, %v1486
        %v1544 = vpack.c.b16 %v1489, %v1488
        %v1545 = vpack.c.b16 %v1491, %v1490
        %v1546 = vpack.c.b16 %v1493, %v1492
        %v1547 = vpack.c.b16 %v1495, %v1494
        %v1548 = vpack.c.b16 %v1497, %v1496
        %v1549 = vpack.c.b16 %v1499, %v1498
        %v1550 = vpack.c.b16 %v1501, %v1500
        %v1551 = vpack.c.b16 %v1503, %v1502
        %v1552 = vpack.c.b16 %v1505, %v1504
        %v1553 = vpack.c.b16 %v1507, %v1506
        %v1554 = vpack.c.b16 %v1509, %v1508
        %v1555 = vpack.c.b16 %v1511, %v1510
        %v1556 = vpack.c.b16 %v1513, %v1512
        %v1557 = vpack.c.b16 %v1515, %v1514
        %v1558 = vpack.c.b16 %v1517, %v1516
        %v1559 = vpack.c.b16 %v1519, %v1518
        %v1560 = vpack.c.b16 %v1521, %v1520
        %v1561 = vpack.c.b16 %v1523, %v1522
        %v1562 = vpack.c.b16 %v1525, %v1524
        %v1563 = vpack.c.b16 %v1527, %v1526
        %v1564 = vpack.c.b16 %v1529, %v1528
        %v1565 = vpack.c.b16 %v1531, %v1530
        %v1566 = vpack.c.b16 %v1533, %v1532
        %v1567 = vpack.c.b16 %v1535, %v1534
        %1600 = vmatprep.subr.bf16.mxu0 0
        %1601 = vmatpush1.bf16.msra.mxu0 %v1536
        %1602 = vmatprep.subr.bf16.mxu0 0
        %1603 = vmatpush1.bf16.msra.mxu0 %v1537
        %1604 = vmatprep.subr.bf16.mxu0 0
        %1605 = vmatpush1.bf16.msra.mxu0 %v1538
        %1606 = vmatprep.subr.bf16.mxu0 0
        %1607 = vmatpush1.bf16.msra.mxu0 %v1539
        %1608 = vmatprep.subr.bf16.mxu0 0
        %1609 = vmatpush1.bf16.msra.mxu0 %v1540
        %1610 = vmatprep.subr.bf16.mxu0 0
        %1611 = vmatpush1.bf16.msra.mxu0 %v1541
        %1612 = vmatprep.subr.bf16.mxu0 0
        %1613 = vmatpush1.bf16.msra.mxu0 %v1542
        %1614 = vmatprep.subr.bf16.mxu0 0
        %1615 = vmatpush1.bf16.msra.mxu0 %v1543
        %1616 = vmatprep.subr.bf16.mxu0 0
        %1617 = vmatpush1.bf16.msra.mxu0 %v1544
        %1618 = vmatprep.subr.bf16.mxu0 0
        %1619 = vmatpush1.bf16.msra.mxu0 %v1545
        %1620 = vmatprep.subr.bf16.mxu0 0
        %1621 = vmatpush1.bf16.msra.mxu0 %v1546
        %1622 = vmatprep.subr.bf16.mxu0 0
        %1623 = vmatpush1.bf16.msra.mxu0 %v1547
        %1624 = vmatprep.subr.bf16.mxu0 0
        %1625 = vmatpush1.bf16.msra.mxu0 %v1548
        %1626 = vmatprep.subr.bf16.mxu0 0
        %1627 = vmatpush1.bf16.msra.mxu0 %v1549
        %1628 = vmatprep.subr.bf16.mxu0 0
        %1629 = vmatpush1.bf16.msra.mxu0 %v1550
        %1630 = vmatprep.subr.bf16.mxu0 0
        %1631 = vmatpush1.bf16.msra.mxu0 %v1551
        %1632 = vmatprep.mubr.bf16.mxu0 %v1405
        %1633 = vmatmul.mubr.bf16.gmra.mrb[0].mxu0 %v1404
        %v1634 = vpop.f32.mrb[0].mxu0
        %v1635 = vadd.f32 %v1273, %v1634
        %v1636 = vpop.f32.mrb[0].mxu0
        %v1637 = vpop.f32.mrb[0].mxu0
        %v1638 = vpop.f32.mrb[0].mxu0
        %1639 = vdwg.mxu0
        %1640 = vmatprep.subr.bf16.mxu0 0
        %1641 = vmatpush1.bf16.msra.mxu0 %v1552
        %1642 = vmatprep.subr.bf16.mxu0 0
        %1643 = vmatpush1.bf16.msra.mxu0 %v1553
        %1644 = vmatprep.subr.bf16.mxu0 0
        %1645 = vmatpush1.bf16.msra.mxu0 %v1554
        %1646 = vmatprep.subr.bf16.mxu0 0
        %1647 = vmatpush1.bf16.msra.mxu0 %v1555
        %1648 = vmatprep.subr.bf16.mxu0 0
        %1649 = vmatpush1.bf16.msra.mxu0 %v1556
        %1650 = vmatprep.subr.bf16.mxu0 0
        %1651 = vmatpush1.bf16.msra.mxu0 %v1557
        %1652 = vmatprep.subr.bf16.mxu0 0
        %1653 = vmatpush1.bf16.msra.mxu0 %v1558
        %1654 = vmatprep.subr.bf16.mxu0 0
        %1655 = vmatpush1.bf16.msra.mxu0 %v1559
        %1656 = vmatprep.subr.bf16.mxu0 0
        %1657 = vmatpush1.bf16.msra.mxu0 %v1560
        %1658 = vmatprep.subr.bf16.mxu0 0
        %1659 = vmatpush1.bf16.msra.mxu0 %v1561
        %1660 = vmatprep.subr.bf16.mxu0 0
        %1661 = vmatpush1.bf16.msra.mxu0 %v1562
        %1662 = vmatprep.subr.bf16.mxu0 0
        %1663 = vmatpush1.bf16.msra.mxu0 %v1563
        %1664 = vmatprep.subr.bf16.mxu0 0
        %1665 = vmatpush1.bf16.msra.mxu0 %v1564
        %1666 = vmatprep.subr.bf16.mxu0 0
        %1667 = vmatpush1.bf16.msra.mxu0 %v1565
        %1668 = vmatprep.subr.bf16.mxu0 0
        %1669 = vmatpush1.bf16.msra.mxu0 %v1566
        %1670 = vmatprep.subr.bf16.mxu0 0
        %1671 = vmatpush1.bf16.msra.mxu0 %v1567
        %1672 = vmatprep.mubr.bf16.mxu0 %v1407
        %1673 = vmatmul.mubr.bf16.gmra.mrb[0].mxu0 %v1406
        %v1674 = vpop.f32.mrb[0].mxu0
        %v1675 = vadd.f32 %v1635, %v1674
        %v1676 = vpop.f32.mrb[0].mxu0
        %v1677 = vpop.f32.mrb[0].mxu0
        %v1678 = vpop.f32.mrb[0].mxu0
        %1679 = vdwg.mxu0
        %v1680 = vsel %vm470, %v1675, 0.0
        %1681 = vadd.xlane.f32.xlu0 %v1680
        %v1682 = vpop.xlane.xlu0 %1681
        %v1683 = vmul.f32 %v1682, %v1253
        %v1684 = vsub.f32 %v1675, %v1683
        %v1685 = vmul.f32 %v1684, %v1684
        %v1686 = vsel %vm470, %v1685, 0.0
        %1687 = vadd.xlane.f32.xlu0 %v1686
        %v1688 = vpop.xlane.xlu0 %1687
        %v1689 = vmul.f32 %v1688, %v1253
        %v1690 = vadd.f32 %v1689, 1e-05
        %v1691 = vrsqrt.pop %v1690
        %v1692 = vmul.f32 %v1684, %v1691
        %v1693 = vlaneseq
        %v1694 = vshrl.u32 %v1693, 7
        %v1695 = vsub.s32 2, %v1694
        %v1696 = vrot.slane %v448, %v1695
        %v1697 = vmul.f32 %v1692, %v1696
        %v1698 = vlaneseq
        %v1699 = vshrl.u32 %v1698, 7
        %v1700 = vsub.s32 3, %v1699
        %v1701 = vrot.slane %v448, %v1700
        %v1702 = vadd.f32 %v1697, %v1701
        %s1703 = scalar_lea.vmem %s2, 32
        %v1704 = vld [vmem:[%s1703] sm:$0xff]
        %v1705 = vld [vmem:[%s1703 + $0x8] sm:$0xff]
        %v1706 = vld [vmem:[%s1703 + $0x10] sm:$0xff]
        %v1707 = vld [vmem:[%s1703 + $0x18] sm:$0xff]
        %s1708 = scalar_lea.vmem %s3, 32
        %v1709 = vld [vmem:[%s1708] sm:$0xff]
        %v1710 = vld [vmem:[%s1708 + $0x8] sm:$0xff]
        %v1711 = vld [vmem:[%s1708 + $0x10] sm:$0xff]
        %v1712 = vld [vmem:[%s1708 + $0x18] sm:$0xff]
        %s1713 = scalar_lea.vmem %s4, 32
        %v1714 = vld [vmem:[%s1713] sm:$0xff]
        %v1715 = vld [vmem:[%s1713 + $0x8] sm:$0xff]
        %v1716 = vld [vmem:[%s1713 + $0x10] sm:$0xff]
        %v1717 = vld [vmem:[%s1713 + $0x18] sm:$0xff]
        %s1718 = scalar_lea.vmem %s5, 128
        %v1719 = vld [vmem:[%s1718] sm:$0xf]
        %v1720 = vld [vmem:[%s1718 + $0x4] sm:$0xf]
        %v1721 = vld [vmem:[%s1718 + $0x8] sm:$0xf]
        %v1722 = vld [vmem:[%s1718 + $0xc] sm:$0xf]
        %v1723 = vld [vmem:[%s1718 + $0x10] sm:$0xf]
        %v1724 = vld [vmem:[%s1718 + $0x14] sm:$0xf]
        %v1725 = vld [vmem:[%s1718 + $0x18] sm:$0xf]
        %v1726 = vld [vmem:[%s1718 + $0x1c] sm:$0xf]
        %v1727 = vld [vmem:[%s1718 + $0x20] sm:$0xf]
        %v1728 = vld [vmem:[%s1718 + $0x24] sm:$0xf]
        %v1729 = vld [vmem:[%s1718 + $0x28] sm:$0xf]
        %v1730 = vld [vmem:[%s1718 + $0x2c] sm:$0xf]
        %v1731 = vld [vmem:[%s1718 + $0x30] sm:$0xf]
        %v1732 = vld [vmem:[%s1718 + $0x34] sm:$0xf]
        %v1733 = vld [vmem:[%s1718 + $0x38] sm:$0xf]
        %v1734 = vld [vmem:[%s1718 + $0x3c] sm:$0xf]
        %v1735 = vld [vmem:[%s1718 + $0x40] sm:$0xf]
        %v1736 = vld [vmem:[%s1718 + $0x44] sm:$0xf]
        %v1737 = vld [vmem:[%s1718 + $0x48] sm:$0xf]
        %v1738 = vld [vmem:[%s1718 + $0x4c] sm:$0xf]
        %v1739 = vld [vmem:[%s1718 + $0x50] sm:$0xf]
        %v1740 = vld [vmem:[%s1718 + $0x54] sm:$0xf]
        %v1741 = vld [vmem:[%s1718 + $0x58] sm:$0xf]
        %v1742 = vld [vmem:[%s1718 + $0x5c] sm:$0xf]
        %v1743 = vld [vmem:[%s1718 + $0x60] sm:$0xf]
        %v1744 = vld [vmem:[%s1718 + $0x64] sm:$0xf]
        %v1745 = vld [vmem:[%s1718 + $0x68] sm:$0xf]
        %v1746 = vld [vmem:[%s1718 + $0x6c] sm:$0xf]
        %v1747 = vld [vmem:[%s1718 + $0x70] sm:$0xf]
        %v1748 = vld [vmem:[%s1718 + $0x74] sm:$0xf]
        %v1749 = vld [vmem:[%s1718 + $0x78] sm:$0xf]
        %v1750 = vld [vmem:[%s1718 + $0x7c] sm:$0xf]
        %s1751 = scalar_lea.vmem %s6, 64
        %v1752 = vld [vmem:[%s1751] sm:$0xff]
        %v1753 = vld [vmem:[%s1751 + $0x8] sm:$0xff]
        %v1754 = vld [vmem:[%s1751 + $0x10] sm:$0xff]
        %v1755 = vld [vmem:[%s1751 + $0x18] sm:$0xff]
        %v1756 = vld [vmem:[%s1751 + $0x20] sm:$0xff]
        %v1757 = vld [vmem:[%s1751 + $0x28] sm:$0xff]
        %v1758 = vld [vmem:[%s1751 + $0x30] sm:$0xff]
        %v1759 = vld [vmem:[%s1751 + $0x38] sm:$0xff]
        %s1760 = scalar_lea.vmem %s7, 256
        %v1761 = vld [vmem:[%s1760] sm:$0xf]
        %v1762 = vld [vmem:[%s1760 + $0x4] sm:$0xf]
        %v1763 = vld [vmem:[%s1760 + $0x8] sm:$0xf]
        %v1764 = vld [vmem:[%s1760 + $0xc] sm:$0xf]
        %v1765 = vld [vmem:[%s1760 + $0x10] sm:$0xf]
        %v1766 = vld [vmem:[%s1760 + $0x14] sm:$0xf]
        %v1767 = vld [vmem:[%s1760 + $0x18] sm:$0xf]
        %v1768 = vld [vmem:[%s1760 + $0x1c] sm:$0xf]
        %v1769 = vld [vmem:[%s1760 + $0x20] sm:$0xf]
        %v1770 = vld [vmem:[%s1760 + $0x24] sm:$0xf]
        %v1771 = vld [vmem:[%s1760 + $0x28] sm:$0xf]
        %v1772 = vld [vmem:[%s1760 + $0x2c] sm:$0xf]
        %v1773 = vld [vmem:[%s1760 + $0x30] sm:$0xf]
        %v1774 = vld [vmem:[%s1760 + $0x34] sm:$0xf]
        %v1775 = vld [vmem:[%s1760 + $0x38] sm:$0xf]
        %v1776 = vld [vmem:[%s1760 + $0x3c] sm:$0xf]
        %v1777 = vld [vmem:[%s1760 + $0x40] sm:$0xf]
        %v1778 = vld [vmem:[%s1760 + $0x44] sm:$0xf]
        %v1779 = vld [vmem:[%s1760 + $0x48] sm:$0xf]
        %v1780 = vld [vmem:[%s1760 + $0x4c] sm:$0xf]
        %v1781 = vld [vmem:[%s1760 + $0x50] sm:$0xf]
        %v1782 = vld [vmem:[%s1760 + $0x54] sm:$0xf]
        %v1783 = vld [vmem:[%s1760 + $0x58] sm:$0xf]
        %v1784 = vld [vmem:[%s1760 + $0x5c] sm:$0xf]
        %v1785 = vld [vmem:[%s1760 + $0x60] sm:$0xf]
        %v1786 = vld [vmem:[%s1760 + $0x64] sm:$0xf]
        %v1787 = vld [vmem:[%s1760 + $0x68] sm:$0xf]
        %v1788 = vld [vmem:[%s1760 + $0x6c] sm:$0xf]
        %v1789 = vld [vmem:[%s1760 + $0x70] sm:$0xf]
        %v1790 = vld [vmem:[%s1760 + $0x74] sm:$0xf]
        %v1791 = vld [vmem:[%s1760 + $0x78] sm:$0xf]
        %v1792 = vld [vmem:[%s1760 + $0x7c] sm:$0xf]
        %v1793 = vld [vmem:[%s1760 + $0x80] sm:$0xf]
        %v1794 = vld [vmem:[%s1760 + $0x84] sm:$0xf]
        %v1795 = vld [vmem:[%s1760 + $0x88] sm:$0xf]
        %v1796 = vld [vmem:[%s1760 + $0x8c] sm:$0xf]
        %v1797 = vld [vmem:[%s1760 + $0x90] sm:$0xf]
        %v1798 = vld [vmem:[%s1760 + $0x94] sm:$0xf]
        %v1799 = vld [vmem:[%s1760 + $0x98] sm:$0xf]
        %v1800 = vld [vmem:[%s1760 + $0x9c] sm:$0xf]
        %v1801 = vld [vmem:[%s1760 + $0xa0] sm:$0xf]
        %v1802 = vld [vmem:[%s1760 + $0xa4] sm:$0xf]
        %v1803 = vld [vmem:[%s1760 + $0xa8] sm:$0xf]
        %v1804 = vld [vmem:[%s1760 + $0xac] sm:$0xf]
        %v1805 = vld [vmem:[%s1760 + $0xb0] sm:$0xf]
        %v1806 = vld [vmem:[%s1760 + $0xb4] sm:$0xf]
        %v1807 = vld [vmem:[%s1760 + $0xb8] sm:$0xf]
        %v1808 = vld [vmem:[%s1760 + $0xbc] sm:$0xf]
        %v1809 = vld [vmem:[%s1760 + $0xc0] sm:$0xf]
        %v1810 = vld [vmem:[%s1760 + $0xc4] sm:$0xf]
        %v1811 = vld [vmem:[%s1760 + $0xc8] sm:$0xf]
        %v1812 = vld [vmem:[%s1760 + $0xcc] sm:$0xf]
        %v1813 = vld [vmem:[%s1760 + $0xd0] sm:$0xf]
        %v1814 = vld [vmem:[%s1760 + $0xd4] sm:$0xf]
        %v1815 = vld [vmem:[%s1760 + $0xd8] sm:$0xf]
        %v1816 = vld [vmem:[%s1760 + $0xdc] sm:$0xf]
        %v1817 = vld [vmem:[%s1760 + $0xe0] sm:$0xf]
        %v1818 = vld [vmem:[%s1760 + $0xe4] sm:$0xf]
        %v1819 = vld [vmem:[%s1760 + $0xe8] sm:$0xf]
        %v1820 = vld [vmem:[%s1760 + $0xec] sm:$0xf]
        %v1821 = vld [vmem:[%s1760 + $0xf0] sm:$0xf]
        %v1822 = vld [vmem:[%s1760 + $0xf4] sm:$0xf]
        %v1823 = vld [vmem:[%s1760 + $0xf8] sm:$0xf]
        %v1824 = vld [vmem:[%s1760 + $0xfc] sm:$0xf]
        %s1825 = scalar_lea.vmem %s8, 4
        %v1826 = vld [vmem:[%s1825] sm:$0xf]
        %v1827 = vpack.c.bf16 %v1702, %v1702
        %v1832 = vunpack.c.l.b16 %v1704
        %v1833 = vunpack.c.h.b16 %v1704
        %v1834 = vunpack.c.l.b16 %v1705
        %v1835 = vunpack.c.h.b16 %v1705
        %v1836 = vunpack.c.l.b16 %v1706
        %v1837 = vunpack.c.h.b16 %v1706
        %v1838 = vunpack.c.l.b16 %v1707
        %v1839 = vunpack.c.h.b16 %v1707
        %v1840 = vpack.c.b16 %v1834, %v1832
        %v1841 = vpack.c.b16 %v1835, %v1833
        %v1842 = vpack.c.b16 %v1838, %v1836
        %v1843 = vpack.c.b16 %v1839, %v1837
        %v1849 = vsel %vm470, %v1827, 0
        %1851 = vmatprep.subr.bf16.mxu0 %v1841
        %1852 = vmatpush1.bf16.msra.mxu0 %v1840
        %1853 = vmatprep.subr.bf16.mxu0 %v1843
        %1854 = vmatpush1.bf16.msra.mxu0 %v1842
        %1855 = vmatprep.subr.bf16.mxu0 0
        %1856 = vmatpush1.bf16.msra.mxu0 0
        %1857 = vmatprep.subr.bf16.mxu0 0
        %1858 = vmatpush1.bf16.msra.mxu0 0
        %1859 = vmatprep.subr.bf16.mxu0 0
        %1860 = vmatpush1.bf16.msra.mxu0 0
        %1861 = vmatprep.subr.bf16.mxu0 0
        %1862 = vmatpush1.bf16.msra.mxu0 0
        %1863 = vmatprep.subr.bf16.mxu0 0
        %1864 = vmatpush1.bf16.msra.mxu0 0
        %1865 = vmatprep.subr.bf16.mxu0 0
        %1866 = vmatpush1.bf16.msra.mxu0 0
        %1867 = vmatprep.subr.bf16.mxu0 0
        %1868 = vmatpush1.bf16.msra.mxu0 0
        %1869 = vmatprep.subr.bf16.mxu0 0
        %1870 = vmatpush1.bf16.msra.mxu0 0
        %1871 = vmatprep.subr.bf16.mxu0 0
        %1872 = vmatpush1.bf16.msra.mxu0 0
        %1873 = vmatprep.subr.bf16.mxu0 0
        %1874 = vmatpush1.bf16.msra.mxu0 0
        %1875 = vmatprep.subr.bf16.mxu0 0
        %1876 = vmatpush1.bf16.msra.mxu0 0
        %1877 = vmatprep.subr.bf16.mxu0 0
        %1878 = vmatpush1.bf16.msra.mxu0 0
        %1879 = vmatprep.subr.bf16.mxu0 0
        %1880 = vmatpush1.bf16.msra.mxu0 0
        %1881 = vmatprep.subr.bf16.mxu0 0
        %1882 = vmatpush1.bf16.msra.mxu0 0
        %1883 = vmatprep.mubr.bf16.mxu0 0
        %1884 = vmatmul.mubr.bf16.gmra.mrb[0].mxu0 %v1849
        %v1885 = vpop.f32.mrb[0].mxu0
        %v1886 = vadd.f32 0.0, %v1885
        %v1887 = vpop.f32.mrb[0].mxu0
        %v1888 = vadd.f32 0.0, %v1887
        %v1889 = vpop.f32.mrb[0].mxu0
        %v1890 = vpop.f32.mrb[0].mxu0
        %1891 = vdwg.mxu0
        %v1896 = vunpack.c.l.b16 %v1709
        %v1897 = vunpack.c.h.b16 %v1709
        %v1898 = vunpack.c.l.b16 %v1710
        %v1899 = vunpack.c.h.b16 %v1710
        %v1900 = vunpack.c.l.b16 %v1711
        %v1901 = vunpack.c.h.b16 %v1711
        %v1902 = vunpack.c.l.b16 %v1712
        %v1903 = vunpack.c.h.b16 %v1712
        %v1904 = vpack.c.b16 %v1898, %v1896
        %v1905 = vpack.c.b16 %v1899, %v1897
        %v1906 = vpack.c.b16 %v1902, %v1900
        %v1907 = vpack.c.b16 %v1903, %v1901
        %1912 = vmatprep.subr.bf16.mxu0 %v1905
        %1913 = vmatpush1.bf16.msra.mxu0 %v1904
        %1914 = vmatprep.subr.bf16.mxu0 %v1907
        %1915 = vmatpush1.bf16.msra.mxu0 %v1906
        %1916 = vmatprep.subr.bf16.mxu0 0
        %1917 = vmatpush1.bf16.msra.mxu0 0
        %1918 = vmatprep.subr.bf16.mxu0 0
        %1919 = vmatpush1.bf16.msra.mxu0 0
        %1920 = vmatprep.subr.bf16.mxu0 0
        %1921 = vmatpush1.bf16.msra.mxu0 0
        %1922 = vmatprep.subr.bf16.mxu0 0
        %1923 = vmatpush1.bf16.msra.mxu0 0
        %1924 = vmatprep.subr.bf16.mxu0 0
        %1925 = vmatpush1.bf16.msra.mxu0 0
        %1926 = vmatprep.subr.bf16.mxu0 0
        %1927 = vmatpush1.bf16.msra.mxu0 0
        %1928 = vmatprep.subr.bf16.mxu0 0
        %1929 = vmatpush1.bf16.msra.mxu0 0
        %1930 = vmatprep.subr.bf16.mxu0 0
        %1931 = vmatpush1.bf16.msra.mxu0 0
        %1932 = vmatprep.subr.bf16.mxu0 0
        %1933 = vmatpush1.bf16.msra.mxu0 0
        %1934 = vmatprep.subr.bf16.mxu0 0
        %1935 = vmatpush1.bf16.msra.mxu0 0
        %1936 = vmatprep.subr.bf16.mxu0 0
        %1937 = vmatpush1.bf16.msra.mxu0 0
        %1938 = vmatprep.subr.bf16.mxu0 0
        %1939 = vmatpush1.bf16.msra.mxu0 0
        %1940 = vmatprep.subr.bf16.mxu0 0
        %1941 = vmatpush1.bf16.msra.mxu0 0
        %1942 = vmatprep.subr.bf16.mxu0 0
        %1943 = vmatpush1.bf16.msra.mxu0 0
        %1944 = vmatprep.mubr.bf16.mxu0 0
        %1945 = vmatmul.mubr.bf16.gmra.mrb[0].mxu0 %v1849
        %v1946 = vpop.f32.mrb[0].mxu0
        %v1947 = vadd.f32 0.0, %v1946
        %v1948 = vpop.f32.mrb[0].mxu0
        %v1949 = vadd.f32 0.0, %v1948
        %v1950 = vpop.f32.mrb[0].mxu0
        %v1951 = vpop.f32.mrb[0].mxu0
        %1952 = vdwg.mxu0
        %v1957 = vunpack.c.l.b16 %v1714
        %v1958 = vunpack.c.h.b16 %v1714
        %v1959 = vunpack.c.l.b16 %v1715
        %v1960 = vunpack.c.h.b16 %v1715
        %v1961 = vunpack.c.l.b16 %v1716
        %v1962 = vunpack.c.h.b16 %v1716
        %v1963 = vunpack.c.l.b16 %v1717
        %v1964 = vunpack.c.h.b16 %v1717
        %v1965 = vpack.c.b16 %v1959, %v1957
        %v1966 = vpack.c.b16 %v1960, %v1958
        %v1967 = vpack.c.b16 %v1963, %v1961
        %v1968 = vpack.c.b16 %v1964, %v1962
        %1973 = vmatprep.subr.bf16.mxu0 %v1966
        %1974 = vmatpush1.bf16.msra.mxu0 %v1965
        %1975 = vmatprep.subr.bf16.mxu0 %v1968
        %1976 = vmatpush1.bf16.msra.mxu0 %v1967
        %1977 = vmatprep.subr.bf16.mxu0 0
        %1978 = vmatpush1.bf16.msra.mxu0 0
        %1979 = vmatprep.subr.bf16.mxu0 0
        %1980 = vmatpush1.bf16.msra.mxu0 0
        %1981 = vmatprep.subr.bf16.mxu0 0
        %1982 = vmatpush1.bf16.msra.mxu0 0
        %1983 = vmatprep.subr.bf16.mxu0 0
        %1984 = vmatpush1.bf16.msra.mxu0 0
        %1985 = vmatprep.subr.bf16.mxu0 0
        %1986 = vmatpush1.bf16.msra.mxu0 0
        %1987 = vmatprep.subr.bf16.mxu0 0
        %1988 = vmatpush1.bf16.msra.mxu0 0
        %1989 = vmatprep.subr.bf16.mxu0 0
        %1990 = vmatpush1.bf16.msra.mxu0 0
        %1991 = vmatprep.subr.bf16.mxu0 0
        %1992 = vmatpush1.bf16.msra.mxu0 0
        %1993 = vmatprep.subr.bf16.mxu0 0
        %1994 = vmatpush1.bf16.msra.mxu0 0
        %1995 = vmatprep.subr.bf16.mxu0 0
        %1996 = vmatpush1.bf16.msra.mxu0 0
        %1997 = vmatprep.subr.bf16.mxu0 0
        %1998 = vmatpush1.bf16.msra.mxu0 0
        %1999 = vmatprep.subr.bf16.mxu0 0
        %2000 = vmatpush1.bf16.msra.mxu0 0
        %2001 = vmatprep.subr.bf16.mxu0 0
        %2002 = vmatpush1.bf16.msra.mxu0 0
        %2003 = vmatprep.subr.bf16.mxu0 0
        %2004 = vmatpush1.bf16.msra.mxu0 0
        %2005 = vmatprep.mubr.bf16.mxu0 0
        %2006 = vmatmul.mubr.bf16.gmra.mrb[0].mxu0 %v1849
        %v2007 = vpop.f32.mrb[0].mxu0
        %v2008 = vadd.f32 0.0, %v2007
        %v2009 = vpop.f32.mrb[0].mxu0
        %v2010 = vadd.f32 0.0, %v2009
        %v2011 = vpop.f32.mrb[0].mxu0
        %v2012 = vpop.f32.mrb[0].mxu0
        %2013 = vdwg.mxu0
        %v2014 = vpack.c.bf16 %v1886, %v1886
        %v2015 = vpack.c.bf16 %v1888, %v1888
        %v2016 = vpack.c.bf16 %v1947, %v1947
        %v2017 = vpack.c.bf16 %v1949, %v1949
        %v2018 = vpack.c.bf16 %v2008, %v2008
        %v2019 = vpack.c.bf16 %v2010, %v2010
        %v2021 = vsel %vm643, %v2014, 0
        %v2024 = vsel %vm643, %v2016, 0
        %2026 = vmatprep.subr.bf16.mxu0 0
        %2027 = vmatpush1.bf16.xpose.msra.mxu0 %v2024
        %2028 = vmatprep.subr.bf16.mxu0 0
        %2029 = vmatpush1.bf16.xpose.msra.mxu0 0
        %2030 = vmatprep.subr.bf16.mxu0 0
        %2031 = vmatpush1.bf16.xpose.msra.mxu0 0
        %2032 = vmatprep.subr.bf16.mxu0 0
        %2033 = vmatpush1.bf16.xpose.msra.mxu0 0
        %2034 = vmatprep.subr.bf16.mxu0 0
        %2035 = vmatpush1.bf16.xpose.msra.mxu0 0
        %2036 = vmatprep.subr.bf16.mxu0 0
        %2037 = vmatpush1.bf16.xpose.msra.mxu0 0
        %2038 = vmatprep.subr.bf16.mxu0 0
        %2039 = vmatpush1.bf16.xpose.msra.mxu0 0
        %2040 = vmatprep.subr.bf16.mxu0 0
        %2041 = vmatpush1.bf16.xpose.msra.mxu0 0
        %2042 = vmatprep.subr.bf16.mxu0 0
        %2043 = vmatpush1.bf16.xpose.msra.mxu0 0
        %2044 = vmatprep.subr.bf16.mxu0 0
        %2045 = vmatpush1.bf16.xpose.msra.mxu0 0
        %2046 = vmatprep.subr.bf16.mxu0 0
        %2047 = vmatpush1.bf16.xpose.msra.mxu0 0
        %2048 = vmatprep.subr.bf16.mxu0 0
        %2049 = vmatpush1.bf16.xpose.msra.mxu0 0
        %2050 = vmatprep.subr.bf16.mxu0 0
        %2051 = vmatpush1.bf16.xpose.msra.mxu0 0
        %2052 = vmatprep.subr.bf16.mxu0 0
        %2053 = vmatpush1.bf16.xpose.msra.mxu0 0
        %2054 = vmatprep.subr.bf16.mxu0 0
        %2055 = vmatpush1.bf16.xpose.msra.mxu0 0
        %2056 = vmatprep.subr.bf16.mxu0 0
        %2057 = vmatpush1.bf16.xpose.msra.mxu0 0
        %2058 = vmatprep.mubr.bf16.mxu0 0
        %2059 = vmatmul.mubr.bf16.gmra.mrb[0].mxu0 %v2021
        %v2060 = vpop.f32.mrb[0].mxu0
        %v2061 = vadd.f32 0.0, %v2060
        %v2062 = vpop.f32.mrb[0].mxu0
        %v2063 = vpop.f32.mrb[0].mxu0
        %v2064 = vpop.f32.mrb[0].mxu0
        %2065 = vdwg.mxu0
        %v2066 = vmul.f32 %v2061, 0.125
        %v2067 = vsel %vm691, %v2066, -inf
        %2068 = vmax.xlane.f32.xlu0 %v2067
        %v2069 = vpop.xlane.xlu0 %2068
        %v2070 = vsub.f32 %v2066, %v2069
        %v2071 = vmul.f32 %v2070, 1.442695
        %v2072 = vpow.pop %v2071
        %v2073 = vsel %vm691, %v2072, 0.0
        %2074 = vadd.xlane.f32.xlu0 %v2073
        %v2075 = vpop.xlane.xlu0 %2074
        %v2076 = vrcp.pop %v2075
        %v2077 = vmul.f32 %v2072, %v2076
        %v2078 = vpack.c.bf16 %v2077, %v2077
        %v2080 = vsel %vm691, %v2078, 0
        %v2083 = vsel %vm707, %v2018, 0
        %2085 = vmatprep.subr.bf16.mxu0 0
        %2086 = vmatpush1.bf16.msra.mxu0 %v2083
        %2087 = vmatprep.subr.bf16.mxu0 0
        %2088 = vmatpush1.bf16.msra.mxu0 0
        %2089 = vmatprep.subr.bf16.mxu0 0
        %2090 = vmatpush1.bf16.msra.mxu0 0
        %2091 = vmatprep.subr.bf16.mxu0 0
        %2092 = vmatpush1.bf16.msra.mxu0 0
        %2093 = vmatprep.subr.bf16.mxu0 0
        %2094 = vmatpush1.bf16.msra.mxu0 0
        %2095 = vmatprep.subr.bf16.mxu0 0
        %2096 = vmatpush1.bf16.msra.mxu0 0
        %2097 = vmatprep.subr.bf16.mxu0 0
        %2098 = vmatpush1.bf16.msra.mxu0 0
        %2099 = vmatprep.subr.bf16.mxu0 0
        %2100 = vmatpush1.bf16.msra.mxu0 0
        %2101 = vmatprep.subr.bf16.mxu0 0
        %2102 = vmatpush1.bf16.msra.mxu0 0
        %2103 = vmatprep.subr.bf16.mxu0 0
        %2104 = vmatpush1.bf16.msra.mxu0 0
        %2105 = vmatprep.subr.bf16.mxu0 0
        %2106 = vmatpush1.bf16.msra.mxu0 0
        %2107 = vmatprep.subr.bf16.mxu0 0
        %2108 = vmatpush1.bf16.msra.mxu0 0
        %2109 = vmatprep.subr.bf16.mxu0 0
        %2110 = vmatpush1.bf16.msra.mxu0 0
        %2111 = vmatprep.subr.bf16.mxu0 0
        %2112 = vmatpush1.bf16.msra.mxu0 0
        %2113 = vmatprep.subr.bf16.mxu0 0
        %2114 = vmatpush1.bf16.msra.mxu0 0
        %2115 = vmatprep.subr.bf16.mxu0 0
        %2116 = vmatpush1.bf16.msra.mxu0 0
        %2117 = vmatprep.mubr.bf16.mxu0 0
        %2118 = vmatmul.mubr.bf16.gmra.mrb[0].mxu0 %v2080
        %v2119 = vpop.f32.mrb[0].mxu0
        %v2120 = vadd.f32 0.0, %v2119
        %v2121 = vpop.f32.mrb[0].mxu0
        %v2122 = vpop.f32.mrb[0].mxu0
        %v2123 = vpop.f32.mrb[0].mxu0
        %2124 = vdwg.mxu0
        %v2125 = vpack.c.bf16 %v2120, %v2120
        %2126 = vst.msk [vmem:[#allocation2] sm:$0xf] %vm752, %v2125
        %2128 = vrot.lane.b32.xlu0 %v2014, 64
        %v2129 = vpop.permute.xlu0 %2128
        %2131 = vrot.lane.b32.xlu0 %v2016, 64
        %v2132 = vpop.permute.xlu0 %2131
        %v2134 = vsel %vm643, %v2129, 0
        %v2137 = vsel %vm643, %v2132, 0
        %2139 = vmatprep.subr.bf16.mxu0 0
        %2140 = vmatpush1.bf16.xpose.msra.mxu0 %v2137
        %2141 = vmatprep.subr.bf16.mxu0 0
        %2142 = vmatpush1.bf16.xpose.msra.mxu0 0
        %2143 = vmatprep.subr.bf16.mxu0 0
        %2144 = vmatpush1.bf16.xpose.msra.mxu0 0
        %2145 = vmatprep.subr.bf16.mxu0 0
        %2146 = vmatpush1.bf16.xpose.msra.mxu0 0
        %2147 = vmatprep.subr.bf16.mxu0 0
        %2148 = vmatpush1.bf16.xpose.msra.mxu0 0
        %2149 = vmatprep.subr.bf16.mxu0 0
        %2150 = vmatpush1.bf16.xpose.msra.mxu0 0
        %2151 = vmatprep.subr.bf16.mxu0 0
        %2152 = vmatpush1.bf16.xpose.msra.mxu0 0
        %2153 = vmatprep.subr.bf16.mxu0 0
        %2154 = vmatpush1.bf16.xpose.msra.mxu0 0
        %2155 = vmatprep.subr.bf16.mxu0 0
        %2156 = vmatpush1.bf16.xpose.msra.mxu0 0
        %2157 = vmatprep.subr.bf16.mxu0 0
        %2158 = vmatpush1.bf16.xpose.msra.mxu0 0
        %2159 = vmatprep.subr.bf16.mxu0 0
        %2160 = vmatpush1.bf16.xpose.msra.mxu0 0
        %2161 = vmatprep.subr.bf16.mxu0 0
        %2162 = vmatpush1.bf16.xpose.msra.mxu0 0
        %2163 = vmatprep.subr.bf16.mxu0 0
        %2164 = vmatpush1.bf16.xpose.msra.mxu0 0
        %2165 = vmatprep.subr.bf16.mxu0 0
        %2166 = vmatpush1.bf16.xpose.msra.mxu0 0
        %2167 = vmatprep.subr.bf16.mxu0 0
        %2168 = vmatpush1.bf16.xpose.msra.mxu0 0
        %2169 = vmatprep.subr.bf16.mxu0 0
        %2170 = vmatpush1.bf16.xpose.msra.mxu0 0
        %2171 = vmatprep.mubr.bf16.mxu0 0
        %2172 = vmatmul.mubr.bf16.gmra.mrb[0].mxu0 %v2134
        %v2173 = vpop.f32.mrb[0].mxu0
        %v2174 = vadd.f32 0.0, %v2173
        %v2175 = vpop.f32.mrb[0].mxu0
        %v2176 = vpop.f32.mrb[0].mxu0
        %v2177 = vpop.f32.mrb[0].mxu0
        %2178 = vdwg.mxu0
        %v2179 = vmul.f32 %v2174, 0.125
        %v2180 = vsel %vm691, %v2179, -inf
        %2181 = vmax.xlane.f32.xlu0 %v2180
        %v2182 = vpop.xlane.xlu0 %2181
        %v2183 = vsub.f32 %v2179, %v2182
        %v2184 = vmul.f32 %v2183, 1.442695
        %v2185 = vpow.pop %v2184
        %v2186 = vsel %vm691, %v2185, 0.0
        %2187 = vadd.xlane.f32.xlu0 %v2186
        %v2188 = vpop.xlane.xlu0 %2187
        %v2189 = vrcp.pop %v2188
        %v2190 = vmul.f32 %v2185, %v2189
        %v2191 = vpack.c.bf16 %v2190, %v2190
        %2193 = vrot.lane.b32.xlu0 %v2018, 64
        %v2194 = vpop.permute.xlu0 %2193
        %v2196 = vsel %vm691, %v2191, 0
        %v2199 = vsel %vm707, %v2194, 0
        %2201 = vmatprep.subr.bf16.mxu0 0
        %2202 = vmatpush1.bf16.msra.mxu0 %v2199
        %2203 = vmatprep.subr.bf16.mxu0 0
        %2204 = vmatpush1.bf16.msra.mxu0 0
        %2205 = vmatprep.subr.bf16.mxu0 0
        %2206 = vmatpush1.bf16.msra.mxu0 0
        %2207 = vmatprep.subr.bf16.mxu0 0
        %2208 = vmatpush1.bf16.msra.mxu0 0
        %2209 = vmatprep.subr.bf16.mxu0 0
        %2210 = vmatpush1.bf16.msra.mxu0 0
        %2211 = vmatprep.subr.bf16.mxu0 0
        %2212 = vmatpush1.bf16.msra.mxu0 0
        %2213 = vmatprep.subr.bf16.mxu0 0
        %2214 = vmatpush1.bf16.msra.mxu0 0
        %2215 = vmatprep.subr.bf16.mxu0 0
        %2216 = vmatpush1.bf16.msra.mxu0 0
        %2217 = vmatprep.subr.bf16.mxu0 0
        %2218 = vmatpush1.bf16.msra.mxu0 0
        %2219 = vmatprep.subr.bf16.mxu0 0
        %2220 = vmatpush1.bf16.msra.mxu0 0
        %2221 = vmatprep.subr.bf16.mxu0 0
        %2222 = vmatpush1.bf16.msra.mxu0 0
        %2223 = vmatprep.subr.bf16.mxu0 0
        %2224 = vmatpush1.bf16.msra.mxu0 0
        %2225 = vmatprep.subr.bf16.mxu0 0
        %2226 = vmatpush1.bf16.msra.mxu0 0
        %2227 = vmatprep.subr.bf16.mxu0 0
        %2228 = vmatpush1.bf16.msra.mxu0 0
        %2229 = vmatprep.subr.bf16.mxu0 0
        %2230 = vmatpush1.bf16.msra.mxu0 0
        %2231 = vmatprep.subr.bf16.mxu0 0
        %2232 = vmatpush1.bf16.msra.mxu0 0
        %2233 = vmatprep.mubr.bf16.mxu0 0
        %2234 = vmatmul.mubr.bf16.gmra.mrb[0].mxu0 %v2196
        %v2235 = vpop.f32.mrb[0].mxu0
        %v2236 = vadd.f32 0.0, %v2235
        %v2237 = vpop.f32.mrb[0].mxu0
        %v2238 = vpop.f32.mrb[0].mxu0
        %v2239 = vpop.f32.mrb[0].mxu0
        %2240 = vdwg.mxu0
        %v2241 = vpack.c.bf16 %v2236, %v2236
        %v2243 = vunpack.c.l.b16 %v2241
        %v2244 = vpack.c.b16 %v2243, %v2243
        %2245 = vrot.lane.b32.xlu0 %v2244, 64
        %v2246 = vpop.permute.xlu0 %2245
        %2248 = vst.msk [vmem:[#allocation2] sm:$0xf] %vm875, %v2246
        %v2250 = vsel %vm643, %v2015, 0
        %v2253 = vsel %vm643, %v2017, 0
        %2255 = vmatprep.subr.bf16.mxu0 0
        %2256 = vmatpush1.bf16.xpose.msra.mxu0 %v2253
        %2257 = vmatprep.subr.bf16.mxu0 0
        %2258 = vmatpush1.bf16.xpose.msra.mxu0 0
        %2259 = vmatprep.subr.bf16.mxu0 0
        %2260 = vmatpush1.bf16.xpose.msra.mxu0 0
        %2261 = vmatprep.subr.bf16.mxu0 0
        %2262 = vmatpush1.bf16.xpose.msra.mxu0 0
        %2263 = vmatprep.subr.bf16.mxu0 0
        %2264 = vmatpush1.bf16.xpose.msra.mxu0 0
        %2265 = vmatprep.subr.bf16.mxu0 0
        %2266 = vmatpush1.bf16.xpose.msra.mxu0 0
        %2267 = vmatprep.subr.bf16.mxu0 0
        %2268 = vmatpush1.bf16.xpose.msra.mxu0 0
        %2269 = vmatprep.subr.bf16.mxu0 0
        %2270 = vmatpush1.bf16.xpose.msra.mxu0 0
        %2271 = vmatprep.subr.bf16.mxu0 0
        %2272 = vmatpush1.bf16.xpose.msra.mxu0 0
        %2273 = vmatprep.subr.bf16.mxu0 0
        %2274 = vmatpush1.bf16.xpose.msra.mxu0 0
        %2275 = vmatprep.subr.bf16.mxu0 0
        %2276 = vmatpush1.bf16.xpose.msra.mxu0 0
        %2277 = vmatprep.subr.bf16.mxu0 0
        %2278 = vmatpush1.bf16.xpose.msra.mxu0 0
        %2279 = vmatprep.subr.bf16.mxu0 0
        %2280 = vmatpush1.bf16.xpose.msra.mxu0 0
        %2281 = vmatprep.subr.bf16.mxu0 0
        %2282 = vmatpush1.bf16.xpose.msra.mxu0 0
        %2283 = vmatprep.subr.bf16.mxu0 0
        %2284 = vmatpush1.bf16.xpose.msra.mxu0 0
        %2285 = vmatprep.subr.bf16.mxu0 0
        %2286 = vmatpush1.bf16.xpose.msra.mxu0 0
        %2287 = vmatprep.mubr.bf16.mxu0 0
        %2288 = vmatmul.mubr.bf16.gmra.mrb[0].mxu0 %v2250
        %v2289 = vpop.f32.mrb[0].mxu0
        %v2290 = vadd.f32 0.0, %v2289
        %v2291 = vpop.f32.mrb[0].mxu0
        %v2292 = vpop.f32.mrb[0].mxu0
        %v2293 = vpop.f32.mrb[0].mxu0
        %2294 = vdwg.mxu0
        %v2295 = vmul.f32 %v2290, 0.125
        %v2296 = vsel %vm691, %v2295, -inf
        %2297 = vmax.xlane.f32.xlu0 %v2296
        %v2298 = vpop.xlane.xlu0 %2297
        %v2299 = vsub.f32 %v2295, %v2298
        %v2300 = vmul.f32 %v2299, 1.442695
        %v2301 = vpow.pop %v2300
        %v2302 = vsel %vm691, %v2301, 0.0
        %2303 = vadd.xlane.f32.xlu0 %v2302
        %v2304 = vpop.xlane.xlu0 %2303
        %v2305 = vrcp.pop %v2304
        %v2306 = vmul.f32 %v2301, %v2305
        %v2307 = vpack.c.bf16 %v2306, %v2306
        %v2309 = vsel %vm691, %v2307, 0
        %v2312 = vsel %vm707, %v2019, 0
        %2314 = vmatprep.subr.bf16.mxu0 0
        %2315 = vmatpush1.bf16.msra.mxu0 %v2312
        %2316 = vmatprep.subr.bf16.mxu0 0
        %2317 = vmatpush1.bf16.msra.mxu0 0
        %2318 = vmatprep.subr.bf16.mxu0 0
        %2319 = vmatpush1.bf16.msra.mxu0 0
        %2320 = vmatprep.subr.bf16.mxu0 0
        %2321 = vmatpush1.bf16.msra.mxu0 0
        %2322 = vmatprep.subr.bf16.mxu0 0
        %2323 = vmatpush1.bf16.msra.mxu0 0
        %2324 = vmatprep.subr.bf16.mxu0 0
        %2325 = vmatpush1.bf16.msra.mxu0 0
        %2326 = vmatprep.subr.bf16.mxu0 0
        %2327 = vmatpush1.bf16.msra.mxu0 0
        %2328 = vmatprep.subr.bf16.mxu0 0
        %2329 = vmatpush1.bf16.msra.mxu0 0
        %2330 = vmatprep.subr.bf16.mxu0 0
        %2331 = vmatpush1.bf16.msra.mxu0 0
        %2332 = vmatprep.subr.bf16.mxu0 0
        %2333 = vmatpush1.bf16.msra.mxu0 0
        %2334 = vmatprep.subr.bf16.mxu0 0
        %2335 = vmatpush1.bf16.msra.mxu0 0
        %2336 = vmatprep.subr.bf16.mxu0 0
        %2337 = vmatpush1.bf16.msra.mxu0 0
        %2338 = vmatprep.subr.bf16.mxu0 0
        %2339 = vmatpush1.bf16.msra.mxu0 0
        %2340 = vmatprep.subr.bf16.mxu0 0
        %2341 = vmatpush1.bf16.msra.mxu0 0
        %2342 = vmatprep.subr.bf16.mxu0 0
        %2343 = vmatpush1.bf16.msra.mxu0 0
        %2344 = vmatprep.subr.bf16.mxu0 0
        %2345 = vmatpush1.bf16.msra.mxu0 0
        %2346 = vmatprep.mubr.bf16.mxu0 0
        %2347 = vmatmul.mubr.bf16.gmra.mrb[0].mxu0 %v2309
        %v2348 = vpop.f32.mrb[0].mxu0
        %v2349 = vadd.f32 0.0, %v2348
        %v2350 = vpop.f32.mrb[0].mxu0
        %v2351 = vpop.f32.mrb[0].mxu0
        %v2352 = vpop.f32.mrb[0].mxu0
        %2353 = vdwg.mxu0
        %v2354 = vpack.c.bf16 %v2349, %v2349
        %2355 = vst.msk [vmem:[#allocation2 + $0x4] sm:$0xf] %vm752, %v2354
        %2357 = vrot.lane.b32.xlu0 %v2015, 64
        %v2358 = vpop.permute.xlu0 %2357
        %2360 = vrot.lane.b32.xlu0 %v2017, 64
        %v2361 = vpop.permute.xlu0 %2360
        %v2363 = vsel %vm643, %v2358, 0
        %v2366 = vsel %vm643, %v2361, 0
        %2368 = vmatprep.subr.bf16.mxu0 0
        %2369 = vmatpush1.bf16.xpose.msra.mxu0 %v2366
        %2370 = vmatprep.subr.bf16.mxu0 0
        %2371 = vmatpush1.bf16.xpose.msra.mxu0 0
        %2372 = vmatprep.subr.bf16.mxu0 0
        %2373 = vmatpush1.bf16.xpose.msra.mxu0 0
        %2374 = vmatprep.subr.bf16.mxu0 0
        %2375 = vmatpush1.bf16.xpose.msra.mxu0 0
        %2376 = vmatprep.subr.bf16.mxu0 0
        %2377 = vmatpush1.bf16.xpose.msra.mxu0 0
        %2378 = vmatprep.subr.bf16.mxu0 0
        %2379 = vmatpush1.bf16.xpose.msra.mxu0 0
        %2380 = vmatprep.subr.bf16.mxu0 0
        %2381 = vmatpush1.bf16.xpose.msra.mxu0 0
        %2382 = vmatprep.subr.bf16.mxu0 0
        %2383 = vmatpush1.bf16.xpose.msra.mxu0 0
        %2384 = vmatprep.subr.bf16.mxu0 0
        %2385 = vmatpush1.bf16.xpose.msra.mxu0 0
        %2386 = vmatprep.subr.bf16.mxu0 0
        %2387 = vmatpush1.bf16.xpose.msra.mxu0 0
        %2388 = vmatprep.subr.bf16.mxu0 0
        %2389 = vmatpush1.bf16.xpose.msra.mxu0 0
        %2390 = vmatprep.subr.bf16.mxu0 0
        %2391 = vmatpush1.bf16.xpose.msra.mxu0 0
        %2392 = vmatprep.subr.bf16.mxu0 0
        %2393 = vmatpush1.bf16.xpose.msra.mxu0 0
        %2394 = vmatprep.subr.bf16.mxu0 0
        %2395 = vmatpush1.bf16.xpose.msra.mxu0 0
        %2396 = vmatprep.subr.bf16.mxu0 0
        %2397 = vmatpush1.bf16.xpose.msra.mxu0 0
        %2398 = vmatprep.subr.bf16.mxu0 0
        %2399 = vmatpush1.bf16.xpose.msra.mxu0 0
        %2400 = vmatprep.mubr.bf16.mxu0 0
        %2401 = vmatmul.mubr.bf16.gmra.mrb[0].mxu0 %v2363
        %v2402 = vpop.f32.mrb[0].mxu0
        %v2403 = vadd.f32 0.0, %v2402
        %v2404 = vpop.f32.mrb[0].mxu0
        %v2405 = vpop.f32.mrb[0].mxu0
        %v2406 = vpop.f32.mrb[0].mxu0
        %2407 = vdwg.mxu0
        %v2408 = vmul.f32 %v2403, 0.125
        %v2409 = vsel %vm691, %v2408, -inf
        %2410 = vmax.xlane.f32.xlu0 %v2409
        %v2411 = vpop.xlane.xlu0 %2410
        %v2412 = vsub.f32 %v2408, %v2411
        %v2413 = vmul.f32 %v2412, 1.442695
        %v2414 = vpow.pop %v2413
        %v2415 = vsel %vm691, %v2414, 0.0
        %2416 = vadd.xlane.f32.xlu0 %v2415
        %v2417 = vpop.xlane.xlu0 %2416
        %v2418 = vrcp.pop %v2417
        %v2419 = vmul.f32 %v2414, %v2418
        %v2420 = vpack.c.bf16 %v2419, %v2419
        %2422 = vrot.lane.b32.xlu0 %v2019, 64
        %v2423 = vpop.permute.xlu0 %2422
        %v2425 = vsel %vm691, %v2420, 0
        %v2428 = vsel %vm707, %v2423, 0
        %2430 = vmatprep.subr.bf16.mxu0 0
        %2431 = vmatpush1.bf16.msra.mxu0 %v2428
        %2432 = vmatprep.subr.bf16.mxu0 0
        %2433 = vmatpush1.bf16.msra.mxu0 0
        %2434 = vmatprep.subr.bf16.mxu0 0
        %2435 = vmatpush1.bf16.msra.mxu0 0
        %2436 = vmatprep.subr.bf16.mxu0 0
        %2437 = vmatpush1.bf16.msra.mxu0 0
        %2438 = vmatprep.subr.bf16.mxu0 0
        %2439 = vmatpush1.bf16.msra.mxu0 0
        %2440 = vmatprep.subr.bf16.mxu0 0
        %2441 = vmatpush1.bf16.msra.mxu0 0
        %2442 = vmatprep.subr.bf16.mxu0 0
        %2443 = vmatpush1.bf16.msra.mxu0 0
        %2444 = vmatprep.subr.bf16.mxu0 0
        %2445 = vmatpush1.bf16.msra.mxu0 0
        %2446 = vmatprep.subr.bf16.mxu0 0
        %2447 = vmatpush1.bf16.msra.mxu0 0
        %2448 = vmatprep.subr.bf16.mxu0 0
        %2449 = vmatpush1.bf16.msra.mxu0 0
        %2450 = vmatprep.subr.bf16.mxu0 0
        %2451 = vmatpush1.bf16.msra.mxu0 0
        %2452 = vmatprep.subr.bf16.mxu0 0
        %2453 = vmatpush1.bf16.msra.mxu0 0
        %2454 = vmatprep.subr.bf16.mxu0 0
        %2455 = vmatpush1.bf16.msra.mxu0 0
        %2456 = vmatprep.subr.bf16.mxu0 0
        %2457 = vmatpush1.bf16.msra.mxu0 0
        %2458 = vmatprep.subr.bf16.mxu0 0
        %2459 = vmatpush1.bf16.msra.mxu0 0
        %2460 = vmatprep.subr.bf16.mxu0 0
        %2461 = vmatpush1.bf16.msra.mxu0 0
        %2462 = vmatprep.mubr.bf16.mxu0 0
        %2463 = vmatmul.mubr.bf16.gmra.mrb[0].mxu0 %v2425
        %v2464 = vpop.f32.mrb[0].mxu0
        %v2465 = vadd.f32 0.0, %v2464
        %v2466 = vpop.f32.mrb[0].mxu0
        %v2467 = vpop.f32.mrb[0].mxu0
        %v2468 = vpop.f32.mrb[0].mxu0
        %2469 = vdwg.mxu0
        %v2470 = vpack.c.bf16 %v2465, %v2465
        %v2472 = vunpack.c.l.b16 %v2470
        %v2473 = vpack.c.b16 %v2472, %v2472
        %2474 = vrot.lane.b32.xlu0 %v2473, 64
        %v2475 = vpop.permute.xlu0 %2474
        %2477 = vst.msk [vmem:[#allocation2 + $0x4] sm:$0xf] %vm875, %v2475
        %v2478 = vld [vmem:[#allocation2] sm:$0xff]
        %v2480 = vunpack.c.l.b16 %v2478
        %v2481 = vunpack.c.h.b16 %v2478
        %v2482 = vpack.c.b16 %v2480, %v2480
        %v2483 = vpack.c.b16 %v2481, %v2481
        %v2518 = vunpack.c.l.b16 %v1719
        %v2519 = vunpack.c.l.b16 %v1720
        %v2520 = vunpack.c.l.b16 %v1721
        %v2521 = vunpack.c.l.b16 %v1722
        %v2522 = vunpack.c.l.b16 %v1723
        %v2523 = vunpack.c.l.b16 %v1724
        %v2524 = vunpack.c.l.b16 %v1725
        %v2525 = vunpack.c.l.b16 %v1726
        %v2526 = vunpack.c.l.b16 %v1727
        %v2527 = vunpack.c.l.b16 %v1728
        %v2528 = vunpack.c.l.b16 %v1729
        %v2529 = vunpack.c.l.b16 %v1730
        %v2530 = vunpack.c.l.b16 %v1731
        %v2531 = vunpack.c.l.b16 %v1732
        %v2532 = vunpack.c.l.b16 %v1733
        %v2533 = vunpack.c.l.b16 %v1734
        %v2534 = vunpack.c.l.b16 %v1735
        %v2535 = vunpack.c.l.b16 %v1736
        %v2536 = vunpack.c.l.b16 %v1737
        %v2537 = vunpack.c.l.b16 %v1738
        %v2538 = vunpack.c.l.b16 %v1739
        %v2539 = vunpack.c.l.b16 %v1740
        %v2540 = vunpack.c.l.b16 %v1741
        %v2541 = vunpack.c.l.b16 %v1742
        %v2542 = vunpack.c.l.b16 %v1743
        %v2543 = vunpack.c.l.b16 %v1744
        %v2544 = vunpack.c.l.b16 %v1745
        %v2545 = vunpack.c.l.b16 %v1746
        %v2546 = vunpack.c.l.b16 %v1747
        %v2547 = vunpack.c.l.b16 %v1748
        %v2548 = vunpack.c.l.b16 %v1749
        %v2549 = vunpack.c.l.b16 %v1750
        %v2550 = vpack.c.b16 %v2519, %v2518
        %v2551 = vpack.c.b16 %v2521, %v2520
        %v2552 = vpack.c.b16 %v2523, %v2522
        %v2553 = vpack.c.b16 %v2525, %v2524
        %v2554 = vpack.c.b16 %v2527, %v2526
        %v2555 = vpack.c.b16 %v2529, %v2528
        %v2556 = vpack.c.b16 %v2531, %v2530
        %v2557 = vpack.c.b16 %v2533, %v2532
        %v2558 = vpack.c.b16 %v2535, %v2534
        %v2559 = vpack.c.b16 %v2537, %v2536
        %v2560 = vpack.c.b16 %v2539, %v2538
        %v2561 = vpack.c.b16 %v2541, %v2540
        %v2562 = vpack.c.b16 %v2543, %v2542
        %v2563 = vpack.c.b16 %v2545, %v2544
        %v2564 = vpack.c.b16 %v2547, %v2546
        %v2565 = vpack.c.b16 %v2549, %v2548
        %2582 = vmatprep.subr.bf16.mxu0 0
        %2583 = vmatpush1.bf16.msra.mxu0 %v2550
        %2584 = vmatprep.subr.bf16.mxu0 0
        %2585 = vmatpush1.bf16.msra.mxu0 %v2551
        %2586 = vmatprep.subr.bf16.mxu0 0
        %2587 = vmatpush1.bf16.msra.mxu0 %v2552
        %2588 = vmatprep.subr.bf16.mxu0 0
        %2589 = vmatpush1.bf16.msra.mxu0 %v2553
        %2590 = vmatprep.subr.bf16.mxu0 0
        %2591 = vmatpush1.bf16.msra.mxu0 %v2554
        %2592 = vmatprep.subr.bf16.mxu0 0
        %2593 = vmatpush1.bf16.msra.mxu0 %v2555
        %2594 = vmatprep.subr.bf16.mxu0 0
        %2595 = vmatpush1.bf16.msra.mxu0 %v2556
        %2596 = vmatprep.subr.bf16.mxu0 0
        %2597 = vmatpush1.bf16.msra.mxu0 %v2557
        %2598 = vmatprep.subr.bf16.mxu0 0
        %2599 = vmatpush1.bf16.msra.mxu0 %v2558
        %2600 = vmatprep.subr.bf16.mxu0 0
        %2601 = vmatpush1.bf16.msra.mxu0 %v2559
        %2602 = vmatprep.subr.bf16.mxu0 0
        %2603 = vmatpush1.bf16.msra.mxu0 %v2560
        %2604 = vmatprep.subr.bf16.mxu0 0
        %2605 = vmatpush1.bf16.msra.mxu0 %v2561
        %2606 = vmatprep.subr.bf16.mxu0 0
        %2607 = vmatpush1.bf16.msra.mxu0 %v2562
        %2608 = vmatprep.subr.bf16.mxu0 0
        %2609 = vmatpush1.bf16.msra.mxu0 %v2563
        %2610 = vmatprep.subr.bf16.mxu0 0
        %2611 = vmatpush1.bf16.msra.mxu0 %v2564
        %2612 = vmatprep.subr.bf16.mxu0 0
        %2613 = vmatpush1.bf16.msra.mxu0 %v2565
        %2614 = vmatprep.mubr.bf16.mxu0 %v2483
        %2615 = vmatmul.mubr.bf16.gmra.mrb[0].mxu0 %v2482
        %v2616 = vpop.f32.mrb[0].mxu0
        %v2617 = vadd.f32 %v1702, %v2616
        %v2618 = vpop.f32.mrb[0].mxu0
        %v2619 = vpop.f32.mrb[0].mxu0
        %v2620 = vpop.f32.mrb[0].mxu0
        %2621 = vdwg.mxu0
        %v2622 = vsel %vm470, %v2617, 0.0
        %2623 = vadd.xlane.f32.xlu0 %v2622
        %v2624 = vpop.xlane.xlu0 %2623
        %v2625 = vmul.f32 %v2624, %v1253
        %v2626 = vsub.f32 %v2617, %v2625
        %v2627 = vmul.f32 %v2626, %v2626
        %v2628 = vsel %vm470, %v2627, 0.0
        %2629 = vadd.xlane.f32.xlu0 %v2628
        %v2630 = vpop.xlane.xlu0 %2629
        %v2631 = vmul.f32 %v2630, %v1253
        %v2632 = vadd.f32 %v2631, 1e-05
        %v2633 = vrsqrt.pop %v2632
        %v2634 = vmul.f32 %v2626, %v2633
        %v2635 = vlaneseq
        %v2636 = vshrl.u32 %v2635, 7
        %v2637 = vsub.s32 0, %v2636
        %v2638 = vrot.slane %v1826, %v2637
        %v2639 = vmul.f32 %v2634, %v2638
        %v2640 = vlaneseq
        %v2641 = vshrl.u32 %v2640, 7
        %v2642 = vsub.s32 1, %v2641
        %v2643 = vrot.slane %v1826, %v2642
        %v2644 = vadd.f32 %v2639, %v2643
        %v2645 = vpack.c.bf16 %v2644, %v2644
        %v2654 = vunpack.c.l.b16 %v1752
        %v2655 = vunpack.c.h.b16 %v1752
        %v2656 = vunpack.c.l.b16 %v1753
        %v2657 = vunpack.c.h.b16 %v1753
        %v2658 = vunpack.c.l.b16 %v1754
        %v2659 = vunpack.c.h.b16 %v1754
        %v2660 = vunpack.c.l.b16 %v1755
        %v2661 = vunpack.c.h.b16 %v1755
        %v2662 = vunpack.c.l.b16 %v1756
        %v2663 = vunpack.c.h.b16 %v1756
        %v2664 = vunpack.c.l.b16 %v1757
        %v2665 = vunpack.c.h.b16 %v1757
        %v2666 = vunpack.c.l.b16 %v1758
        %v2667 = vunpack.c.h.b16 %v1758
        %v2668 = vunpack.c.l.b16 %v1759
        %v2669 = vunpack.c.h.b16 %v1759
        %v2670 = vpack.c.b16 %v2658, %v2654
        %v2671 = vpack.c.b16 %v2659, %v2655
        %v2672 = vpack.c.b16 %v2660, %v2656
        %v2673 = vpack.c.b16 %v2661, %v2657
        %v2674 = vpack.c.b16 %v2666, %v2662
        %v2675 = vpack.c.b16 %v2667, %v2663
        %v2676 = vpack.c.b16 %v2668, %v2664
        %v2677 = vpack.c.b16 %v2669, %v2665
        %v2687 = vsel %vm470, %v2645, 0
        %2689 = vmatprep.subr.bf16.mxu0 %v2671
        %2690 = vmatpush1.bf16.msra.mxu0 %v2670
        %2691 = vmatprep.subr.bf16.mxu0 %v2675
        %2692 = vmatpush1.bf16.msra.mxu0 %v2674
        %2693 = vmatprep.subr.bf16.mxu0 0
        %2694 = vmatpush1.bf16.msra.mxu0 0
        %2695 = vmatprep.subr.bf16.mxu0 0
        %2696 = vmatpush1.bf16.msra.mxu0 0
        %2697 = vmatprep.subr.bf16.mxu0 0
        %2698 = vmatpush1.bf16.msra.mxu0 0
        %2699 = vmatprep.subr.bf16.mxu0 0
        %2700 = vmatpush1.bf16.msra.mxu0 0
        %2701 = vmatprep.subr.bf16.mxu0 0
        %2702 = vmatpush1.bf16.msra.mxu0 0
        %2703 = vmatprep.subr.bf16.mxu0 0
        %2704 = vmatpush1.bf16.msra.mxu0 0
        %2705 = vmatprep.subr.bf16.mxu0 0
        %2706 = vmatpush1.bf16.msra.mxu0 0
        %2707 = vmatprep.subr.bf16.mxu0 0
        %2708 = vmatpush1.bf16.msra.mxu0 0
        %2709 = vmatprep.subr.bf16.mxu0 0
        %2710 = vmatpush1.bf16.msra.mxu0 0
        %2711 = vmatprep.subr.bf16.mxu0 0
        %2712 = vmatpush1.bf16.msra.mxu0 0
        %2713 = vmatprep.subr.bf16.mxu0 0
        %2714 = vmatpush1.bf16.msra.mxu0 0
        %2715 = vmatprep.subr.bf16.mxu0 0
        %2716 = vmatpush1.bf16.msra.mxu0 0
        %2717 = vmatprep.subr.bf16.mxu0 0
        %2718 = vmatpush1.bf16.msra.mxu0 0
        %2719 = vmatprep.subr.bf16.mxu0 0
        %2720 = vmatpush1.bf16.msra.mxu0 0
        %2721 = vmatprep.mubr.bf16.mxu0 0
        %2722 = vmatmul.mubr.bf16.gmra.mrb[0].mxu0 %v2687
        %v2723 = vpop.f32.mrb[0].mxu0
        %v2724 = vadd.f32 0.0, %v2723
        %v2725 = vpop.f32.mrb[0].mxu0
        %v2726 = vadd.f32 0.0, %v2725
        %v2727 = vpop.f32.mrb[0].mxu0
        %v2728 = vpop.f32.mrb[0].mxu0
        %2729 = vdwg.mxu0
        %2730 = vmatprep.subr.bf16.mxu0 %v2673
        %2731 = vmatpush1.bf16.msra.mxu0 %v2672
        %2732 = vmatprep.subr.bf16.mxu0 %v2677
        %2733 = vmatpush1.bf16.msra.mxu0 %v2676
        %2734 = vmatprep.subr.bf16.mxu0 0
        %2735 = vmatpush1.bf16.msra.mxu0 0
        %2736 = vmatprep.subr.bf16.mxu0 0
        %2737 = vmatpush1.bf16.msra.mxu0 0
        %2738 = vmatprep.subr.bf16.mxu0 0
        %2739 = vmatpush1.bf16.msra.mxu0 0
        %2740 = vmatprep.subr.bf16.mxu0 0
        %2741 = vmatpush1.bf16.msra.mxu0 0
        %2742 = vmatprep.subr.bf16.mxu0 0
        %2743 = vmatpush1.bf16.msra.mxu0 0
        %2744 = vmatprep.subr.bf16.mxu0 0
        %2745 = vmatpush1.bf16.msra.mxu0 0
        %2746 = vmatprep.subr.bf16.mxu0 0
        %2747 = vmatpush1.bf16.msra.mxu0 0
        %2748 = vmatprep.subr.bf16.mxu0 0
        %2749 = vmatpush1.bf16.msra.mxu0 0
        %2750 = vmatprep.subr.bf16.mxu0 0
        %2751 = vmatpush1.bf16.msra.mxu0 0
        %2752 = vmatprep.subr.bf16.mxu0 0
        %2753 = vmatpush1.bf16.msra.mxu0 0
        %2754 = vmatprep.subr.bf16.mxu0 0
        %2755 = vmatpush1.bf16.msra.mxu0 0
        %2756 = vmatprep.subr.bf16.mxu0 0
        %2757 = vmatpush1.bf16.msra.mxu0 0
        %2758 = vmatprep.subr.bf16.mxu0 0
        %2759 = vmatpush1.bf16.msra.mxu0 0
        %2760 = vmatprep.subr.bf16.mxu0 0
        %2761 = vmatpush1.bf16.msra.mxu0 0
        %2762 = vmatprep.mubr.bf16.mxu0 0
        %2763 = vmatmul.mubr.bf16.gmra.mrb[0].mxu0 %v2687
        %v2764 = vpop.f32.mrb[0].mxu0
        %v2765 = vadd.f32 0.0, %v2764
        %v2766 = vpop.f32.mrb[0].mxu0
        %v2767 = vadd.f32 0.0, %v2766
        %v2768 = vpop.f32.mrb[0].mxu0
        %v2769 = vpop.f32.mrb[0].mxu0
        %2770 = vdwg.mxu0
        %v2771 = vmax.f32 %v2724, 0.0
        %v2772 = vmax.f32 %v2726, 0.0
        %v2773 = vmax.f32 %v2765, 0.0
        %v2774 = vmax.f32 %v2767, 0.0
        %v2775 = vpack.c.bf16 %v2771, %v2771
        %v2776 = vpack.c.bf16 %v2772, %v2772
        %v2777 = vpack.c.bf16 %v2773, %v2773
        %v2778 = vpack.c.bf16 %v2774, %v2774
        %v2843 = vunpack.c.l.b16 %v1761
        %v2844 = vunpack.c.l.b16 %v1762
        %v2845 = vunpack.c.l.b16 %v1763
        %v2846 = vunpack.c.l.b16 %v1764
        %v2847 = vunpack.c.l.b16 %v1765
        %v2848 = vunpack.c.l.b16 %v1766
        %v2849 = vunpack.c.l.b16 %v1767
        %v2850 = vunpack.c.l.b16 %v1768
        %v2851 = vunpack.c.l.b16 %v1769
        %v2852 = vunpack.c.l.b16 %v1770
        %v2853 = vunpack.c.l.b16 %v1771
        %v2854 = vunpack.c.l.b16 %v1772
        %v2855 = vunpack.c.l.b16 %v1773
        %v2856 = vunpack.c.l.b16 %v1774
        %v2857 = vunpack.c.l.b16 %v1775
        %v2858 = vunpack.c.l.b16 %v1776
        %v2859 = vunpack.c.l.b16 %v1777
        %v2860 = vunpack.c.l.b16 %v1778
        %v2861 = vunpack.c.l.b16 %v1779
        %v2862 = vunpack.c.l.b16 %v1780
        %v2863 = vunpack.c.l.b16 %v1781
        %v2864 = vunpack.c.l.b16 %v1782
        %v2865 = vunpack.c.l.b16 %v1783
        %v2866 = vunpack.c.l.b16 %v1784
        %v2867 = vunpack.c.l.b16 %v1785
        %v2868 = vunpack.c.l.b16 %v1786
        %v2869 = vunpack.c.l.b16 %v1787
        %v2870 = vunpack.c.l.b16 %v1788
        %v2871 = vunpack.c.l.b16 %v1789
        %v2872 = vunpack.c.l.b16 %v1790
        %v2873 = vunpack.c.l.b16 %v1791
        %v2874 = vunpack.c.l.b16 %v1792
        %v2875 = vunpack.c.l.b16 %v1793
        %v2876 = vunpack.c.l.b16 %v1794
        %v2877 = vunpack.c.l.b16 %v1795
        %v2878 = vunpack.c.l.b16 %v1796
        %v2879 = vunpack.c.l.b16 %v1797
        %v2880 = vunpack.c.l.b16 %v1798
        %v2881 = vunpack.c.l.b16 %v1799
        %v2882 = vunpack.c.l.b16 %v1800
        %v2883 = vunpack.c.l.b16 %v1801
        %v2884 = vunpack.c.l.b16 %v1802
        %v2885 = vunpack.c.l.b16 %v1803
        %v2886 = vunpack.c.l.b16 %v1804
        %v2887 = vunpack.c.l.b16 %v1805
        %v2888 = vunpack.c.l.b16 %v1806
        %v2889 = vunpack.c.l.b16 %v1807
        %v2890 = vunpack.c.l.b16 %v1808
        %v2891 = vunpack.c.l.b16 %v1809
        %v2892 = vunpack.c.l.b16 %v1810
        %v2893 = vunpack.c.l.b16 %v1811
        %v2894 = vunpack.c.l.b16 %v1812
        %v2895 = vunpack.c.l.b16 %v1813
        %v2896 = vunpack.c.l.b16 %v1814
        %v2897 = vunpack.c.l.b16 %v1815
        %v2898 = vunpack.c.l.b16 %v1816
        %v2899 = vunpack.c.l.b16 %v1817
        %v2900 = vunpack.c.l.b16 %v1818
        %v2901 = vunpack.c.l.b16 %v1819
        %v2902 = vunpack.c.l.b16 %v1820
        %v2903 = vunpack.c.l.b16 %v1821
        %v2904 = vunpack.c.l.b16 %v1822
        %v2905 = vunpack.c.l.b16 %v1823
        %v2906 = vunpack.c.l.b16 %v1824
        %v2907 = vpack.c.b16 %v2844, %v2843
        %v2908 = vpack.c.b16 %v2846, %v2845
        %v2909 = vpack.c.b16 %v2848, %v2847
        %v2910 = vpack.c.b16 %v2850, %v2849
        %v2911 = vpack.c.b16 %v2852, %v2851
        %v2912 = vpack.c.b16 %v2854, %v2853
        %v2913 = vpack.c.b16 %v2856, %v2855
        %v2914 = vpack.c.b16 %v2858, %v2857
        %v2915 = vpack.c.b16 %v2860, %v2859
        %v2916 = vpack.c.b16 %v2862, %v2861
        %v2917 = vpack.c.b16 %v2864, %v2863
        %v2918 = vpack.c.b16 %v2866, %v2865
        %v2919 = vpack.c.b16 %v2868, %v2867
        %v2920 = vpack.c.b16 %v2870, %v2869
        %v2921 = vpack.c.b16 %v2872, %v2871
        %v2922 = vpack.c.b16 %v2874, %v2873
        %v2923 = vpack.c.b16 %v2876, %v2875
        %v2924 = vpack.c.b16 %v2878, %v2877
        %v2925 = vpack.c.b16 %v2880, %v2879
        %v2926 = vpack.c.b16 %v2882, %v2881
        %v2927 = vpack.c.b16 %v2884, %v2883
        %v2928 = vpack.c.b16 %v2886, %v2885
        %v2929 = vpack.c.b16 %v2888, %v2887
        %v2930 = vpack.c.b16 %v2890, %v2889
        %v2931 = vpack.c.b16 %v2892, %v2891
        %v2932 = vpack.c.b16 %v2894, %v2893
        %v2933 = vpack.c.b16 %v2896, %v2895
        %v2934 = vpack.c.b16 %v2898, %v2897
        %v2935 = vpack.c.b16 %v2900, %v2899
        %v2936 = vpack.c.b16 %v2902, %v2901
        %v2937 = vpack.c.b16 %v2904, %v2903
        %v2938 = vpack.c.b16 %v2906, %v2905
        %2971 = vmatprep.subr.bf16.mxu0 0
        %2972 = vmatpush1.bf16.msra.mxu0 %v2907
        %2973 = vmatprep.subr.bf16.mxu0 0
        %2974 = vmatpush1.bf16.msra.mxu0 %v2908
        %2975 = vmatprep.subr.bf16.mxu0 0
        %2976 = vmatpush1.bf16.msra.mxu0 %v2909
        %2977 = vmatprep.subr.bf16.mxu0 0
        %2978 = vmatpush1.bf16.msra.mxu0 %v2910
        %2979 = vmatprep.subr.bf16.mxu0 0
        %2980 = vmatpush1.bf16.msra.mxu0 %v2911
        %2981 = vmatprep.subr.bf16.mxu0 0
        %2982 = vmatpush1.bf16.msra.mxu0 %v2912
        %2983 = vmatprep.subr.bf16.mxu0 0
        %2984 = vmatpush1.bf16.msra.mxu0 %v2913
        %2985 = vmatprep.subr.bf16.mxu0 0
        %2986 = vmatpush1.bf16.msra.mxu0 %v2914
        %2987 = vmatprep.subr.bf16.mxu0 0
        %2988 = vmatpush1.bf16.msra.mxu0 %v2915
        %2989 = vmatprep.subr.bf16.mxu0 0
        %2990 = vmatpush1.bf16.msra.mxu0 %v2916
        %2991 = vmatprep.subr.bf16.mxu0 0
        %2992 = vmatpush1.bf16.msra.mxu0 %v2917
        %2993 = vmatprep.subr.bf16.mxu0 0
        %2994 = vmatpush1.bf16.msra.mxu0 %v2918
        %2995 = vmatprep.subr.bf16.mxu0 0
        %2996 = vmatpush1.bf16.msra.mxu0 %v2919
        %2997 = vmatprep.subr.bf16.mxu0 0
        %2998 = vmatpush1.bf16.msra.mxu0 %v2920
        %2999 = vmatprep.subr.bf16.mxu0 0
        %3000 = vmatpush1.bf16.msra.mxu0 %v2921
        %3001 = vmatprep.subr.bf16.mxu0 0
        %3002 = vmatpush1.bf16.msra.mxu0 %v2922
        %3003 = vmatprep.mubr.bf16.mxu0 %v2776
        %3004 = vmatmul.mubr.bf16.gmra.mrb[0].mxu0 %v2775
        %v3005 = vpop.f32.mrb[0].mxu0
        %v3006 = vadd.f32 %v2644, %v3005
        %v3007 = vpop.f32.mrb[0].mxu0
        %v3008 = vpop.f32.mrb[0].mxu0
        %v3009 = vpop.f32.mrb[0].mxu0
        %3010 = vdwg.mxu0
        %3011 = vmatprep.subr.bf16.mxu0 0
        %3012 = vmatpush1.bf16.msra.mxu0 %v2923
        %3013 = vmatprep.subr.bf16.mxu0 0
        %3014 = vmatpush1.bf16.msra.mxu0 %v2924
        %3015 = vmatprep.subr.bf16.mxu0 0
        %3016 = vmatpush1.bf16.msra.mxu0 %v2925
        %3017 = vmatprep.subr.bf16.mxu0 0
        %3018 = vmatpush1.bf16.msra.mxu0 %v2926
        %3019 = vmatprep.subr.bf16.mxu0 0
        %3020 = vmatpush1.bf16.msra.mxu0 %v2927
        %3021 = vmatprep.subr.bf16.mxu0 0
        %3022 = vmatpush1.bf16.msra.mxu0 %v2928
        %3023 = vmatprep.subr.bf16.mxu0 0
        %3024 = vmatpush1.bf16.msra.mxu0 %v2929
        %3025 = vmatprep.subr.bf16.mxu0 0
        %3026 = vmatpush1.bf16.msra.mxu0 %v2930
        %3027 = vmatprep.subr.bf16.mxu0 0
        %3028 = vmatpush1.bf16.msra.mxu0 %v2931
        %3029 = vmatprep.subr.bf16.mxu0 0
        %3030 = vmatpush1.bf16.msra.mxu0 %v2932
        %3031 = vmatprep.subr.bf16.mxu0 0
        %3032 = vmatpush1.bf16.msra.mxu0 %v2933
        %3033 = vmatprep.subr.bf16.mxu0 0
        %3034 = vmatpush1.bf16.msra.mxu0 %v2934
        %3035 = vmatprep.subr.bf16.mxu0 0
        %3036 = vmatpush1.bf16.msra.mxu0 %v2935
        %3037 = vmatprep.subr.bf16.mxu0 0
        %3038 = vmatpush1.bf16.msra.mxu0 %v2936
        %3039 = vmatprep.subr.bf16.mxu0 0
        %3040 = vmatpush1.bf16.msra.mxu0 %v2937
        %3041 = vmatprep.subr.bf16.mxu0 0
        %3042 = vmatpush1.bf16.msra.mxu0 %v2938
        %3043 = vmatprep.mubr.bf16.mxu0 %v2778
        %3044 = vmatmul.mubr.bf16.gmra.mrb[0].mxu0 %v2777
        %v3045 = vpop.f32.mrb[0].mxu0
        %v3046 = vadd.f32 %v3006, %v3045
        %v3047 = vpop.f32.mrb[0].mxu0
        %v3048 = vpop.f32.mrb[0].mxu0
        %v3049 = vpop.f32.mrb[0].mxu0
        %3050 = vdwg.mxu0
        %v3051 = vsel %vm470, %v3046, 0.0
        %3052 = vadd.xlane.f32.xlu0 %v3051
        %v3053 = vpop.xlane.xlu0 %3052
        %v3054 = vmul.f32 %v3053, %v1253
        %v3055 = vsub.f32 %v3046, %v3054
        %v3056 = vmul.f32 %v3055, %v3055
        %v3057 = vsel %vm470, %v3056, 0.0
        %3058 = vadd.xlane.f32.xlu0 %v3057
        %v3059 = vpop.xlane.xlu0 %3058
        %v3060 = vmul.f32 %v3059, %v1253
        %v3061 = vadd.f32 %v3060, 1e-05
        %v3062 = vrsqrt.pop %v3061
        %v3063 = vmul.f32 %v3055, %v3062
        %v3064 = vlaneseq
        %v3065 = vshrl.u32 %v3064, 7
        %v3066 = vsub.s32 2, %v3065
        %v3067 = vrot.slane %v1826, %v3066
        %v3068 = vmul.f32 %v3063, %v3067
        %v3069 = vlaneseq
        %v3070 = vshrl.u32 %v3069, 7
        %v3071 = vsub.s32 3, %v3070
        %v3072 = vrot.slane %v1826, %v3071
        %v3073 = vadd.f32 %v3068, %v3072
        %s3074 = scalar_lea.vmem %s2, 64
        %v3075 = vld [vmem:[%s3074] sm:$0xff]
        %v3076 = vld [vmem:[%s3074 + $0x8] sm:$0xff]
        %v3077 = vld [vmem:[%s3074 + $0x10] sm:$0xff]
        %v3078 = vld [vmem:[%s3074 + $0x18] sm:$0xff]
        %s3079 = scalar_lea.vmem %s3, 64
        %v3080 = vld [vmem:[%s3079] sm:$0xff]
        %v3081 = vld [vmem:[%s3079 + $0x8] sm:$0xff]
        %v3082 = vld [vmem:[%s3079 + $0x10] sm:$0xff]
        %v3083 = vld [vmem:[%s3079 + $0x18] sm:$0xff]
        %s3084 = scalar_lea.vmem %s4, 64
        %v3085 = vld [vmem:[%s3084] sm:$0xff]
        %v3086 = vld [vmem:[%s3084 + $0x8] sm:$0xff]
        %v3087 = vld [vmem:[%s3084 + $0x10] sm:$0xff]
        %v3088 = vld [vmem:[%s3084 + $0x18] sm:$0xff]
        %s3089 = scalar_lea.vmem %s5, 256
        %v3090 = vld [vmem:[%s3089] sm:$0xf]
        %v3091 = vld [vmem:[%s3089 + $0x4] sm:$0xf]
        %v3092 = vld [vmem:[%s3089 + $0x8] sm:$0xf]
        %v3093 = vld [vmem:[%s3089 + $0xc] sm:$0xf]
        %v3094 = vld [vmem:[%s3089 + $0x10] sm:$0xf]
        %v3095 = vld [vmem:[%s3089 + $0x14] sm:$0xf]
        %v3096 = vld [vmem:[%s3089 + $0x18] sm:$0xf]
        %v3097 = vld [vmem:[%s3089 + $0x1c] sm:$0xf]
        %v3098 = vld [vmem:[%s3089 + $0x20] sm:$0xf]
        %v3099 = vld [vmem:[%s3089 + $0x24] sm:$0xf]
        %v3100 = vld [vmem:[%s3089 + $0x28] sm:$0xf]
        %v3101 = vld [vmem:[%s3089 + $0x2c] sm:$0xf]
        %v3102 = vld [vmem:[%s3089 + $0x30] sm:$0xf]
        %v3103 = vld [vmem:[%s3089 + $0x34] sm:$0xf]
        %v3104 = vld [vmem:[%s3089 + $0x38] sm:$0xf]
        %v3105 = vld [vmem:[%s3089 + $0x3c] sm:$0xf]
        %v3106 = vld [vmem:[%s3089 + $0x40] sm:$0xf]
        %v3107 = vld [vmem:[%s3089 + $0x44] sm:$0xf]
        %v3108 = vld [vmem:[%s3089 + $0x48] sm:$0xf]
        %v3109 = vld [vmem:[%s3089 + $0x4c] sm:$0xf]
        %v3110 = vld [vmem:[%s3089 + $0x50] sm:$0xf]
        %v3111 = vld [vmem:[%s3089 + $0x54] sm:$0xf]
        %v3112 = vld [vmem:[%s3089 + $0x58] sm:$0xf]
        %v3113 = vld [vmem:[%s3089 + $0x5c] sm:$0xf]
        %v3114 = vld [vmem:[%s3089 + $0x60] sm:$0xf]
        %v3115 = vld [vmem:[%s3089 + $0x64] sm:$0xf]
        %v3116 = vld [vmem:[%s3089 + $0x68] sm:$0xf]
        %v3117 = vld [vmem:[%s3089 + $0x6c] sm:$0xf]
        %v3118 = vld [vmem:[%s3089 + $0x70] sm:$0xf]
        %v3119 = vld [vmem:[%s3089 + $0x74] sm:$0xf]
        %v3120 = vld [vmem:[%s3089 + $0x78] sm:$0xf]
        %v3121 = vld [vmem:[%s3089 + $0x7c] sm:$0xf]
        %s3122 = scalar_lea.vmem %s6, 128
        %v3123 = vld [vmem:[%s3122] sm:$0xff]
        %v3124 = vld [vmem:[%s3122 + $0x8] sm:$0xff]
        %v3125 = vld [vmem:[%s3122 + $0x10] sm:$0xff]
        %v3126 = vld [vmem:[%s3122 + $0x18] sm:$0xff]
        %v3127 = vld [vmem:[%s3122 + $0x20] sm:$0xff]
        %v3128 = vld [vmem:[%s3122 + $0x28] sm:$0xff]
        %v3129 = vld [vmem:[%s3122 + $0x30] sm:$0xff]
        %v3130 = vld [vmem:[%s3122 + $0x38] sm:$0xff]
        %s3131 = scalar_lea.vmem %s7, 512
        %v3132 = vld [vmem:[%s3131] sm:$0xf]
        %v3133 = vld [vmem:[%s3131 + $0x4] sm:$0xf]
        %v3134 = vld [vmem:[%s3131 + $0x8] sm:$0xf]
        %v3135 = vld [vmem:[%s3131 + $0xc] sm:$0xf]
        %v3136 = vld [vmem:[%s3131 + $0x10] sm:$0xf]
        %v3137 = vld [vmem:[%s3131 + $0x14] sm:$0xf]
        %v3138 = vld [vmem:[%s3131 + $0x18] sm:$0xf]
        %v3139 = vld [vmem:[%s3131 + $0x1c] sm:$0xf]
        %v3140 = vld [vmem:[%s3131 + $0x20] sm:$0xf]
        %v3141 = vld [vmem:[%s3131 + $0x24] sm:$0xf]
        %v3142 = vld [vmem:[%s3131 + $0x28] sm:$0xf]
        %v3143 = vld [vmem:[%s3131 + $0x2c] sm:$0xf]
        %v3144 = vld [vmem:[%s3131 + $0x30] sm:$0xf]
        %v3145 = vld [vmem:[%s3131 + $0x34] sm:$0xf]
        %v3146 = vld [vmem:[%s3131 + $0x38] sm:$0xf]
        %v3147 = vld [vmem:[%s3131 + $0x3c] sm:$0xf]
        %v3148 = vld [vmem:[%s3131 + $0x40] sm:$0xf]
        %v3149 = vld [vmem:[%s3131 + $0x44] sm:$0xf]
        %v3150 = vld [vmem:[%s3131 + $0x48] sm:$0xf]
        %v3151 = vld [vmem:[%s3131 + $0x4c] sm:$0xf]
        %v3152 = vld [vmem:[%s3131 + $0x50] sm:$0xf]
        %v3153 = vld [vmem:[%s3131 + $0x54] sm:$0xf]
        %v3154 = vld [vmem:[%s3131 + $0x58] sm:$0xf]
        %v3155 = vld [vmem:[%s3131 + $0x5c] sm:$0xf]
        %v3156 = vld [vmem:[%s3131 + $0x60] sm:$0xf]
        %v3157 = vld [vmem:[%s3131 + $0x64] sm:$0xf]
        %v3158 = vld [vmem:[%s3131 + $0x68] sm:$0xf]
        %v3159 = vld [vmem:[%s3131 + $0x6c] sm:$0xf]
        %v3160 = vld [vmem:[%s3131 + $0x70] sm:$0xf]
        %v3161 = vld [vmem:[%s3131 + $0x74] sm:$0xf]
        %v3162 = vld [vmem:[%s3131 + $0x78] sm:$0xf]
        %v3163 = vld [vmem:[%s3131 + $0x7c] sm:$0xf]
        %v3164 = vld [vmem:[%s3131 + $0x80] sm:$0xf]
        %v3165 = vld [vmem:[%s3131 + $0x84] sm:$0xf]
        %v3166 = vld [vmem:[%s3131 + $0x88] sm:$0xf]
        %v3167 = vld [vmem:[%s3131 + $0x8c] sm:$0xf]
        %v3168 = vld [vmem:[%s3131 + $0x90] sm:$0xf]
        %v3169 = vld [vmem:[%s3131 + $0x94] sm:$0xf]
        %v3170 = vld [vmem:[%s3131 + $0x98] sm:$0xf]
        %v3171 = vld [vmem:[%s3131 + $0x9c] sm:$0xf]
        %v3172 = vld [vmem:[%s3131 + $0xa0] sm:$0xf]
        %v3173 = vld [vmem:[%s3131 + $0xa4] sm:$0xf]
        %v3174 = vld [vmem:[%s3131 + $0xa8] sm:$0xf]
        %v3175 = vld [vmem:[%s3131 + $0xac] sm:$0xf]
        %v3176 = vld [vmem:[%s3131 + $0xb0] sm:$0xf]
        %v3177 = vld [vmem:[%s3131 + $0xb4] sm:$0xf]
        %v3178 = vld [vmem:[%s3131 + $0xb8] sm:$0xf]
        %v3179 = vld [vmem:[%s3131 + $0xbc] sm:$0xf]
        %v3180 = vld [vmem:[%s3131 + $0xc0] sm:$0xf]
        %v3181 = vld [vmem:[%s3131 + $0xc4] sm:$0xf]
        %v3182 = vld [vmem:[%s3131 + $0xc8] sm:$0xf]
        %v3183 = vld [vmem:[%s3131 + $0xcc] sm:$0xf]
        %v3184 = vld [vmem:[%s3131 + $0xd0] sm:$0xf]
        %v3185 = vld [vmem:[%s3131 + $0xd4] sm:$0xf]
        %v3186 = vld [vmem:[%s3131 + $0xd8] sm:$0xf]
        %v3187 = vld [vmem:[%s3131 + $0xdc] sm:$0xf]
        %v3188 = vld [vmem:[%s3131 + $0xe0] sm:$0xf]
        %v3189 = vld [vmem:[%s3131 + $0xe4] sm:$0xf]
        %v3190 = vld [vmem:[%s3131 + $0xe8] sm:$0xf]
        %v3191 = vld [vmem:[%s3131 + $0xec] sm:$0xf]
        %v3192 = vld [vmem:[%s3131 + $0xf0] sm:$0xf]
        %v3193 = vld [vmem:[%s3131 + $0xf4] sm:$0xf]
        %v3194 = vld [vmem:[%s3131 + $0xf8] sm:$0xf]
        %v3195 = vld [vmem:[%s3131 + $0xfc] sm:$0xf]
        %s3196 = scalar_lea.vmem %s8, 8
        %v3197 = vld [vmem:[%s3196] sm:$0xf]
        %v3198 = vpack.c.bf16 %v3073, %v3073
        %v3203 = vunpack.c.l.b16 %v3075
        %v3204 = vunpack.c.h.b16 %v3075
        %v3205 = vunpack.c.l.b16 %v3076
        %v3206 = vunpack.c.h.b16 %v3076
        %v3207 = vunpack.c.l.b16 %v3077
        %v3208 = vunpack.c.h.b16 %v3077
        %v3209 = vunpack.c.l.b16 %v3078
        %v3210 = vunpack.c.h.b16 %v3078
        %v3211 = vpack.c.b16 %v3205, %v3203
        %v3212 = vpack.c.b16 %v3206, %v3204
        %v3213 = vpack.c.b16 %v3209, %v3207
        %v3214 = vpack.c.b16 %v3210, %v3208
        %v3220 = vsel %vm470, %v3198, 0
        %3222 = vmatprep.subr.bf16.mxu0 %v3212
        %3223 = vmatpush1.bf16.msra.mxu0 %v3211
        %3224 = vmatprep.subr.bf16.mxu0 %v3214
        %3225 = vmatpush1.bf16.msra.mxu0 %v3213
        %3226 = vmatprep.subr.bf16.mxu0 0
        %3227 = vmatpush1.bf16.msra.mxu0 0
        %3228 = vmatprep.subr.bf16.mxu0 0
        %3229 = vmatpush1.bf16.msra.mxu0 0
        %3230 = vmatprep.subr.bf16.mxu0 0
        %3231 = vmatpush1.bf16.msra.mxu0 0
        %3232 = vmatprep.subr.bf16.mxu0 0
        %3233 = vmatpush1.bf16.msra.mxu0 0
        %3234 = vmatprep.subr.bf16.mxu0 0
        %3235 = vmatpush1.bf16.msra.mxu0 0
        %3236 = vmatprep.subr.bf16.mxu0 0
        %3237 = vmatpush1.bf16.msra.mxu0 0
        %3238 = vmatprep.subr.bf16.mxu0 0
        %3239 = vmatpush1.bf16.msra.mxu0 0
        %3240 = vmatprep.subr.bf16.mxu0 0
        %3241 = vmatpush1.bf16.msra.mxu0 0
        %3242 = vmatprep.subr.bf16.mxu0 0
        %3243 = vmatpush1.bf16.msra.mxu0 0
        %3244 = vmatprep.subr.bf16.mxu0 0
        %3245 = vmatpush1.bf16.msra.mxu0 0
        %3246 = vmatprep.subr.bf16.mxu0 0
        %3247 = vmatpush1.bf16.msra.mxu0 0
        %3248 = vmatprep.subr.bf16.mxu0 0
        %3249 = vmatpush1.bf16.msra.mxu0 0
        %3250 = vmatprep.subr.bf16.mxu0 0
        %3251 = vmatpush1.bf16.msra.mxu0 0
        %3252 = vmatprep.subr.bf16.mxu0 0
        %3253 = vmatpush1.bf16.msra.mxu0 0
        %3254 = vmatprep.mubr.bf16.mxu0 0
        %3255 = vmatmul.mubr.bf16.gmra.mrb[0].mxu0 %v3220
        %v3256 = vpop.f32.mrb[0].mxu0
        %v3257 = vadd.f32 0.0, %v3256
        %v3258 = vpop.f32.mrb[0].mxu0
        %v3259 = vadd.f32 0.0, %v3258
        %v3260 = vpop.f32.mrb[0].mxu0
        %v3261 = vpop.f32.mrb[0].mxu0
        %3262 = vdwg.mxu0
        %v3267 = vunpack.c.l.b16 %v3080
        %v3268 = vunpack.c.h.b16 %v3080
        %v3269 = vunpack.c.l.b16 %v3081
        %v3270 = vunpack.c.h.b16 %v3081
        %v3271 = vunpack.c.l.b16 %v3082
        %v3272 = vunpack.c.h.b16 %v3082
        %v3273 = vunpack.c.l.b16 %v3083
        %v3274 = vunpack.c.h.b16 %v3083
        %v3275 = vpack.c.b16 %v3269, %v3267
        %v3276 = vpack.c.b16 %v3270, %v3268
        %v3277 = vpack.c.b16 %v3273, %v3271
        %v3278 = vpack.c.b16 %v3274, %v3272
        %3283 = vmatprep.subr.bf16.mxu0 %v3276
        %3284 = vmatpush1.bf16.msra.mxu0 %v3275
        %3285 = vmatprep.subr.bf16.mxu0 %v3278
        %3286 = vmatpush1.bf16.msra.mxu0 %v3277
        %3287 = vmatprep.subr.bf16.mxu0 0
        %3288 = vmatpush1.bf16.msra.mxu0 0
        %3289 = vmatprep.subr.bf16.mxu0 0
        %3290 = vmatpush1.bf16.msra.mxu0 0
        %3291 = vmatprep.subr.bf16.mxu0 0
        %3292 = vmatpush1.bf16.msra.mxu0 0
        %3293 = vmatprep.subr.bf16.mxu0 0
        %3294 = vmatpush1.bf16.msra.mxu0 0
        %3295 = vmatprep.subr.bf16.mxu0 0
        %3296 = vmatpush1.bf16.msra.mxu0 0
        %3297 = vmatprep.subr.bf16.mxu0 0
        %3298 = vmatpush1.bf16.msra.mxu0 0
        %3299 = vmatprep.subr.bf16.mxu0 0
        %3300 = vmatpush1.bf16.msra.mxu0 0
        %3301 = vmatprep.subr.bf16.mxu0 0
        %3302 = vmatpush1.bf16.msra.mxu0 0
        %3303 = vmatprep.subr.bf16.mxu0 0
        %3304 = vmatpush1.bf16.msra.mxu0 0
        %3305 = vmatprep.subr.bf16.mxu0 0
        %3306 = vmatpush1.bf16.msra.mxu0 0
        %3307 = vmatprep.subr.bf16.mxu0 0
        %3308 = vmatpush1.bf16.msra.mxu0 0
        %3309 = vmatprep.subr.bf16.mxu0 0
        %3310 = vmatpush1.bf16.msra.mxu0 0
        %3311 = vmatprep.subr.bf16.mxu0 0
        %3312 = vmatpush1.bf16.msra.mxu0 0
        %3313 = vmatprep.subr.bf16.mxu0 0
        %3314 = vmatpush1.bf16.msra.mxu0 0
        %3315 = vmatprep.mubr.bf16.mxu0 0
        %3316 = vmatmul.mubr.bf16.gmra.mrb[0].mxu0 %v3220
        %v3317 = vpop.f32.mrb[0].mxu0
        %v3318 = vadd.f32 0.0, %v3317
        %v3319 = vpop.f32.mrb[0].mxu0
        %v3320 = vadd.f32 0.0, %v3319
        %v3321 = vpop.f32.mrb[0].mxu0
        %v3322 = vpop.f32.mrb[0].mxu0
        %3323 = vdwg.mxu0
        %v3328 = vunpack.c.l.b16 %v3085
        %v3329 = vunpack.c.h.b16 %v3085
        %v3330 = vunpack.c.l.b16 %v3086
        %v3331 = vunpack.c.h.b16 %v3086
        %v3332 = vunpack.c.l.b16 %v3087
        %v3333 = vunpack.c.h.b16 %v3087
        %v3334 = vunpack.c.l.b16 %v3088
        %v3335 = vunpack.c.h.b16 %v3088
        %v3336 = vpack.c.b16 %v3330, %v3328
        %v3337 = vpack.c.b16 %v3331, %v3329
        %v3338 = vpack.c.b16 %v3334, %v3332
        %v3339 = vpack.c.b16 %v3335, %v3333
        %3344 = vmatprep.subr.bf16.mxu0 %v3337
        %3345 = vmatpush1.bf16.msra.mxu0 %v3336
        %3346 = vmatprep.subr.bf16.mxu0 %v3339
        %3347 = vmatpush1.bf16.msra.mxu0 %v3338
        %3348 = vmatprep.subr.bf16.mxu0 0
        %3349 = vmatpush1.bf16.msra.mxu0 0
        %3350 = vmatprep.subr.bf16.mxu0 0
        %3351 = vmatpush1.bf16.msra.mxu0 0
        %3352 = vmatprep.subr.bf16.mxu0 0
        %3353 = vmatpush1.bf16.msra.mxu0 0
        %3354 = vmatprep.subr.bf16.mxu0 0
        %3355 = vmatpush1.bf16.msra.mxu0 0
        %3356 = vmatprep.subr.bf16.mxu0 0
        %3357 = vmatpush1.bf16.msra.mxu0 0
        %3358 = vmatprep.subr.bf16.mxu0 0
        %3359 = vmatpush1.bf16.msra.mxu0 0
        %3360 = vmatprep.subr.bf16.mxu0 0
        %3361 = vmatpush1.bf16.msra.mxu0 0
        %3362 = vmatprep.subr.bf16.mxu0 0
        %3363 = vmatpush1.bf16.msra.mxu0 0
        %3364 = vmatprep.subr.bf16.mxu0 0
        %3365 = vmatpush1.bf16.msra.mxu0 0
        %3366 = vmatprep.subr.bf16.mxu0 0
        %3367 = vmatpush1.bf16.msra.mxu0 0
        %3368 = vmatprep.subr.bf16.mxu0 0
        %3369 = vmatpush1.bf16.msra.mxu0 0
        %3370 = vmatprep.subr.bf16.mxu0 0
        %3371 = vmatpush1.bf16.msra.mxu0 0
        %3372 = vmatprep.subr.bf16.mxu0 0
        %3373 = vmatpush1.bf16.msra.mxu0 0
        %3374 = vmatprep.subr.bf16.mxu0 0
        %3375 = vmatpush1.bf16.msra.mxu0 0
        %3376 = vmatprep.mubr.bf16.mxu0 0
        %3377 = vmatmul.mubr.bf16.gmra.mrb[0].mxu0 %v3220
        %v3378 = vpop.f32.mrb[0].mxu0
        %v3379 = vadd.f32 0.0, %v3378
        %v3380 = vpop.f32.mrb[0].mxu0
        %v3381 = vadd.f32 0.0, %v3380
        %v3382 = vpop.f32.mrb[0].mxu0
        %v3383 = vpop.f32.mrb[0].mxu0
        %3384 = vdwg.mxu0
        %v3385 = vpack.c.bf16 %v3257, %v3257
        %v3386 = vpack.c.bf16 %v3259, %v3259
        %v3387 = vpack.c.bf16 %v3318, %v3318
        %v3388 = vpack.c.bf16 %v3320, %v3320
        %v3389 = vpack.c.bf16 %v3379, %v3379
        %v3390 = vpack.c.bf16 %v3381, %v3381
        %v3392 = vsel %vm643, %v3385, 0
        %v3395 = vsel %vm643, %v3387, 0
        %3397 = vmatprep.subr.bf16.mxu0 0
        %3398 = vmatpush1.bf16.xpose.msra.mxu0 %v3395
        %3399 = vmatprep.subr.bf16.mxu0 0
        %3400 = vmatpush1.bf16.xpose.msra.mxu0 0
        %3401 = vmatprep.subr.bf16.mxu0 0
        %3402 = vmatpush1.bf16.xpose.msra.mxu0 0
        %3403 = vmatprep.subr.bf16.mxu0 0
        %3404 = vmatpush1.bf16.xpose.msra.mxu0 0
        %3405 = vmatprep.subr.bf16.mxu0 0
        %3406 = vmatpush1.bf16.xpose.msra.mxu0 0
        %3407 = vmatprep.subr.bf16.mxu0 0
        %3408 = vmatpush1.bf16.xpose.msra.mxu0 0
        %3409 = vmatprep.subr.bf16.mxu0 0
        %3410 = vmatpush1.bf16.xpose.msra.mxu0 0
        %3411 = vmatprep.subr.bf16.mxu0 0
        %3412 = vmatpush1.bf16.xpose.msra.mxu0 0
        %3413 = vmatprep.subr.bf16.mxu0 0
        %3414 = vmatpush1.bf16.xpose.msra.mxu0 0
        %3415 = vmatprep.subr.bf16.mxu0 0
        %3416 = vmatpush1.bf16.xpose.msra.mxu0 0
        %3417 = vmatprep.subr.bf16.mxu0 0
        %3418 = vmatpush1.bf16.xpose.msra.mxu0 0
        %3419 = vmatprep.subr.bf16.mxu0 0
        %3420 = vmatpush1.bf16.xpose.msra.mxu0 0
        %3421 = vmatprep.subr.bf16.mxu0 0
        %3422 = vmatpush1.bf16.xpose.msra.mxu0 0
        %3423 = vmatprep.subr.bf16.mxu0 0
        %3424 = vmatpush1.bf16.xpose.msra.mxu0 0
        %3425 = vmatprep.subr.bf16.mxu0 0
        %3426 = vmatpush1.bf16.xpose.msra.mxu0 0
        %3427 = vmatprep.subr.bf16.mxu0 0
        %3428 = vmatpush1.bf16.xpose.msra.mxu0 0
        %3429 = vmatprep.mubr.bf16.mxu0 0
        %3430 = vmatmul.mubr.bf16.gmra.mrb[0].mxu0 %v3392
        %v3431 = vpop.f32.mrb[0].mxu0
        %v3432 = vadd.f32 0.0, %v3431
        %v3433 = vpop.f32.mrb[0].mxu0
        %v3434 = vpop.f32.mrb[0].mxu0
        %v3435 = vpop.f32.mrb[0].mxu0
        %3436 = vdwg.mxu0
        %v3437 = vmul.f32 %v3432, 0.125
        %v3438 = vsel %vm691, %v3437, -inf
        %3439 = vmax.xlane.f32.xlu0 %v3438
        %v3440 = vpop.xlane.xlu0 %3439
        %v3441 = vsub.f32 %v3437, %v3440
        %v3442 = vmul.f32 %v3441, 1.442695
        %v3443 = vpow.pop %v3442
        %v3444 = vsel %vm691, %v3443, 0.0
        %3445 = vadd.xlane.f32.xlu0 %v3444
        %v3446 = vpop.xlane.xlu0 %3445
        %v3447 = vrcp.pop %v3446
        %v3448 = vmul.f32 %v3443, %v3447
        %v3449 = vpack.c.bf16 %v3448, %v3448
        %v3451 = vsel %vm691, %v3449, 0
        %v3454 = vsel %vm707, %v3389, 0
        %3456 = vmatprep.subr.bf16.mxu0 0
        %3457 = vmatpush1.bf16.msra.mxu0 %v3454
        %3458 = vmatprep.subr.bf16.mxu0 0
        %3459 = vmatpush1.bf16.msra.mxu0 0
        %3460 = vmatprep.subr.bf16.mxu0 0
        %3461 = vmatpush1.bf16.msra.mxu0 0
        %3462 = vmatprep.subr.bf16.mxu0 0
        %3463 = vmatpush1.bf16.msra.mxu0 0
        %3464 = vmatprep.subr.bf16.mxu0 0
        %3465 = vmatpush1.bf16.msra.mxu0 0
        %3466 = vmatprep.subr.bf16.mxu0 0
        %3467 = vmatpush1.bf16.msra.mxu0 0
        %3468 = vmatprep.subr.bf16.mxu0 0
        %3469 = vmatpush1.bf16.msra.mxu0 0
        %3470 = vmatprep.subr.bf16.mxu0 0
        %3471 = vmatpush1.bf16.msra.mxu0 0
        %3472 = vmatprep.subr.bf16.mxu0 0
        %3473 = vmatpush1.bf16.msra.mxu0 0
        %3474 = vmatprep.subr.bf16.mxu0 0
        %3475 = vmatpush1.bf16.msra.mxu0 0
        %3476 = vmatprep.subr.bf16.mxu0 0
        %3477 = vmatpush1.bf16.msra.mxu0 0
        %3478 = vmatprep.subr.bf16.mxu0 0
        %3479 = vmatpush1.bf16.msra.mxu0 0
        %3480 = vmatprep.subr.bf16.mxu0 0
        %3481 = vmatpush1.bf16.msra.mxu0 0
        %3482 = vmatprep.subr.bf16.mxu0 0
        %3483 = vmatpush1.bf16.msra.mxu0 0
        %3484 = vmatprep.subr.bf16.mxu0 0
        %3485 = vmatpush1.bf16.msra.mxu0 0
        %3486 = vmatprep.subr.bf16.mxu0 0
        %3487 = vmatpush1.bf16.msra.mxu0 0
        %3488 = vmatprep.mubr.bf16.mxu0 0
        %3489 = vmatmul.mubr.bf16.gmra.mrb[0].mxu0 %v3451
        %v3490 = vpop.f32.mrb[0].mxu0
        %v3491 = vadd.f32 0.0, %v3490
        %v3492 = vpop.f32.mrb[0].mxu0
        %v3493 = vpop.f32.mrb[0].mxu0
        %v3494 = vpop.f32.mrb[0].mxu0
        %3495 = vdwg.mxu0
        %v3496 = vpack.c.bf16 %v3491, %v3491
        %3497 = vst.msk [vmem:[#allocation2] sm:$0xf] %vm752, %v3496
        %3499 = vrot.lane.b32.xlu0 %v3385, 64
        %v3500 = vpop.permute.xlu0 %3499
        %3502 = vrot.lane.b32.xlu0 %v3387, 64
        %v3503 = vpop.permute.xlu0 %3502
        %v3505 = vsel %vm643, %v3500, 0
        %v3508 = vsel %vm643, %v3503, 0
        %3510 = vmatprep.subr.bf16.mxu0 0
        %3511 = vmatpush1.bf16.xpose.msra.mxu0 %v3508
        %3512 = vmatprep.subr.bf16.mxu0 0
        %3513 = vmatpush1.bf16.xpose.msra.mxu0 0
        %3514 = vmatprep.subr.bf16.mxu0 0
        %3515 = vmatpush1.bf16.xpose.msra.mxu0 0
        %3516 = vmatprep.subr.bf16.mxu0 0
        %3517 = vmatpush1.bf16.xpose.msra.mxu0 0
        %3518 = vmatprep.subr.bf16.mxu0 0
        %3519 = vmatpush1.bf16.xpose.msra.mxu0 0
        %3520 = vmatprep.subr.bf16.mxu0 0
        %3521 = vmatpush1.bf16.xpose.msra.mxu0 0
        %3522 = vmatprep.subr.bf16.mxu0 0
        %3523 = vmatpush1.bf16.xpose.msra.mxu0 0
        %3524 = vmatprep.subr.bf16.mxu0 0
        %3525 = vmatpush1.bf16.xpose.msra.mxu0 0
        %3526 = vmatprep.subr.bf16.mxu0 0
        %3527 = vmatpush1.bf16.xpose.msra.mxu0 0
        %3528 = vmatprep.subr.bf16.mxu0 0
        %3529 = vmatpush1.bf16.xpose.msra.mxu0 0
        %3530 = vmatprep.subr.bf16.mxu0 0
        %3531 = vmatpush1.bf16.xpose.msra.mxu0 0
        %3532 = vmatprep.subr.bf16.mxu0 0
        %3533 = vmatpush1.bf16.xpose.msra.mxu0 0
        %3534 = vmatprep.subr.bf16.mxu0 0
        %3535 = vmatpush1.bf16.xpose.msra.mxu0 0
        %3536 = vmatprep.subr.bf16.mxu0 0
        %3537 = vmatpush1.bf16.xpose.msra.mxu0 0
        %3538 = vmatprep.subr.bf16.mxu0 0
        %3539 = vmatpush1.bf16.xpose.msra.mxu0 0
        %3540 = vmatprep.subr.bf16.mxu0 0
        %3541 = vmatpush1.bf16.xpose.msra.mxu0 0
        %3542 = vmatprep.mubr.bf16.mxu0 0
        %3543 = vmatmul.mubr.bf16.gmra.mrb[0].mxu0 %v3505
        %v3544 = vpop.f32.mrb[0].mxu0
        %v3545 = vadd.f32 0.0, %v3544
        %v3546 = vpop.f32.mrb[0].mxu0
        %v3547 = vpop.f32.mrb[0].mxu0
        %v3548 = vpop.f32.mrb[0].mxu0
        %3549 = vdwg.mxu0
        %v3550 = vmul.f32 %v3545, 0.125
        %v3551 = vsel %vm691, %v3550, -inf
        %3552 = vmax.xlane.f32.xlu0 %v3551
        %v3553 = vpop.xlane.xlu0 %3552
        %v3554 = vsub.f32 %v3550, %v3553
        %v3555 = vmul.f32 %v3554, 1.442695
        %v3556 = vpow.pop %v3555
        %v3557 = vsel %vm691, %v3556, 0.0
        %3558 = vadd.xlane.f32.xlu0 %v3557
        %v3559 = vpop.xlane.xlu0 %3558
        %v3560 = vrcp.pop %v3559
        %v3561 = vmul.f32 %v3556, %v3560
        %v3562 = vpack.c.bf16 %v3561, %v3561
        %3564 = vrot.lane.b32.xlu0 %v3389, 64
        %v3565 = vpop.permute.xlu0 %3564
        %v3567 = vsel %vm691, %v3562, 0
        %v3570 = vsel %vm707, %v3565, 0
        %3572 = vmatprep.subr.bf16.mxu0 0
        %3573 = vmatpush1.bf16.msra.mxu0 %v3570
        %3574 = vmatprep.subr.bf16.mxu0 0
        %3575 = vmatpush1.bf16.msra.mxu0 0
        %3576 = vmatprep.subr.bf16.mxu0 0
        %3577 = vmatpush1.bf16.msra.mxu0 0
        %3578 = vmatprep.subr.bf16.mxu0 0
        %3579 = vmatpush1.bf16.msra.mxu0 0
        %3580 = vmatprep.subr.bf16.mxu0 0
        %3581 = vmatpush1.bf16.msra.mxu0 0
        %3582 = vmatprep.subr.bf16.mxu0 0
        %3583 = vmatpush1.bf16.msra.mxu0 0
        %3584 = vmatprep.subr.bf16.mxu0 0
        %3585 = vmatpush1.bf16.msra.mxu0 0
        %3586 = vmatprep.subr.bf16.mxu0 0
        %3587 = vmatpush1.bf16.msra.mxu0 0
        %3588 = vmatprep.subr.bf16.mxu0 0
        %3589 = vmatpush1.bf16.msra.mxu0 0
        %3590 = vmatprep.subr.bf16.mxu0 0
        %3591 = vmatpush1.bf16.msra.mxu0 0
        %3592 = vmatprep.subr.bf16.mxu0 0
        %3593 = vmatpush1.bf16.msra.mxu0 0
        %3594 = vmatprep.subr.bf16.mxu0 0
        %3595 = vmatpush1.bf16.msra.mxu0 0
        %3596 = vmatprep.subr.bf16.mxu0 0
        %3597 = vmatpush1.bf16.msra.mxu0 0
        %3598 = vmatprep.subr.bf16.mxu0 0
        %3599 = vmatpush1.bf16.msra.mxu0 0
        %3600 = vmatprep.subr.bf16.mxu0 0
        %3601 = vmatpush1.bf16.msra.mxu0 0
        %3602 = vmatprep.subr.bf16.mxu0 0
        %3603 = vmatpush1.bf16.msra.mxu0 0
        %3604 = vmatprep.mubr.bf16.mxu0 0
        %3605 = vmatmul.mubr.bf16.gmra.mrb[0].mxu0 %v3567
        %v3606 = vpop.f32.mrb[0].mxu0
        %v3607 = vadd.f32 0.0, %v3606
        %v3608 = vpop.f32.mrb[0].mxu0
        %v3609 = vpop.f32.mrb[0].mxu0
        %v3610 = vpop.f32.mrb[0].mxu0
        %3611 = vdwg.mxu0
        %v3612 = vpack.c.bf16 %v3607, %v3607
        %v3614 = vunpack.c.l.b16 %v3612
        %v3615 = vpack.c.b16 %v3614, %v3614
        %3616 = vrot.lane.b32.xlu0 %v3615, 64
        %v3617 = vpop.permute.xlu0 %3616
        %3619 = vst.msk [vmem:[#allocation2] sm:$0xf] %vm875, %v3617
        %v3621 = vsel %vm643, %v3386, 0
        %v3624 = vsel %vm643, %v3388, 0
        %3626 = vmatprep.subr.bf16.mxu0 0
        %3627 = vmatpush1.bf16.xpose.msra.mxu0 %v3624
        %3628 = vmatprep.subr.bf16.mxu0 0
        %3629 = vmatpush1.bf16.xpose.msra.mxu0 0
        %3630 = vmatprep.subr.bf16.mxu0 0
        %3631 = vmatpush1.bf16.xpose.msra.mxu0 0
        %3632 = vmatprep.subr.bf16.mxu0 0
        %3633 = vmatpush1.bf16.xpose.msra.mxu0 0
        %3634 = vmatprep.subr.bf16.mxu0 0
        %3635 = vmatpush1.bf16.xpose.msra.mxu0 0
        %3636 = vmatprep.subr.bf16.mxu0 0
        %3637 = vmatpush1.bf16.xpose.msra.mxu0 0
        %3638 = vmatprep.subr.bf16.mxu0 0
        %3639 = vmatpush1.bf16.xpose.msra.mxu0 0
        %3640 = vmatprep.subr.bf16.mxu0 0
        %3641 = vmatpush1.bf16.xpose.msra.mxu0 0
        %3642 = vmatprep.subr.bf16.mxu0 0
        %3643 = vmatpush1.bf16.xpose.msra.mxu0 0
        %3644 = vmatprep.subr.bf16.mxu0 0
        %3645 = vmatpush1.bf16.xpose.msra.mxu0 0
        %3646 = vmatprep.subr.bf16.mxu0 0
        %3647 = vmatpush1.bf16.xpose.msra.mxu0 0
        %3648 = vmatprep.subr.bf16.mxu0 0
        %3649 = vmatpush1.bf16.xpose.msra.mxu0 0
        %3650 = vmatprep.subr.bf16.mxu0 0
        %3651 = vmatpush1.bf16.xpose.msra.mxu0 0
        %3652 = vmatprep.subr.bf16.mxu0 0
        %3653 = vmatpush1.bf16.xpose.msra.mxu0 0
        %3654 = vmatprep.subr.bf16.mxu0 0
        %3655 = vmatpush1.bf16.xpose.msra.mxu0 0
        %3656 = vmatprep.subr.bf16.mxu0 0
        %3657 = vmatpush1.bf16.xpose.msra.mxu0 0
        %3658 = vmatprep.mubr.bf16.mxu0 0
        %3659 = vmatmul.mubr.bf16.gmra.mrb[0].mxu0 %v3621
        %v3660 = vpop.f32.mrb[0].mxu0
        %v3661 = vadd.f32 0.0, %v3660
        %v3662 = vpop.f32.mrb[0].mxu0
        %v3663 = vpop.f32.mrb[0].mxu0
        %v3664 = vpop.f32.mrb[0].mxu0
        %3665 = vdwg.mxu0
        %v3666 = vmul.f32 %v3661, 0.125
        %v3667 = vsel %vm691, %v3666, -inf
        %3668 = vmax.xlane.f32.xlu0 %v3667
        %v3669 = vpop.xlane.xlu0 %3668
        %v3670 = vsub.f32 %v3666, %v3669
        %v3671 = vmul.f32 %v3670, 1.442695
        %v3672 = vpow.pop %v3671
        %v3673 = vsel %vm691, %v3672, 0.0
        %3674 = vadd.xlane.f32.xlu0 %v3673
        %v3675 = vpop.xlane.xlu0 %3674
        %v3676 = vrcp.pop %v3675
        %v3677 = vmul.f32 %v3672, %v3676
        %v3678 = vpack.c.bf16 %v3677, %v3677
        %v3680 = vsel %vm691, %v3678, 0
        %v3683 = vsel %vm707, %v3390, 0
        %3685 = vmatprep.subr.bf16.mxu0 0
        %3686 = vmatpush1.bf16.msra.mxu0 %v3683
        %3687 = vmatprep.subr.bf16.mxu0 0
        %3688 = vmatpush1.bf16.msra.mxu0 0
        %3689 = vmatprep.subr.bf16.mxu0 0
        %3690 = vmatpush1.bf16.msra.mxu0 0
        %3691 = vmatprep.subr.bf16.mxu0 0
        %3692 = vmatpush1.bf16.msra.mxu0 0
        %3693 = vmatprep.subr.bf16.mxu0 0
        %3694 = vmatpush1.bf16.msra.mxu0 0
        %3695 = vmatprep.subr.bf16.mxu0 0
        %3696 = vmatpush1.bf16.msra.mxu0 0
        %3697 = vmatprep.subr.bf16.mxu0 0
        %3698 = vmatpush1.bf16.msra.mxu0 0
        %3699 = vmatprep.subr.bf16.mxu0 0
        %3700 = vmatpush1.bf16.msra.mxu0 0
        %3701 = vmatprep.subr.bf16.mxu0 0
        %3702 = vmatpush1.bf16.msra.mxu0 0
        %3703 = vmatprep.subr.bf16.mxu0 0
        %3704 = vmatpush1.bf16.msra.mxu0 0
        %3705 = vmatprep.subr.bf16.mxu0 0
        %3706 = vmatpush1.bf16.msra.mxu0 0
        %3707 = vmatprep.subr.bf16.mxu0 0
        %3708 = vmatpush1.bf16.msra.mxu0 0
        %3709 = vmatprep.subr.bf16.mxu0 0
        %3710 = vmatpush1.bf16.msra.mxu0 0
        %3711 = vmatprep.subr.bf16.mxu0 0
        %3712 = vmatpush1.bf16.msra.mxu0 0
        %3713 = vmatprep.subr.bf16.mxu0 0
        %3714 = vmatpush1.bf16.msra.mxu0 0
        %3715 = vmatprep.subr.bf16.mxu0 0
        %3716 = vmatpush1.bf16.msra.mxu0 0
        %3717 = vmatprep.mubr.bf16.mxu0 0
        %3718 = vmatmul.mubr.bf16.gmra.mrb[0].mxu0 %v3680
        %v3719 = vpop.f32.mrb[0].mxu0
        %v3720 = vadd.f32 0.0, %v3719
        %v3721 = vpop.f32.mrb[0].mxu0
        %v3722 = vpop.f32.mrb[0].mxu0
        %v3723 = vpop.f32.mrb[0].mxu0
        %3724 = vdwg.mxu0
        %v3725 = vpack.c.bf16 %v3720, %v3720
        %3726 = vst.msk [vmem:[#allocation2 + $0x4] sm:$0xf] %vm752, %v3725
        %3728 = vrot.lane.b32.xlu0 %v3386, 64
        %v3729 = vpop.permute.xlu0 %3728
        %3731 = vrot.lane.b32.xlu0 %v3388, 64
        %v3732 = vpop.permute.xlu0 %3731
        %v3734 = vsel %vm643, %v3729, 0
        %v3737 = vsel %vm643, %v3732, 0
        %3739 = vmatprep.subr.bf16.mxu0 0
        %3740 = vmatpush1.bf16.xpose.msra.mxu0 %v3737
        %3741 = vmatprep.subr.bf16.mxu0 0
        %3742 = vmatpush1.bf16.xpose.msra.mxu0 0
        %3743 = vmatprep.subr.bf16.mxu0 0
        %3744 = vmatpush1.bf16.xpose.msra.mxu0 0
        %3745 = vmatprep.subr.bf16.mxu0 0
        %3746 = vmatpush1.bf16.xpose.msra.mxu0 0
        %3747 = vmatprep.subr.bf16.mxu0 0
        %3748 = vmatpush1.bf16.xpose.msra.mxu0 0
        %3749 = vmatprep.subr.bf16.mxu0 0
        %3750 = vmatpush1.bf16.xpose.msra.mxu0 0
        %3751 = vmatprep.subr.bf16.mxu0 0
        %3752 = vmatpush1.bf16.xpose.msra.mxu0 0
        %3753 = vmatprep.subr.bf16.mxu0 0
        %3754 = vmatpush1.bf16.xpose.msra.mxu0 0
        %3755 = vmatprep.subr.bf16.mxu0 0
        %3756 = vmatpush1.bf16.xpose.msra.mxu0 0
        %3757 = vmatprep.subr.bf16.mxu0 0
        %3758 = vmatpush1.bf16.xpose.msra.mxu0 0
        %3759 = vmatprep.subr.bf16.mxu0 0
        %3760 = vmatpush1.bf16.xpose.msra.mxu0 0
        %3761 = vmatprep.subr.bf16.mxu0 0
        %3762 = vmatpush1.bf16.xpose.msra.mxu0 0
        %3763 = vmatprep.subr.bf16.mxu0 0
        %3764 = vmatpush1.bf16.xpose.msra.mxu0 0
        %3765 = vmatprep.subr.bf16.mxu0 0
        %3766 = vmatpush1.bf16.xpose.msra.mxu0 0
        %3767 = vmatprep.subr.bf16.mxu0 0
        %3768 = vmatpush1.bf16.xpose.msra.mxu0 0
        %3769 = vmatprep.subr.bf16.mxu0 0
        %3770 = vmatpush1.bf16.xpose.msra.mxu0 0
        %3771 = vmatprep.mubr.bf16.mxu0 0
        %3772 = vmatmul.mubr.bf16.gmra.mrb[0].mxu0 %v3734
        %v3773 = vpop.f32.mrb[0].mxu0
        %v3774 = vadd.f32 0.0, %v3773
        %v3775 = vpop.f32.mrb[0].mxu0
        %v3776 = vpop.f32.mrb[0].mxu0
        %v3777 = vpop.f32.mrb[0].mxu0
        %3778 = vdwg.mxu0
        %v3779 = vmul.f32 %v3774, 0.125
        %v3780 = vsel %vm691, %v3779, -inf
        %3781 = vmax.xlane.f32.xlu0 %v3780
        %v3782 = vpop.xlane.xlu0 %3781
        %v3783 = vsub.f32 %v3779, %v3782
        %v3784 = vmul.f32 %v3783, 1.442695
        %v3785 = vpow.pop %v3784
        %v3786 = vsel %vm691, %v3785, 0.0
        %3787 = vadd.xlane.f32.xlu0 %v3786
        %v3788 = vpop.xlane.xlu0 %3787
        %v3789 = vrcp.pop %v3788
        %v3790 = vmul.f32 %v3785, %v3789
        %v3791 = vpack.c.bf16 %v3790, %v3790
        %3793 = vrot.lane.b32.xlu0 %v3390, 64
        %v3794 = vpop.permute.xlu0 %3793
        %v3796 = vsel %vm691, %v3791, 0
        %v3799 = vsel %vm707, %v3794, 0
        %3801 = vmatprep.subr.bf16.mxu0 0
        %3802 = vmatpush1.bf16.msra.mxu0 %v3799
        %3803 = vmatprep.subr.bf16.mxu0 0
        %3804 = vmatpush1.bf16.msra.mxu0 0
        %3805 = vmatprep.subr.bf16.mxu0 0
        %3806 = vmatpush1.bf16.msra.mxu0 0
        %3807 = vmatprep.subr.bf16.mxu0 0
        %3808 = vmatpush1.bf16.msra.mxu0 0
        %3809 = vmatprep.subr.bf16.mxu0 0
        %3810 = vmatpush1.bf16.msra.mxu0 0
        %3811 = vmatprep.subr.bf16.mxu0 0
        %3812 = vmatpush1.bf16.msra.mxu0 0
        %3813 = vmatprep.subr.bf16.mxu0 0
        %3814 = vmatpush1.bf16.msra.mxu0 0
        %3815 = vmatprep.subr.bf16.mxu0 0
        %3816 = vmatpush1.bf16.msra.mxu0 0
        %3817 = vmatprep.subr.bf16.mxu0 0
        %3818 = vmatpush1.bf16.msra.mxu0 0
        %3819 = vmatprep.subr.bf16.mxu0 0
        %3820 = vmatpush1.bf16.msra.mxu0 0
        %3821 = vmatprep.subr.bf16.mxu0 0
        %3822 = vmatpush1.bf16.msra.mxu0 0
        %3823 = vmatprep.subr.bf16.mxu0 0
        %3824 = vmatpush1.bf16.msra.mxu0 0
        %3825 = vmatprep.subr.bf16.mxu0 0
        %3826 = vmatpush1.bf16.msra.mxu0 0
        %3827 = vmatprep.subr.bf16.mxu0 0
        %3828 = vmatpush1.bf16.msra.mxu0 0
        %3829 = vmatprep.subr.bf16.mxu0 0
        %3830 = vmatpush1.bf16.msra.mxu0 0
        %3831 = vmatprep.subr.bf16.mxu0 0
        %3832 = vmatpush1.bf16.msra.mxu0 0
        %3833 = vmatprep.mubr.bf16.mxu0 0
        %3834 = vmatmul.mubr.bf16.gmra.mrb[0].mxu0 %v3796
        %v3835 = vpop.f32.mrb[0].mxu0
        %v3836 = vadd.f32 0.0, %v3835
        %v3837 = vpop.f32.mrb[0].mxu0
        %v3838 = vpop.f32.mrb[0].mxu0
        %v3839 = vpop.f32.mrb[0].mxu0
        %3840 = vdwg.mxu0
        %v3841 = vpack.c.bf16 %v3836, %v3836
        %v3843 = vunpack.c.l.b16 %v3841
        %v3844 = vpack.c.b16 %v3843, %v3843
        %3845 = vrot.lane.b32.xlu0 %v3844, 64
        %v3846 = vpop.permute.xlu0 %3845
        %3848 = vst.msk [vmem:[#allocation2 + $0x4] sm:$0xf] %vm875, %v3846
        %v3849 = vld [vmem:[#allocation2] sm:$0xff]
        %v3851 = vunpack.c.l.b16 %v3849
        %v3852 = vunpack.c.h.b16 %v3849
        %v3853 = vpack.c.b16 %v3851, %v3851
        %v3854 = vpack.c.b16 %v3852, %v3852
        %v3889 = vunpack.c.l.b16 %v3090
        %v3890 = vunpack.c.l.b16 %v3091
        %v3891 = vunpack.c.l.b16 %v3092
        %v3892 = vunpack.c.l.b16 %v3093
        %v3893 = vunpack.c.l.b16 %v3094
        %v3894 = vunpack.c.l.b16 %v3095
        %v3895 = vunpack.c.l.b16 %v3096
        %v3896 = vunpack.c.l.b16 %v3097
        %v3897 = vunpack.c.l.b16 %v3098
        %v3898 = vunpack.c.l.b16 %v3099
        %v3899 = vunpack.c.l.b16 %v3100
        %v3900 = vunpack.c.l.b16 %v3101
        %v3901 = vunpack.c.l.b16 %v3102
        %v3902 = vunpack.c.l.b16 %v3103
        %v3903 = vunpack.c.l.b16 %v3104
        %v3904 = vunpack.c.l.b16 %v3105
        %v3905 = vunpack.c.l.b16 %v3106
        %v3906 = vunpack.c.l.b16 %v3107
        %v3907 = vunpack.c.l.b16 %v3108
        %v3908 = vunpack.c.l.b16 %v3109
        %v3909 = vunpack.c.l.b16 %v3110
        %v3910 = vunpack.c.l.b16 %v3111
        %v3911 = vunpack.c.l.b16 %v3112
        %v3912 = vunpack.c.l.b16 %v3113
        %v3913 = vunpack.c.l.b16 %v3114
        %v3914 = vunpack.c.l.b16 %v3115
        %v3915 = vunpack.c.l.b16 %v3116
        %v3916 = vunpack.c.l.b16 %v3117
        %v3917 = vunpack.c.l.b16 %v3118
        %v3918 = vunpack.c.l.b16 %v3119
        %v3919 = vunpack.c.l.b16 %v3120
        %v3920 = vunpack.c.l.b16 %v3121
        %v3921 = vpack.c.b16 %v3890, %v3889
        %v3922 = vpack.c.b16 %v3892, %v3891
        %v3923 = vpack.c.b16 %v3894, %v3893
        %v3924 = vpack.c.b16 %v3896, %v3895
        %v3925 = vpack.c.b16 %v3898, %v3897
        %v3926 = vpack.c.b16 %v3900, %v3899
        %v3927 = vpack.c.b16 %v3902, %v3901
        %v3928 = vpack.c.b16 %v3904, %v3903
        %v3929 = vpack.c.b16 %v3906, %v3905
        %v3930 = vpack.c.b16 %v3908, %v3907
        %v3931 = vpack.c.b16 %v3910, %v3909
        %v3932 = vpack.c.b16 %v3912, %v3911
        %v3933 = vpack.c.b16 %v3914, %v3913
        %v3934 = vpack.c.b16 %v3916, %v3915
        %v3935 = vpack.c.b16 %v3918, %v3917
        %v3936 = vpack.c.b16 %v3920, %v3919
        %3953 = vmatprep.subr.bf16.mxu0 0
        %3954 = vmatpush1.bf16.msra.mxu0 %v3921
        %3955 = vmatprep.subr.bf16.mxu0 0
        %3956 = vmatpush1.bf16.msra.mxu0 %v3922
        %3957 = vmatprep.subr.bf16.mxu0 0
        %3958 = vmatpush1.bf16.msra.mxu0 %v3923
        %3959 = vmatprep.subr.bf16.mxu0 0
        %3960 = vmatpush1.bf16.msra.mxu0 %v3924
        %3961 = vmatprep.subr.bf16.mxu0 0
        %3962 = vmatpush1.bf16.msra.mxu0 %v3925
        %3963 = vmatprep.subr.bf16.mxu0 0
        %3964 = vmatpush1.bf16.msra.mxu0 %v3926
        %3965 = vmatprep.subr.bf16.mxu0 0
        %3966 = vmatpush1.bf16.msra.mxu0 %v3927
        %3967 = vmatprep.subr.bf16.mxu0 0
        %3968 = vmatpush1.bf16.msra.mxu0 %v3928
        %3969 = vmatprep.subr.bf16.mxu0 0
        %3970 = vmatpush1.bf16.msra.mxu0 %v3929
        %3971 = vmatprep.subr.bf16.mxu0 0
        %3972 = vmatpush1.bf16.msra.mxu0 %v3930
        %3973 = vmatprep.subr.bf16.mxu0 0
        %3974 = vmatpush1.bf16.msra.mxu0 %v3931
        %3975 = vmatprep.subr.bf16.mxu0 0
        %3976 = vmatpush1.bf16.msra.mxu0 %v3932
        %3977 = vmatprep.subr.bf16.mxu0 0
        %3978 = vmatpush1.bf16.msra.mxu0 %v3933
        %3979 = vmatprep.subr.bf16.mxu0 0
        %3980 = vmatpush1.bf16.msra.mxu0 %v3934
        %3981 = vmatprep.subr.bf16.mxu0 0
        %3982 = vmatpush1.bf16.msra.mxu0 %v3935
        %3983 = vmatprep.subr.bf16.mxu0 0
        %3984 = vmatpush1.bf16.msra.mxu0 %v3936
        %3985 = vmatprep.mubr.bf16.mxu0 %v3854
        %3986 = vmatmul.mubr.bf16.gmra.mrb[0].mxu0 %v3853
        %v3987 = vpop.f32.mrb[0].mxu0
        %v3988 = vadd.f32 %v3073, %v3987
        %v3989 = vpop.f32.mrb[0].mxu0
        %v3990 = vpop.f32.mrb[0].mxu0
        %v3991 = vpop.f32.mrb[0].mxu0
        %3992 = vdwg.mxu0
        %v3993 = vsel %vm470, %v3988, 0.0
        %3994 = vadd.xlane.f32.xlu0 %v3993
        %v3995 = vpop.xlane.xlu0 %3994
        %v3996 = vmul.f32 %v3995, %v1253
        %v3997 = vsub.f32 %v3988, %v3996
        %v3998 = vmul.f32 %v3997, %v3997
        %v3999 = vsel %vm470, %v3998, 0.0
        %4000 = vadd.xlane.f32.xlu0 %v3999
        %v4001 = vpop.xlane.xlu0 %4000
        %v4002 = vmul.f32 %v4001, %v1253
        %v4003 = vadd.f32 %v4002, 1e-05
        %v4004 = vrsqrt.pop %v4003
        %v4005 = vmul.f32 %v3997, %v4004
        %v4006 = vlaneseq
        %v4007 = vshrl.u32 %v4006, 7
        %v4008 = vsub.s32 0, %v4007
        %v4009 = vrot.slane %v3197, %v4008
        %v4010 = vmul.f32 %v4005, %v4009
        %v4011 = vlaneseq
        %v4012 = vshrl.u32 %v4011, 7
        %v4013 = vsub.s32 1, %v4012
        %v4014 = vrot.slane %v3197, %v4013
        %v4015 = vadd.f32 %v4010, %v4014
        %v4016 = vpack.c.bf16 %v4015, %v4015
        %v4025 = vunpack.c.l.b16 %v3123
        %v4026 = vunpack.c.h.b16 %v3123
        %v4027 = vunpack.c.l.b16 %v3124
        %v4028 = vunpack.c.h.b16 %v3124
        %v4029 = vunpack.c.l.b16 %v3125
        %v4030 = vunpack.c.h.b16 %v3125
        %v4031 = vunpack.c.l.b16 %v3126
        %v4032 = vunpack.c.h.b16 %v3126
        %v4033 = vunpack.c.l.b16 %v3127
        %v4034 = vunpack.c.h.b16 %v3127
        %v4035 = vunpack.c.l.b16 %v3128
        %v4036 = vunpack.c.h.b16 %v3128
        %v4037 = vunpack.c.l.b16 %v3129
        %v4038 = vunpack.c.h.b16 %v3129
        %v4039 = vunpack.c.l.b16 %v3130
        %v4040 = vunpack.c.h.b16 %v3130
        %v4041 = vpack.c.b16 %v4029, %v4025
        %v4042 = vpack.c.b16 %v4030, %v4026
        %v4043 = vpack.c.b16 %v4031, %v4027
        %v4044 = vpack.c.b16 %v4032, %v4028
        %v4045 = vpack.c.b16 %v4037, %v4033
        %v4046 = vpack.c.b16 %v4038, %v4034
        %v4047 = vpack.c.b16 %v4039, %v4035
        %v4048 = vpack.c.b16 %v4040, %v4036
        %v4058 = vsel %vm470, %v4016, 0
        %4060 = vmatprep.subr.bf16.mxu0 %v4042
        %4061 = vmatpush1.bf16.msra.mxu0 %v4041
        %4062 = vmatprep.subr.bf16.mxu0 %v4046
        %4063 = vmatpush1.bf16.msra.mxu0 %v4045
        %4064 = vmatprep.subr.bf16.mxu0 0
        %4065 = vmatpush1.bf16.msra.mxu0 0
        %4066 = vmatprep.subr.bf16.mxu0 0
        %4067 = vmatpush1.bf16.msra.mxu0 0
        %4068 = vmatprep.subr.bf16.mxu0 0
        %4069 = vmatpush1.bf16.msra.mxu0 0
        %4070 = vmatprep.subr.bf16.mxu0 0
        %4071 = vmatpush1.bf16.msra.mxu0 0
        %4072 = vmatprep.subr.bf16.mxu0 0
        %4073 = vmatpush1.bf16.msra.mxu0 0
        %4074 = vmatprep.subr.bf16.mxu0 0
        %4075 = vmatpush1.bf16.msra.mxu0 0
        %4076 = vmatprep.subr.bf16.mxu0 0
        %4077 = vmatpush1.bf16.msra.mxu0 0
        %4078 = vmatprep.subr.bf16.mxu0 0
        %4079 = vmatpush1.bf16.msra.mxu0 0
        %4080 = vmatprep.subr.bf16.mxu0 0
        %4081 = vmatpush1.bf16.msra.mxu0 0
        %4082 = vmatprep.subr.bf16.mxu0 0
        %4083 = vmatpush1.bf16.msra.mxu0 0
        %4084 = vmatprep.subr.bf16.mxu0 0
        %4085 = vmatpush1.bf16.msra.mxu0 0
        %4086 = vmatprep.subr.bf16.mxu0 0
        %4087 = vmatpush1.bf16.msra.mxu0 0
        %4088 = vmatprep.subr.bf16.mxu0 0
        %4089 = vmatpush1.bf16.msra.mxu0 0
        %4090 = vmatprep.subr.bf16.mxu0 0
        %4091 = vmatpush1.bf16.msra.mxu0 0
        %4092 = vmatprep.mubr.bf16.mxu0 0
        %4093 = vmatmul.mubr.bf16.gmra.mrb[0].mxu0 %v4058
        %v4094 = vpop.f32.mrb[0].mxu0
        %v4095 = vadd.f32 0.0, %v4094
        %v4096 = vpop.f32.mrb[0].mxu0
        %v4097 = vadd.f32 0.0, %v4096
        %v4098 = vpop.f32.mrb[0].mxu0
        %v4099 = vpop.f32.mrb[0].mxu0
        %4100 = vdwg.mxu0
        %4101 = vmatprep.subr.bf16.mxu0 %v4044
        %4102 = vmatpush1.bf16.msra.mxu0 %v4043
        %4103 = vmatprep.subr.bf16.mxu0 %v4048
        %4104 = vmatpush1.bf16.msra.mxu0 %v4047
        %4105 = vmatprep.subr.bf16.mxu0 0
        %4106 = vmatpush1.bf16.msra.mxu0 0
        %4107 = vmatprep.subr.bf16.mxu0 0
        %4108 = vmatpush1.bf16.msra.mxu0 0
        %4109 = vmatprep.subr.bf16.mxu0 0
        %4110 = vmatpush1.bf16.msra.mxu0 0
        %4111 = vmatprep.subr.bf16.mxu0 0
        %4112 = vmatpush1.bf16.msra.mxu0 0
        %4113 = vmatprep.subr.bf16.mxu0 0
        %4114 = vmatpush1.bf16.msra.mxu0 0
        %4115 = vmatprep.subr.bf16.mxu0 0
        %4116 = vmatpush1.bf16.msra.mxu0 0
        %4117 = vmatprep.subr.bf16.mxu0 0
        %4118 = vmatpush1.bf16.msra.mxu0 0
        %4119 = vmatprep.subr.bf16.mxu0 0
        %4120 = vmatpush1.bf16.msra.mxu0 0
        %4121 = vmatprep.subr.bf16.mxu0 0
        %4122 = vmatpush1.bf16.msra.mxu0 0
        %4123 = vmatprep.subr.bf16.mxu0 0
        %4124 = vmatpush1.bf16.msra.mxu0 0
        %4125 = vmatprep.subr.bf16.mxu0 0
        %4126 = vmatpush1.bf16.msra.mxu0 0
        %4127 = vmatprep.subr.bf16.mxu0 0
        %4128 = vmatpush1.bf16.msra.mxu0 0
        %4129 = vmatprep.subr.bf16.mxu0 0
        %4130 = vmatpush1.bf16.msra.mxu0 0
        %4131 = vmatprep.subr.bf16.mxu0 0
        %4132 = vmatpush1.bf16.msra.mxu0 0
        %4133 = vmatprep.mubr.bf16.mxu0 0
        %4134 = vmatmul.mubr.bf16.gmra.mrb[0].mxu0 %v4058
        %v4135 = vpop.f32.mrb[0].mxu0
        %v4136 = vadd.f32 0.0, %v4135
        %v4137 = vpop.f32.mrb[0].mxu0
        %v4138 = vadd.f32 0.0, %v4137
        %v4139 = vpop.f32.mrb[0].mxu0
        %v4140 = vpop.f32.mrb[0].mxu0
        %4141 = vdwg.mxu0
        %v4142 = vmax.f32 %v4095, 0.0
        %v4143 = vmax.f32 %v4097, 0.0
        %v4144 = vmax.f32 %v4136, 0.0
        %v4145 = vmax.f32 %v4138, 0.0
        %v4146 = vpack.c.bf16 %v4142, %v4142
        %v4147 = vpack.c.bf16 %v4143, %v4143
        %v4148 = vpack.c.bf16 %v4144, %v4144
        %v4149 = vpack.c.bf16 %v4145, %v4145
        %v4214 = vunpack.c.l.b16 %v3132
        %v4215 = vunpack.c.l.b16 %v3133
        %v4216 = vunpack.c.l.b16 %v3134
        %v4217 = vunpack.c.l.b16 %v3135
        %v4218 = vunpack.c.l.b16 %v3136
        %v4219 = vunpack.c.l.b16 %v3137
        %v4220 = vunpack.c.l.b16 %v3138
        %v4221 = vunpack.c.l.b16 %v3139
        %v4222 = vunpack.c.l.b16 %v3140
        %v4223 = vunpack.c.l.b16 %v3141
        %v4224 = vunpack.c.l.b16 %v3142
        %v4225 = vunpack.c.l.b16 %v3143
        %v4226 = vunpack.c.l.b16 %v3144
        %v4227 = vunpack.c.l.b16 %v3145
        %v4228 = vunpack.c.l.b16 %v3146
        %v4229 = vunpack.c.l.b16 %v3147
        %v4230 = vunpack.c.l.b16 %v3148
        %v4231 = vunpack.c.l.b16 %v3149
        %v4232 = vunpack.c.l.b16 %v3150
        %v4233 = vunpack.c.l.b16 %v3151
        %v4234 = vunpack.c.l.b16 %v3152
        %v4235 = vunpack.c.l.b16 %v3153
        %v4236 = vunpack.c.l.b16 %v3154
        %v4237 = vunpack.c.l.b16 %v3155
        %v4238 = vunpack.c.l.b16 %v3156
        %v4239 = vunpack.c.l.b16 %v3157
        %v4240 = vunpack.c.l.b16 %v3158
        %v4241 = vunpack.c.l.b16 %v3159
        %v4242 = vunpack.c.l.b16 %v3160
        %v4243 = vunpack.c.l.b16 %v3161
        %v4244 = vunpack.c.l.b16 %v3162
        %v4245 = vunpack.c.l.b16 %v3163
        %v4246 = vunpack.c.l.b16 %v3164
        %v4247 = vunpack.c.l.b16 %v3165
        %v4248 = vunpack.c.l.b16 %v3166
        %v4249 = vunpack.c.l.b16 %v3167
        %v4250 = vunpack.c.l.b16 %v3168
        %v4251 = vunpack.c.l.b16 %v3169
        %v4252 = vunpack.c.l.b16 %v3170
        %v4253 = vunpack.c.l.b16 %v3171
        %v4254 = vunpack.c.l.b16 %v3172
        %v4255 = vunpack.c.l.b16 %v3173
        %v4256 = vunpack.c.l.b16 %v3174
        %v4257 = vunpack.c.l.b16 %v3175
        %v4258 = vunpack.c.l.b16 %v3176
        %v4259 = vunpack.c.l.b16 %v3177
        %v4260 = vunpack.c.l.b16 %v3178
        %v4261 = vunpack.c.l.b16 %v3179
        %v4262 = vunpack.c.l.b16 %v3180
        %v4263 = vunpack.c.l.b16 %v3181
        %v4264 = vunpack.c.l.b16 %v3182
        %v4265 = vunpack.c.l.b16 %v3183
        %v4266 = vunpack.c.l.b16 %v3184
        %v4267 = vunpack.c.l.b16 %v3185
        %v4268 = vunpack.c.l.b16 %v3186
        %v4269 = vunpack.c.l.b16 %v3187
        %v4270 = vunpack.c.l.b16 %v3188
        %v4271 = vunpack.c.l.b16 %v3189
        %v4272 = vunpack.c.l.b16 %v3190
        %v4273 = vunpack.c.l.b16 %v3191
        %v4274 = vunpack.c.l.b16 %v3192
        %v4275 = vunpack.c.l.b16 %v3193
        %v4276 = vunpack.c.l.b16 %v3194
        %v4277 = vunpack.c.l.b16 %v3195
        %v4278 = vpack.c.b16 %v4215, %v4214
        %v4279 = vpack.c.b16 %v4217, %v4216
        %v4280 = vpack.c.b16 %v4219, %v4218
        %v4281 = vpack.c.b16 %v4221, %v4220
        %v4282 = vpack.c.b16 %v4223, %v4222
        %v4283 = vpack.c.b16 %v4225, %v4224
        %v4284 = vpack.c.b16 %v4227, %v4226
        %v4285 = vpack.c.b16 %v4229, %v4228
        %v4286 = vpack.c.b16 %v4231, %v4230
        %v4287 = vpack.c.b16 %v4233, %v4232
        %v4288 = vpack.c.b16 %v4235, %v4234
        %v4289 = vpack.c.b16 %v4237, %v4236
        %v4290 = vpack.c.b16 %v4239, %v4238
        %v4291 = vpack.c.b16 %v4241, %v4240
        %v4292 = vpack.c.b16 %v4243, %v4242
        %v4293 = vpack.c.b16 %v4245, %v4244
        %v4294 = vpack.c.b16 %v4247, %v4246
        %v4295 = vpack.c.b16 %v4249, %v4248
        %v4296 = vpack.c.b16 %v4251, %v4250
        %v4297 = vpack.c.b16 %v4253, %v4252
        %v4298 = vpack.c.b16 %v4255, %v4254
        %v4299 = vpack.c.b16 %v4257, %v4256
        %v4300 = vpack.c.b16 %v4259, %v4258
        %v4301 = vpack.c.b16 %v4261, %v4260
        %v4302 = vpack.c.b16 %v4263, %v4262
        %v4303 = vpack.c.b16 %v4265, %v4264
        %v4304 = vpack.c.b16 %v4267, %v4266
        %v4305 = vpack.c.b16 %v4269, %v4268
        %v4306 = vpack.c.b16 %v4271, %v4270
        %v4307 = vpack.c.b16 %v4273, %v4272
        %v4308 = vpack.c.b16 %v4275, %v4274
        %v4309 = vpack.c.b16 %v4277, %v4276
        %4342 = vmatprep.subr.bf16.mxu0 0
        %4343 = vmatpush1.bf16.msra.mxu0 %v4278
        %4344 = vmatprep.subr.bf16.mxu0 0
        %4345 = vmatpush1.bf16.msra.mxu0 %v4279
        %4346 = vmatprep.subr.bf16.mxu0 0
        %4347 = vmatpush1.bf16.msra.mxu0 %v4280
        %4348 = vmatprep.subr.bf16.mxu0 0
        %4349 = vmatpush1.bf16.msra.mxu0 %v4281
        %4350 = vmatprep.subr.bf16.mxu0 0
        %4351 = vmatpush1.bf16.msra.mxu0 %v4282
        %4352 = vmatprep.subr.bf16.mxu0 0
        %4353 = vmatpush1.bf16.msra.mxu0 %v4283
        %4354 = vmatprep.subr.bf16.mxu0 0
        %4355 = vmatpush1.bf16.msra.mxu0 %v4284
        %4356 = vmatprep.subr.bf16.mxu0 0
        %4357 = vmatpush1.bf16.msra.mxu0 %v4285
        %4358 = vmatprep.subr.bf16.mxu0 0
        %4359 = vmatpush1.bf16.msra.mxu0 %v4286
        %4360 = vmatprep.subr.bf16.mxu0 0
        %4361 = vmatpush1.bf16.msra.mxu0 %v4287
        %4362 = vmatprep.subr.bf16.mxu0 0
        %4363 = vmatpush1.bf16.msra.mxu0 %v4288
        %4364 = vmatprep.subr.bf16.mxu0 0
        %4365 = vmatpush1.bf16.msra.mxu0 %v4289
        %4366 = vmatprep.subr.bf16.mxu0 0
        %4367 = vmatpush1.bf16.msra.mxu0 %v4290
        %4368 = vmatprep.subr.bf16.mxu0 0
        %4369 = vmatpush1.bf16.msra.mxu0 %v4291
        %4370 = vmatprep.subr.bf16.mxu0 0
        %4371 = vmatpush1.bf16.msra.mxu0 %v4292
        %4372 = vmatprep.subr.bf16.mxu0 0
        %4373 = vmatpush1.bf16.msra.mxu0 %v4293
        %4374 = vmatprep.mubr.bf16.mxu0 %v4147
        %4375 = vmatmul.mubr.bf16.gmra.mrb[0].mxu0 %v4146
        %v4376 = vpop.f32.mrb[0].mxu0
        %v4377 = vadd.f32 %v4015, %v4376
        %v4378 = vpop.f32.mrb[0].mxu0
        %v4379 = vpop.f32.mrb[0].mxu0
        %v4380 = vpop.f32.mrb[0].mxu0
        %4381 = vdwg.mxu0
        %4382 = vmatprep.subr.bf16.mxu0 0
        %4383 = vmatpush1.bf16.msra.mxu0 %v4294
        %4384 = vmatprep.subr.bf16.mxu0 0
        %4385 = vmatpush1.bf16.msra.mxu0 %v4295
        %4386 = vmatprep.subr.bf16.mxu0 0
        %4387 = vmatpush1.bf16.msra.mxu0 %v4296
        %4388 = vmatprep.subr.bf16.mxu0 0
        %4389 = vmatpush1.bf16.msra.mxu0 %v4297
        %4390 = vmatprep.subr.bf16.mxu0 0
        %4391 = vmatpush1.bf16.msra.mxu0 %v4298
        %4392 = vmatprep.subr.bf16.mxu0 0
        %4393 = vmatpush1.bf16.msra.mxu0 %v4299
        %4394 = vmatprep.subr.bf16.mxu0 0
        %4395 = vmatpush1.bf16.msra.mxu0 %v4300
        %4396 = vmatprep.subr.bf16.mxu0 0
        %4397 = vmatpush1.bf16.msra.mxu0 %v4301
        %4398 = vmatprep.subr.bf16.mxu0 0
        %4399 = vmatpush1.bf16.msra.mxu0 %v4302
        %4400 = vmatprep.subr.bf16.mxu0 0
        %4401 = vmatpush1.bf16.msra.mxu0 %v4303
        %4402 = vmatprep.subr.bf16.mxu0 0
        %4403 = vmatpush1.bf16.msra.mxu0 %v4304
        %4404 = vmatprep.subr.bf16.mxu0 0
        %4405 = vmatpush1.bf16.msra.mxu0 %v4305
        %4406 = vmatprep.subr.bf16.mxu0 0
        %4407 = vmatpush1.bf16.msra.mxu0 %v4306
        %4408 = vmatprep.subr.bf16.mxu0 0
        %4409 = vmatpush1.bf16.msra.mxu0 %v4307
        %4410 = vmatprep.subr.bf16.mxu0 0
        %4411 = vmatpush1.bf16.msra.mxu0 %v4308
        %4412 = vmatprep.subr.bf16.mxu0 0
        %4413 = vmatpush1.bf16.msra.mxu0 %v4309
        %4414 = vmatprep.mubr.bf16.mxu0 %v4149
        %4415 = vmatmul.mubr.bf16.gmra.mrb[0].mxu0 %v4148
        %v4416 = vpop.f32.mrb[0].mxu0
        %v4417 = vadd.f32 %v4377, %v4416
        %v4418 = vpop.f32.mrb[0].mxu0
        %v4419 = vpop.f32.mrb[0].mxu0
        %v4420 = vpop.f32.mrb[0].mxu0
        %4421 = vdwg.mxu0
        %v4422 = vsel %vm470, %v4417, 0.0
        %4423 = vadd.xlane.f32.xlu0 %v4422
        %v4424 = vpop.xlane.xlu0 %4423
        %v4425 = vmul.f32 %v4424, %v1253
        %v4426 = vsub.f32 %v4417, %v4425
        %v4427 = vmul.f32 %v4426, %v4426
        %v4428 = vsel %vm470, %v4427, 0.0
        %4429 = vadd.xlane.f32.xlu0 %v4428
        %v4430 = vpop.xlane.xlu0 %4429
        %v4431 = vmul.f32 %v4430, %v1253
        %v4432 = vadd.f32 %v4431, 1e-05
        %v4433 = vrsqrt.pop %v4432
        %v4434 = vmul.f32 %v4426, %v4433
        %v4435 = vlaneseq
        %v4436 = vshrl.u32 %v4435, 7
        %v4437 = vsub.s32 2, %v4436
        %v4438 = vrot.slane %v3197, %v4437
        %v4439 = vmul.f32 %v4434, %v4438
        %v4440 = vlaneseq
        %v4441 = vshrl.u32 %v4440, 7
        %v4442 = vsub.s32 3, %v4441
        %v4443 = vrot.slane %v3197, %v4442
        %v4444 = vadd.f32 %v4439, %v4443
        %4445 = vst.msk [vmem:[%s323] sm:$0xff] %vm470, %v4444
        %s4446 = sand.u32 %s225, 1
        %s4447 = scalar_lea.sflag [#allocation4], %s4446
        %s4448 = sand.u32 %s225, 1
        %s4449 = smul.addr %s4448, 8
        %s4450 = scalar_lea.vmem [#allocation3], %s4449
        // Predicated region
        $region57: #{tpu_custom_call.1} parent=55 // pred_check
          %p4451 = pneg %p235
        $region58: #{tpu_custom_call.1} parent=55 // pred_check_branch
          %4453 = sbr.rel (%p4451) target = $region60
        $region59: #{tpu_custom_call.1} parent=55 // pred_region
          %s4455 = ssub.s32 128, 128
          %4456 = vsyncadd %s4447, %s4455
          %s4457 = smul.addr %s23, 128
          %s4458 = scalar_lea.hbm %s9, %s4457
          %s4460 = sshll.u32 %s4450, 4
          %s4461 = int_to_ptr.vmem [resolvable:$true] %s4460
          %4463 = dma.vmem_to_hbm [thread:$0]  %s4461, 128, %s4458, %s4447
        $region60: #{tpu_custom_call.1} parent=55 // pred_fallthru
          _
      $region56: #{tpu_custom_call.1} parent=5 // pred_fallthru
        _
      %p4464 = scmp.le.s32.totalorder 2, %s18
      // Predicated region
      $region61: #{tpu_custom_call.1} parent=5 // pred_check
        %p4465 = pneg %p4464
      $region62: #{tpu_custom_call.1} parent=5 // pred_check_branch
        %4467 = sbr.rel (%p4465) target = $region64
      $region63: #{tpu_custom_call.1} parent=5 // pred_region
        %s4468 = ssub.s32 %s18, 2
        // Predicated region
        $region65: #{tpu_custom_call.1} parent=63 // pred_check
          %p4469 = pneg %p241
        $region66: #{tpu_custom_call.1} parent=63 // pred_check_branch
          %4471 = sbr.rel (%p4469) target = $region68
        $region67: #{tpu_custom_call.1} parent=63 // pred_region
          %s4472 = sand.u32 %s226, 1
          %s4473 = scalar_lea.sflag [#allocation4], %s4472
          %s4474 = sand.u32 %s226, 1
          %s4475 = smul.addr %s4474, 8
          %s4476 = scalar_lea.vmem [#allocation3], %s4475
          %4477 = dma.done %s4473, 128
        $region68: #{tpu_custom_call.1} parent=63 // pred_fallthru
          _
      $region64: #{tpu_custom_call.1} parent=5 // pred_fallthru
        _
    $region6: #{tpu_custom_call.1} parent=1 // loop_footer
      %s22 = sadd.s32 1, %s18
    $region7: #{tpu_custom_call.1} parent=1 // loop_footer_branch
      %17 = sbr.rel target = $region3
    $region8: #{tpu_custom_call.1} parent=1 // loop_exit
      _
    %4478 = vsyncpa [#allocation4], 1
    %s4479 = scalar_lea.sflag [#allocation4], 1
    %4480 = vsyncpa %s4479, 1

</llo_original>
